<compile_context>
chip_gen: v7x
topology: tpu7x:2x2x1
jax: 0.10.0
libtpu: 0.0.40
codegen_flags: <defaults>
</compile_context>

<pallas_src>
import functools

import jax
import jax.numpy as jnp
from jax.experimental import pallas as pl
from jax.experimental.pallas import tpu as pltpu

MIN_CHANNELS = 32
BN_EPS = 1e-5            # torch.nn.BatchNorm2d default
NEG_SLOPE = 0.2          # LeakyReLU(negative_slope=0.2)
TM_MAX = 512             # lane-axis row tile per grid step (multiple of 128)
VMEM_LIMIT = 32 * 1024 * 1024


def _round_up(x, m):
    return (x + m - 1) // m * m


def _tiles(m, tm_max=TM_MAX):
    tm = min(tm_max, _round_up(m, 128))
    m_pad = _round_up(m, tm)
    return tm, m_pad, m_pad // tm


# ---------------------------------------------------------------------------
# Pallas kernels
# ---------------------------------------------------------------------------
def _conv_stats_kernel(cols_ref, w_ref, b_ref, y_ref, sum_ref, sq_ref,
                       *, m_valid, masked):
    """3x3 conv as one (Cout,9Cin)x(9Cin,TM) MXU matmul + bias, plus per-channel
    sum / sum-of-squares accumulation (BatchNorm batch stats) over the M grid.

    cols_ref: (9*Cin, TM) bf16   w_ref: (Cout, 9*Cin) bf16   b_ref: (Cout, 1) f32
    y_ref:    (Cout, TM)  f32    sum_ref / sq_ref: (Cout, 1) f32 resident accumulators
    """
    i = pl.program_id(0)

    @pl.when(i == 0)
    def _init():
        sum_ref[...] = jnp.zeros_like(sum_ref)
        sq_ref[...] = jnp.zeros_like(sq_ref)

    y = jnp.dot(w_ref[...], cols_ref[...],
                preferred_element_type=jnp.float32) + b_ref[...]
    y_ref[...] = y

    if masked:  # exclude zero-padded tail columns from the batch statistics
        tm = y.shape[1]
        col = jax.lax.broadcasted_iota(jnp.int32, (1, tm), 1) + i * tm
        y = jnp.where(col < m_valid, y, 0.0)
    sum_ref[...] += jnp.sum(y, axis=1, keepdims=True)
    sq_ref[...] += jnp.sum(y * y, axis=1, keepdims=True)


def _bn_lrelu_kernel(y_ref, scale_ref, shift_ref, o_ref):
    """Folded BatchNorm affine (per-channel scale/shift) + LeakyReLU(0.2)."""
    y = y_ref[...] * scale_ref[...] + shift_ref[...]
    o_ref[...] = jnp.where(y >= 0.0, y, NEG_SLOPE * y)


def _conv_tanh_res_kernel(cols_ref, w_ref, b_ref, xres_ref, o_ref):
    """Tail: 3x3 conv + bias + tanh, fused with the outer residual add x + r."""
    y = jnp.dot(w_ref[...], cols_ref[...],
                preferred_element_type=jnp.float32) + b_ref[...]
    o_ref[...] = xres_ref[...] + jnp.tanh(y)


# ---------------------------------------------------------------------------
# Plain-JAX glue (layout only)
# ---------------------------------------------------------------------------
# TODO(synk): build the 9 shifted views in-kernel from a padded halo block (and
# fuse the whole head+body chain in one pallas_call) to remove the remaining
# 9x HBM im2col materialization; current version only tiles M so each grid step
# DMAs just its own patch rows.
def _im2col_cm(x_cnhw):
    """(C, N, H, W) -> (9*C, N*H*W): 3x3 pad-1 shifted views, channel-major."""
    c, n, h, w = x_cnhw.shape
    xp = jnp.pad(x_cnhw, ((0, 0), (0, 0), (1, 1), (1, 1)))
    cols = [xp[:, :, dy:dy + h, dx:dx + w].reshape(c, n * h * w)
            for dy in range(3) for dx in range(3)]
    return jnp.concatenate(cols, axis=0)


def _w_cm(w):
    """(3, 3, Cin, Cout) -> (Cout, 9*Cin) bf16, row order matching _im2col_cm."""
    kh, kw, cin, cout = w.shape
    return jnp.transpose(w, (3, 0, 1, 2)).reshape(cout, kh * kw * cin).astype(jnp.bfloat16)


def _conv_block(x_cnhw, w, b, gamma, beta):
    """ConvBlock: 3x3 conv + BatchNorm2d (training-mode batch stats) + LeakyReLU."""
    cin, n, h, wd = x_cnhw.shape
    cout = w.shape[-1]
    m = n * h * wd
    tm, m_pad, grid_m = _tiles(m)

    cols = jnp.pad(_im2col_cm(x_cnhw), ((0, 0), (0, m_pad - m))).astype(jnp.bfloat16)
    w_t = _w_cm(w)
    b_c = b.reshape(cout, 1).astype(jnp.float32)

    kernel = functools.partial(_conv_stats_kernel, m_valid=m, masked=(m_pad != m))
    y, s, sq = pl.pallas_call(
        kernel,
        out_shape=(jax.ShapeDtypeStruct((cout, m_pad), jnp.float32),
                   jax.ShapeDtypeStruct((cout, 1), jnp.float32),
                   jax.ShapeDtypeStruct((cout, 1), jnp.float32)),
        grid=(grid_m,),
        in_specs=[pl.BlockSpec((9 * cin, tm), lambda i: (0, i)),
                  pl.BlockSpec((cout, 9 * cin), lambda i: (0, 0)),
                  pl.BlockSpec((cout, 1), lambda i: (0, 0))],
        out_specs=(pl.BlockSpec((cout, tm), lambda i: (0, i)),
                   pl.BlockSpec((cout, 1), lambda i: (0, 0)),
                   pl.BlockSpec((cout, 1), lambda i: (0, 0))),
        compiler_params=pltpu.CompilerParams(
            dimension_semantics=("arbitrary",),    # BN stats reduce over M tiles
            vmem_limit_bytes=VMEM_LIMIT),
    )(cols, w_t, b_c)

    # Finalize BatchNorm batch statistics (training mode, biased variance).
    # TODO(synk): eval-mode running_mean/var tracking is not implemented.
    mean = s / m
    var = jnp.maximum(sq / m - mean * mean, 0.0)
    inv = jax.lax.rsqrt(var + BN_EPS)
    scale = gamma.reshape(cout, 1) * inv
    shift = beta.reshape(cout, 1) - mean * scale

    act = pl.pallas_call(
        _bn_lrelu_kernel,
        out_shape=jax.ShapeDtypeStruct((cout, m_pad), jnp.float32),
        grid=(grid_m,),
        in_specs=[pl.BlockSpec((cout, tm), lambda i: (0, i)),
                  pl.BlockSpec((cout, 1), lambda i: (0, 0)),
                  pl.BlockSpec((cout, 1), lambda i: (0, 0))],
        out_specs=pl.BlockSpec((cout, tm), lambda i: (0, i)),
        compiler_params=pltpu.CompilerParams(
            dimension_semantics=("parallel",),
            vmem_limit_bytes=VMEM_LIMIT),
    )(y, scale, shift)

    return act[:, :m].reshape(cout, n, h, wd)


def _tail(feat_cnhw, x_res_cm, w, b):
    cin, n, h, wd = feat_cnhw.shape
    cout = w.shape[-1]
    m = n * h * wd
    tm, m_pad, grid_m = _tiles(m)

    cols = jnp.pad(_im2col_cm(feat_cnhw), ((0, 0), (0, m_pad - m))).astype(jnp.bfloat16)
    w_t = _w_cm(w)
    b_c = b.reshape(cout, 1).astype(jnp.float32)
    xres = jnp.pad(x_res_cm, ((0, 0), (0, m_pad - m))).astype(jnp.float32)

    out = pl.pallas_call(
        _conv_tanh_res_kernel,
        out_shape=jax.ShapeDtypeStruct((cout, m_pad), jnp.float32),
        grid=(grid_m,),
        in_specs=[pl.BlockSpec((9 * cin, tm), lambda i: (0, i)),
                  pl.BlockSpec((cout, 9 * cin), lambda i: (0, 0)),
                  pl.BlockSpec((cout, 1), lambda i: (0, 0)),
                  pl.BlockSpec((cout, tm), lambda i: (0, i))],
        out_specs=pl.BlockSpec((cout, tm), lambda i: (0, i)),
        compiler_params=pltpu.CompilerParams(
            dimension_semantics=("parallel",),
            vmem_limit_bytes=VMEM_LIMIT),
    )(cols, w_t, b_c, xres)
    return out[:, :m]


# ---------------------------------------------------------------------------
# Parameter construction (matches module __init__ shapes)
# ---------------------------------------------------------------------------
def init_params(key, n_channels=32, min_channels=MIN_CHANNELS, n_blocks=5):
    def conv_init(k, cin, cout, scale=0.1):
        kw, kb = jax.random.split(k)
        # stored as (3, 3, Cin, Cout)  (== PyTorch (Cout, Cin, 3, 3) transposed)
        w = jax.random.normal(kw, (3, 3, cin, cout), jnp.float32) * scale
        b = jax.random.normal(kb, (cout,), jnp.float32) * scale
        return w, b

    keys = jax.random.split(key, n_blocks)
    params = {}

    w, b = conv_init(keys[0], 3, n_channels)                 # head: 3 -> n_channels
    params["head"] = dict(w=w, b=b,
                          gamma=jnp.ones((n_channels,), jnp.float32),
                          beta=jnp.zeros((n_channels,), jnp.float32))

    body = []
    out_channels = n_channels
    for i in range(n_blocks - 2):                            # body blocks
        in_channels = max(min_channels, n_channels // 2 ** i)
        out_channels = max(min_channels, n_channels // 2 ** (i + 1))
        w, b = conv_init(keys[1 + i], in_channels, out_channels)
        body.append(dict(w=w, b=b,
                         gamma=jnp.ones((out_channels,), jnp.float32),
                         beta=jnp.zeros((out_channels,), jnp.float32)))
    params["body"] = body

    w, b = conv_init(keys[-1], out_channels, 3)              # tail: out_channels -> 3
    params["tail"] = dict(w=w, b=b)
    return params


# ---------------------------------------------------------------------------
# Forward (matches SingleScaleGenerator.forward)
# ---------------------------------------------------------------------------
def single_scale_generator(params, z_nchw, x_nchw):
    n, c, h, w = x_nchw.shape
    x_c = jnp.transpose(x_nchw, (1, 0, 2, 3)).astype(jnp.float32)   # (C, N, H, W)
    z_c = jnp.transpose(z_nchw, (1, 0, 2, 3)).astype(jnp.float32)

    r = _conv_block(x_c + z_c, **params["head"])                    # head(x + z)
    for blk in params["body"]:                                      # body
        r = _conv_block(r, **blk)
    out_cm = _tail(r, x_c.reshape(c, n * h * w),                    # x + tanh(conv(r))
                   params["tail"]["w"], params["tail"]["b"])
    return jnp.transpose(out_cm.reshape(c, n, h, w), (1, 0, 2, 3))  # back to NCHW


# ---------------------------------------------------------------------------
# Pure-JAX f32 reference (correctness check only)
# ---------------------------------------------------------------------------
def _ref_forward(params, z_nchw, x_nchw):
    def conv(xn, w, b):
        y = jax.lax.conv_general_dilated(
            xn, w, window_strides=(1, 1), padding="SAME",
            dimension_numbers=("NHWC", "HWIO", "NHWC"))
        return y + b

    def block(xn, p):
        y = conv(xn, p["w"], p["b"])
        mean = y.mean(axis=(0, 1, 2))
        var = y.var(axis=(0, 1, 2))
        yn = (y - mean) * jax.lax.rsqrt(var + BN_EPS) * p["gamma"] + p["beta"]
        return jnp.where(yn >= 0.0, yn, NEG_SLOPE * yn)

    xn = jnp.transpose(x_nchw, (0, 2, 3, 1)).astype(jnp.float32)
    zn = jnp.transpose(z_nchw, (0, 2, 3, 1)).astype(jnp.float32)
    r = block(xn + zn, params["head"])
    for p in params["body"]:
        r = block(r, p)
    t = jnp.tanh(conv(r, params["tail"]["w"], params["tail"]["b"]))
    return jnp.transpose(xn + t, (0, 3, 1, 2))


if __name__ == "__main__":
    key = jax.random.PRNGKey(0)
    kp, kz, kx = jax.random.split(key, 3)

    # M = 2*20*20 = 800 -> two 512-wide row tiles, exercises the masked-stats path.
    N, C, H, W = 2, 3, 20, 20
    params = init_params(kp)
    z = jax.random.normal(kz, (N, C, H, W), jnp.float32)
    x = jax.random.normal(kx, (N, C, H, W), jnp.float32)

    fwd = jax.jit(single_scale_generator)
    out = fwd(params, z, x)
    jax.block_until_ready(out)
    assert out.shape == (N, C, H, W)

    ref = _ref_forward(params, z, x)
    err = float(jnp.max(jnp.abs(out - ref)))
    assert err < 0.2, f"mismatch vs f32 reference: max|diff|={err}"
    print("KERNEL_OK")
</pallas_src>

<mosaic_0001>
module attributes {stable_mosaic.version = 11 : i64} {
  func.func @_conv_stats_kernel(%arg0: i32, %arg1: memref<27x512xbf16, #tpu.memory_space<vmem>>, %arg2: memref<32x27xbf16, #tpu.memory_space<vmem>>, %arg3: memref<32x1xf32, #tpu.memory_space<vmem>>, %arg4: memref<32x512xf32, #tpu.memory_space<vmem>>, %arg5: memref<32x1xf32, #tpu.memory_space<vmem>>, %arg6: memref<32x1xf32, #tpu.memory_space<vmem>>) attributes {dimension_semantics = [#tpu.dimension_semantics<arbitrary>], iteration_bounds = array<i64: 2>, scalar_prefetch = 0 : i64, scratch_operands = 0 : i64, tpu.core_type = #tpu.core_type<tc>, window_params = [{transform_indices = @transform_0, window_bounds = array<i64: 27, 512>}, {pipeline_mode = #tpu.pipeline_mode<synchronous>, transform_indices = @transform_1, window_bounds = array<i64: 32, 27>}, {pipeline_mode = #tpu.pipeline_mode<synchronous>, transform_indices = @transform_2, window_bounds = array<i64: 32, 1>}, {transform_indices = @transform_3, window_bounds = array<i64: 32, 512>}, {pipeline_mode = #tpu.pipeline_mode<synchronous>, transform_indices = @transform_4, window_bounds = array<i64: 32, 1>}, {pipeline_mode = #tpu.pipeline_mode<synchronous>, transform_indices = @transform_5, window_bounds = array<i64: 32, 1>}]} {
    %c0_i32 = arith.constant 0 : i32
    %0 = arith.cmpi eq, %arg0, %c0_i32 : i32
    %1 = arith.extui %0 : i1 to i32
    %c0_i32_0 = arith.constant 0 : i32
    %2 = arith.cmpi ne, %1, %c0_i32_0 : i32
    scf.if %2 {
      %cst_19 = arith.constant 0.000000e+00 : f32
      %31 = vector.broadcast %cst_19 : f32 to vector<32x1xf32>
      %c0_20 = arith.constant 0 : index
      %c0_21 = arith.constant 0 : index
      %32 = vector.load %arg5[%c0_20, %c0_21] : memref<32x1xf32, #tpu.memory_space<vmem>>, vector<32x1xf32>
      tpu.vector_store %arg5[%c0_20, %c0_21], %31 {strides = array<i32>} : memref<32x1xf32, #tpu.memory_space<vmem>>, vector<32x1xf32>,
      %cst_22 = arith.constant 0.000000e+00 : f32
      %33 = vector.broadcast %cst_22 : f32 to vector<32x1xf32>
      %c0_23 = arith.constant 0 : index
      %c0_24 = arith.constant 0 : index
      %34 = vector.load %arg6[%c0_23, %c0_24] : memref<32x1xf32, #tpu.memory_space<vmem>>, vector<32x1xf32>
      tpu.vector_store %arg6[%c0_23, %c0_24], %33 {strides = array<i32>} : memref<32x1xf32, #tpu.memory_space<vmem>>, vector<32x1xf32>,
    } else {
    }
    %c0 = arith.constant 0 : index
    %c0_1 = arith.constant 0 : index
    %3 = vector.load %arg2[%c0, %c0_1] : memref<32x27xbf16, #tpu.memory_space<vmem>>, vector<32x27xbf16>
    %c0_2 = arith.constant 0 : index
    %c0_3 = arith.constant 0 : index
    %4 = vector.load %arg1[%c0_2, %c0_3] : memref<27x512xbf16, #tpu.memory_space<vmem>>, vector<27x512xbf16>
    %cst = arith.constant dense<0.000000e+00> : vector<32x512xf32>
    %5 = tpu.matmul %3, %4, %cst {dimension_numbers = #tpu.dot_dimension_numbers<[1], [0], [0], [1], [0, 0, 1, 1], [], []>} : vector<32x27xbf16>, vector<27x512xbf16>, vector<32x512xf32> -> vector<32x512xf32>
    %c0_4 = arith.constant 0 : index
    %c0_5 = arith.constant 0 : index
    %6 = vector.load %arg3[%c0_4, %c0_5] : memref<32x1xf32, #tpu.memory_space<vmem>>, vector<32x1xf32>
    %7 = vector.broadcast %6 : vector<32x1xf32> to vector<32x512xf32>
    %8 = arith.addf %5, %7 : vector<32x512xf32>
    %c0_6 = arith.constant 0 : index
    %c0_7 = arith.constant 0 : index
    %9 = vector.load %arg4[%c0_6, %c0_7] : memref<32x512xf32, #tpu.memory_space<vmem>>, vector<32x512xf32>
    tpu.vector_store %arg4[%c0_6, %c0_7], %8 {strides = array<i32>} : memref<32x512xf32, #tpu.memory_space<vmem>>, vector<32x512xf32>,
    %10 = tpu.iota {dimensions = array<i32: 1>} : vector<1x512xi32>
    %c512_i32 = arith.constant 512 : i32
    %11 = arith.muli %arg0, %c512_i32 : i32
    %12 = vector.broadcast %11 : i32 to vector<1x512xi32>
    %13 = arith.addi %10, %12 : vector<1x512xi32>
    %c800_i32 = arith.constant 800 : i32
    %14 = vector.broadcast %c800_i32 : i32 to vector<1x512xi32>
    %15 = arith.cmpi slt, %13, %14 : vector<1x512xi32>
    %cst_8 = arith.constant 0.000000e+00 : f32
    %16 = vector.shape_cast %15 : vector<1x512xi1> to vector<1x512xi1>
    %17 = vector.broadcast %16 : vector<1x512xi1> to vector<32x512xi1>
    %18 = vector.broadcast %cst_8 : f32 to vector<32x512xf32>
    %19 = arith.select %17, %8, %18 : vector<32x512xi1>, vector<32x512xf32>
    %c0_9 = arith.constant 0 : index
    %c0_10 = arith.constant 0 : index
    %20 = vector.load %arg5[%c0_9, %c0_10] : memref<32x1xf32, #tpu.memory_space<vmem>>, vector<32x1xf32>
    %cst_11 = arith.constant dense<0.000000e+00> : vector<32xf32>
    %21 = vector.multi_reduction <add>, %19, %cst_11 [1] : vector<32x512xf32> to vector<32xf32>
    %22 = vector.shape_cast %21 : vector<32xf32> to vector<32x1xf32>
    %23 = arith.addf %20, %22 : vector<32x1xf32>
    %c0_12 = arith.constant 0 : index
    %c0_13 = arith.constant 0 : index
    %24 = vector.load %arg5[%c0_12, %c0_13] : memref<32x1xf32, #tpu.memory_space<vmem>>, vector<32x1xf32>
    tpu.vector_store %arg5[%c0_12, %c0_13], %23 {strides = array<i32>} : memref<32x1xf32, #tpu.memory_space<vmem>>, vector<32x1xf32>,
    %c0_14 = arith.constant 0 : index
    %c0_15 = arith.constant 0 : index
    %25 = vector.load %arg6[%c0_14, %c0_15] : memref<32x1xf32, #tpu.memory_space<vmem>>, vector<32x1xf32>
    %26 = arith.mulf %19, %19 : vector<32x512xf32>
    %cst_16 = arith.constant dense<0.000000e+00> : vector<32xf32>
    %27 = vector.multi_reduction <add>, %26, %cst_16 [1] : vector<32x512xf32> to vector<32xf32>
    %28 = vector.shape_cast %27 : vector<32xf32> to vector<32x1xf32>
    %29 = arith.addf %25, %28 : vector<32x1xf32>
    %c0_17 = arith.constant 0 : index
    %c0_18 = arith.constant 0 : index
    %30 = vector.load %arg6[%c0_17, %c0_18] : memref<32x1xf32, #tpu.memory_space<vmem>>, vector<32x1xf32>
    tpu.vector_store %arg6[%c0_17, %c0_18], %29 {strides = array<i32>} : memref<32x1xf32, #tpu.memory_space<vmem>>, vector<32x1xf32>,
    return
  }
  func.func @transform_0(%arg0: i32) -> (i32, i32) {
    %c0_i32 = arith.constant 0 : i32
    %c0_i32_0 = arith.constant 0 : i32
    return %c0_i32, %arg0 : i32, i32
  }
  func.func @transform_1(%arg0: i32) -> (i32, i32) {
    %c0_i32 = arith.constant 0 : i32
    %c0_i32_0 = arith.constant 0 : i32
    %c0_i32_1 = arith.constant 0 : i32
    return %c0_i32, %c0_i32_0 : i32, i32
  }
  func.func @transform_2(%arg0: i32) -> (i32, i32) {
    %c0_i32 = arith.constant 0 : i32
    %c0_i32_0 = arith.constant 0 : i32
    %c0_i32_1 = arith.constant 0 : i32
    return %c0_i32, %c0_i32_0 : i32, i32
  }
  func.func @transform_3(%arg0: i32) -> (i32, i32) {
    %c0_i32 = arith.constant 0 : i32
    %c0_i32_0 = arith.constant 0 : i32
    return %c0_i32, %arg0 : i32, i32
  }
  func.func @transform_4(%arg0: i32) -> (i32, i32) {
    %c0_i32 = arith.constant 0 : i32
    %c0_i32_0 = arith.constant 0 : i32
    %c0_i32_1 = arith.constant 0 : i32
    return %c0_i32, %c0_i32_0 : i32, i32
  }
  func.func @transform_5(%arg0: i32) -> (i32, i32) {
    %c0_i32 = arith.constant 0 : i32
    %c0_i32_0 = arith.constant 0 : i32
    %c0_i32_1 = arith.constant 0 : i32
    return %c0_i32, %c0_i32_0 : i32, i32
  }
}

module attributes {stable_mosaic.version = 11 : i64} {
  func.func @_bn_lrelu_kernel(%arg0: i32, %arg1: memref<32x512xf32, #tpu.memory_space<vmem>>, %arg2: memref<32x1xf32, #tpu.memory_space<vmem>>, %arg3: memref<32x1xf32, #tpu.memory_space<vmem>>, %arg4: memref<32x512xf32, #tpu.memory_space<vmem>>) attributes {dimension_semantics = [#tpu.dimension_semantics<parallel>], iteration_bounds = array<i64: 2>, scalar_prefetch = 0 : i64, scratch_operands = 0 : i64, tpu.core_type = #tpu.core_type<tc>, window_params = [{transform_indices = @transform_0, window_bounds = array<i64: 32, 512>}, {pipeline_mode = #tpu.pipeline_mode<synchronous>, transform_indices = @transform_1, window_bounds = array<i64: 32, 1>}, {pipeline_mode = #tpu.pipeline_mode<synchronous>, transform_indices = @transform_2, window_bounds = array<i64: 32, 1>}, {transform_indices = @transform_3, window_bounds = array<i64: 32, 512>}]} {
    %c0 = arith.constant 0 : index
    %c0_0 = arith.constant 0 : index
    %0 = vector.load %arg1[%c0, %c0_0] : memref<32x512xf32, #tpu.memory_space<vmem>>, vector<32x512xf32>
    %c0_1 = arith.constant 0 : index
    %c0_2 = arith.constant 0 : index
    %1 = vector.load %arg2[%c0_1, %c0_2] : memref<32x1xf32, #tpu.memory_space<vmem>>, vector<32x1xf32>
    %2 = vector.broadcast %1 : vector<32x1xf32> to vector<32x512xf32>
    %3 = arith.mulf %0, %2 : vector<32x512xf32>
    %c0_3 = arith.constant 0 : index
    %c0_4 = arith.constant 0 : index
    %4 = vector.load %arg3[%c0_3, %c0_4] : memref<32x1xf32, #tpu.memory_space<vmem>>, vector<32x1xf32>
    %5 = vector.broadcast %4 : vector<32x1xf32> to vector<32x512xf32>
    %6 = arith.addf %3, %5 : vector<32x512xf32>
    %cst = arith.constant 0.000000e+00 : f32
    %7 = vector.broadcast %cst : f32 to vector<32x512xf32>
    %8 = arith.cmpf oge, %6, %7 : vector<32x512xf32>
    %cst_5 = arith.constant 2.000000e-01 : f32
    %9 = vector.broadcast %cst_5 : f32 to vector<32x512xf32>
    %10 = arith.mulf %9, %6 : vector<32x512xf32>
    %11 = arith.select %8, %6, %10 : vector<32x512xi1>, vector<32x512xf32>
    %c0_6 = arith.constant 0 : index
    %c0_7 = arith.constant 0 : index
    %12 = vector.load %arg4[%c0_6, %c0_7] : memref<32x512xf32, #tpu.memory_space<vmem>>, vector<32x512xf32>
    tpu.vector_store %arg4[%c0_6, %c0_7], %11 {strides = array<i32>} : memref<32x512xf32, #tpu.memory_space<vmem>>, vector<32x512xf32>,
    return
  }
  func.func @transform_0(%arg0: i32) -> (i32, i32) {
    %c0_i32 = arith.constant 0 : i32
    %c0_i32_0 = arith.constant 0 : i32
    return %c0_i32, %arg0 : i32, i32
  }
  func.func @transform_1(%arg0: i32) -> (i32, i32) {
    %c0_i32 = arith.constant 0 : i32
    %c0_i32_0 = arith.constant 0 : i32
    %c0_i32_1 = arith.constant 0 : i32
    return %c0_i32, %c0_i32_0 : i32, i32
  }
  func.func @transform_2(%arg0: i32) -> (i32, i32) {
    %c0_i32 = arith.constant 0 : i32
    %c0_i32_0 = arith.constant 0 : i32
    %c0_i32_1 = arith.constant 0 : i32
    return %c0_i32, %c0_i32_0 : i32, i32
  }
  func.func @transform_3(%arg0: i32) -> (i32, i32) {
    %c0_i32 = arith.constant 0 : i32
    %c0_i32_0 = arith.constant 0 : i32
    return %c0_i32, %arg0 : i32, i32
  }
}

module attributes {stable_mosaic.version = 11 : i64} {
  func.func @_conv_stats_kernel(%arg0: i32, %arg1: memref<288x512xbf16, #tpu.memory_space<vmem>>, %arg2: memref<32x288xbf16, #tpu.memory_space<vmem>>, %arg3: memref<32x1xf32, #tpu.memory_space<vmem>>, %arg4: memref<32x512xf32, #tpu.memory_space<vmem>>, %arg5: memref<32x1xf32, #tpu.memory_space<vmem>>, %arg6: memref<32x1xf32, #tpu.memory_space<vmem>>) attributes {dimension_semantics = [#tpu.dimension_semantics<arbitrary>], iteration_bounds = array<i64: 2>, scalar_prefetch = 0 : i64, scratch_operands = 0 : i64, tpu.core_type = #tpu.core_type<tc>, window_params = [{transform_indices = @transform_0, window_bounds = array<i64: 288, 512>}, {pipeline_mode = #tpu.pipeline_mode<synchronous>, transform_indices = @transform_1, window_bounds = array<i64: 32, 288>}, {pipeline_mode = #tpu.pipeline_mode<synchronous>, transform_indices = @transform_2, window_bounds = array<i64: 32, 1>}, {transform_indices = @transform_3, window_bounds = array<i64: 32, 512>}, {pipeline_mode = #tpu.pipeline_mode<synchronous>, transform_indices = @transform_4, window_bounds = array<i64: 32, 1>}, {pipeline_mode = #tpu.pipeline_mode<synchronous>, transform_indices = @transform_5, window_bounds = array<i64: 32, 1>}]} {
    %c0_i32 = arith.constant 0 : i32
    %0 = arith.cmpi eq, %arg0, %c0_i32 : i32
    %1 = arith.extui %0 : i1 to i32
    %c0_i32_0 = arith.constant 0 : i32
    %2 = arith.cmpi ne, %1, %c0_i32_0 : i32
    scf.if %2 {
      %cst_19 = arith.constant 0.000000e+00 : f32
      %31 = vector.broadcast %cst_19 : f32 to vector<32x1xf32>
      %c0_20 = arith.constant 0 : index
      %c0_21 = arith.constant 0 : index
      %32 = vector.load %arg5[%c0_20, %c0_21] : memref<32x1xf32, #tpu.memory_space<vmem>>, vector<32x1xf32>
      tpu.vector_store %arg5[%c0_20, %c0_21], %31 {strides = array<i32>} : memref<32x1xf32, #tpu.memory_space<vmem>>, vector<32x1xf32>,
      %cst_22 = arith.constant 0.000000e+00 : f32
      %33 = vector.broadcast %cst_22 : f32 to vector<32x1xf32>
      %c0_23 = arith.constant 0 : index
      %c0_24 = arith.constant 0 : index
      %34 = vector.load %arg6[%c0_23, %c0_24] : memref<32x1xf32, #tpu.memory_space<vmem>>, vector<32x1xf32>
      tpu.vector_store %arg6[%c0_23, %c0_24], %33 {strides = array<i32>} : memref<32x1xf32, #tpu.memory_space<vmem>>, vector<32x1xf32>,
    } else {
    }
    %c0 = arith.constant 0 : index
    %c0_1 = arith.constant 0 : index
    %3 = vector.load %arg2[%c0, %c0_1] : memref<32x288xbf16, #tpu.memory_space<vmem>>, vector<32x288xbf16>
    %c0_2 = arith.constant 0 : index
    %c0_3 = arith.constant 0 : index
    %4 = vector.load %arg1[%c0_2, %c0_3] : memref<288x512xbf16, #tpu.memory_space<vmem>>, vector<288x512xbf16>
    %cst = arith.constant dense<0.000000e+00> : vector<32x512xf32>
    %5 = tpu.matmul %3, %4, %cst {dimension_numbers = #tpu.dot_dimension_numbers<[1], [0], [0], [1], [0, 0, 1, 1], [], []>} : vector<32x288xbf16>, vector<288x512xbf16>, vector<32x512xf32> -> vector<32x512xf32>
    %c0_4 = arith.constant 0 : index
    %c0_5 = arith.constant 0 : index
    %6 = vector.load %arg3[%c0_4, %c0_5] : memref<32x1xf32, #tpu.memory_space<vmem>>, vector<32x1xf32>
    %7 = vector.broadcast %6 : vector<32x1xf32> to vector<32x512xf32>
    %8 = arith.addf %5, %7 : vector<32x512xf32>
    %c0_6 = arith.constant 0 : index
    %c0_7 = arith.constant 0 : index
    %9 = vector.load %arg4[%c0_6, %c0_7] : memref<32x512xf32, #tpu.memory_space<vmem>>, vector<32x512xf32>
    tpu.vector_store %arg4[%c0_6, %c0_7], %8 {strides = array<i32>} : memref<32x512xf32, #tpu.memory_space<vmem>>, vector<32x512xf32>,
    %10 = tpu.iota {dimensions = array<i32: 1>} : vector<1x512xi32>
    %c512_i32 = arith.constant 512 : i32
    %11 = arith.muli %arg0, %c512_i32 : i32
    %12 = vector.broadcast %11 : i32 to vector<1x512xi32>
    %13 = arith.addi %10, %12 : vector<1x512xi32>
    %c800_i32 = arith.constant 800 : i32
    %14 = vector.broadcast %c800_i32 : i32 to vector<1x512xi32>
    %15 = arith.cmpi slt, %13, %14 : vector<1x512xi32>
    %cst_8 = arith.constant 0.000000e+00 : f32
    %16 = vector.shape_cast %15 : vector<1x512xi1> to vector<1x512xi1>
    %17 = vector.broadcast %16 : vector<1x512xi1> to vector<32x512xi1>
    %18 = vector.broadcast %cst_8 : f32 to vector<32x512xf32>
    %19 = arith.select %17, %8, %18 : vector<32x512xi1>, vector<32x512xf32>
    %c0_9 = arith.constant 0 : index
    %c0_10 = arith.constant 0 : index
    %20 = vector.load %arg5[%c0_9, %c0_10] : memref<32x1xf32, #tpu.memory_space<vmem>>, vector<32x1xf32>
    %cst_11 = arith.constant dense<0.000000e+00> : vector<32xf32>
    %21 = vector.multi_reduction <add>, %19, %cst_11 [1] : vector<32x512xf32> to vector<32xf32>
    %22 = vector.shape_cast %21 : vector<32xf32> to vector<32x1xf32>
    %23 = arith.addf %20, %22 : vector<32x1xf32>
    %c0_12 = arith.constant 0 : index
    %c0_13 = arith.constant 0 : index
    %24 = vector.load %arg5[%c0_12, %c0_13] : memref<32x1xf32, #tpu.memory_space<vmem>>, vector<32x1xf32>
    tpu.vector_store %arg5[%c0_12, %c0_13], %23 {strides = array<i32>} : memref<32x1xf32, #tpu.memory_space<vmem>>, vector<32x1xf32>,
    %c0_14 = arith.constant 0 : index
    %c0_15 = arith.constant 0 : index
    %25 = vector.load %arg6[%c0_14, %c0_15] : memref<32x1xf32, #tpu.memory_space<vmem>>, vector<32x1xf32>
    %26 = arith.mulf %19, %19 : vector<32x512xf32>
    %cst_16 = arith.constant dense<0.000000e+00> : vector<32xf32>
    %27 = vector.multi_reduction <add>, %26, %cst_16 [1] : vector<32x512xf32> to vector<32xf32>
    %28 = vector.shape_cast %27 : vector<32xf32> to vector<32x1xf32>
    %29 = arith.addf %25, %28 : vector<32x1xf32>
    %c0_17 = arith.constant 0 : index
    %c0_18 = arith.constant 0 : index
    %30 = vector.load %arg6[%c0_17, %c0_18] : memref<32x1xf32, #tpu.memory_space<vmem>>, vector<32x1xf32>
    tpu.vector_store %arg6[%c0_17, %c0_18], %29 {strides = array<i32>} : memref<32x1xf32, #tpu.memory_space<vmem>>, vector<32x1xf32>,
    return
  }
  func.func @transform_0(%arg0: i32) -> (i32, i32) {
    %c0_i32 = arith.constant 0 : i32
    %c0_i32_0 = arith.constant 0 : i32
    return %c0_i32, %arg0 : i32, i32
  }
  func.func @transform_1(%arg0: i32) -> (i32, i32) {
    %c0_i32 = arith.constant 0 : i32
    %c0_i32_0 = arith.constant 0 : i32
    %c0_i32_1 = arith.constant 0 : i32
    return %c0_i32, %c0_i32_0 : i32, i32
  }
  func.func @transform_2(%arg0: i32) -> (i32, i32) {
    %c0_i32 = arith.constant 0 : i32
    %c0_i32_0 = arith.constant 0 : i32
    %c0_i32_1 = arith.constant 0 : i32
    return %c0_i32, %c0_i32_0 : i32, i32
  }
  func.func @transform_3(%arg0: i32) -> (i32, i32) {
    %c0_i32 = arith.constant 0 : i32
    %c0_i32_0 = arith.constant 0 : i32
    return %c0_i32, %arg0 : i32, i32
  }
  func.func @transform_4(%arg0: i32) -> (i32, i32) {
    %c0_i32 = arith.constant 0 : i32
    %c0_i32_0 = arith.constant 0 : i32
    %c0_i32_1 = arith.constant 0 : i32
    return %c0_i32, %c0_i32_0 : i32, i32
  }
  func.func @transform_5(%arg0: i32) -> (i32, i32) {
    %c0_i32 = arith.constant 0 : i32
    %c0_i32_0 = arith.constant 0 : i32
    %c0_i32_1 = arith.constant 0 : i32
    return %c0_i32, %c0_i32_0 : i32, i32
  }
}

module attributes {stable_mosaic.version = 11 : i64} {
  func.func @_conv_tanh_res_kernel(%arg0: i32, %arg1: memref<288x512xbf16, #tpu.memory_space<vmem>>, %arg2: memref<3x288xbf16, #tpu.memory_space<vmem>>, %arg3: memref<3x1xf32, #tpu.memory_space<vmem>>, %arg4: memref<3x512xf32, #tpu.memory_space<vmem>>, %arg5: memref<3x512xf32, #tpu.memory_space<vmem>>) attributes {dimension_semantics = [#tpu.dimension_semantics<parallel>], iteration_bounds = array<i64: 2>, scalar_prefetch = 0 : i64, scratch_operands = 0 : i64, tpu.core_type = #tpu.core_type<tc>, window_params = [{transform_indices = @transform_0, window_bounds = array<i64: 288, 512>}, {pipeline_mode = #tpu.pipeline_mode<synchronous>, transform_indices = @transform_1, window_bounds = array<i64: 3, 288>}, {pipeline_mode = #tpu.pipeline_mode<synchronous>, transform_indices = @transform_2, window_bounds = array<i64: 3, 1>}, {transform_indices = @transform_3, window_bounds = array<i64: 3, 512>}, {transform_indices = @transform_4, window_bounds = array<i64: 3, 512>}]} {
    %c0 = arith.constant 0 : index
    %c0_0 = arith.constant 0 : index
    %0 = vector.load %arg2[%c0, %c0_0] : memref<3x288xbf16, #tpu.memory_space<vmem>>, vector<3x288xbf16>
    %c0_1 = arith.constant 0 : index
    %c0_2 = arith.constant 0 : index
    %1 = vector.load %arg1[%c0_1, %c0_2] : memref<288x512xbf16, #tpu.memory_space<vmem>>, vector<288x512xbf16>
    %cst = arith.constant dense<0.000000e+00> : vector<3x512xf32>
    %2 = tpu.matmul %0, %1, %cst {dimension_numbers = #tpu.dot_dimension_numbers<[1], [0], [0], [1], [0, 0, 1, 1], [], []>} : vector<3x288xbf16>, vector<288x512xbf16>, vector<3x512xf32> -> vector<3x512xf32>
    %c0_3 = arith.constant 0 : index
    %c0_4 = arith.constant 0 : index
    %3 = vector.load %arg3[%c0_3, %c0_4] : memref<3x1xf32, #tpu.memory_space<vmem>>, vector<3x1xf32>
    %4 = vector.broadcast %3 : vector<3x1xf32> to vector<3x512xf32>
    %5 = arith.addf %2, %4 : vector<3x512xf32>
    %c0_5 = arith.constant 0 : index
    %c0_6 = arith.constant 0 : index
    %6 = vector.load %arg4[%c0_5, %c0_6] : memref<3x512xf32, #tpu.memory_space<vmem>>, vector<3x512xf32>
    %7 = math.tanh %5 : vector<3x512xf32>
    %8 = arith.addf %6, %7 : vector<3x512xf32>
    %c0_7 = arith.constant 0 : index
    %c0_8 = arith.constant 0 : index
    %9 = vector.load %arg5[%c0_7, %c0_8] : memref<3x512xf32, #tpu.memory_space<vmem>>, vector<3x512xf32>
    tpu.vector_store %arg5[%c0_7, %c0_8], %8 {strides = array<i32>} : memref<3x512xf32, #tpu.memory_space<vmem>>, vector<3x512xf32>,
    return
  }
  func.func @transform_0(%arg0: i32) -> (i32, i32) {
    %c0_i32 = arith.constant 0 : i32
    %c0_i32_0 = arith.constant 0 : i32
    return %c0_i32, %arg0 : i32, i32
  }
  func.func @transform_1(%arg0: i32) -> (i32, i32) {
    %c0_i32 = arith.constant 0 : i32
    %c0_i32_0 = arith.constant 0 : i32
    %c0_i32_1 = arith.constant 0 : i32
    return %c0_i32, %c0_i32_0 : i32, i32
  }
  func.func @transform_2(%arg0: i32) -> (i32, i32) {
    %c0_i32 = arith.constant 0 : i32
    %c0_i32_0 = arith.constant 0 : i32
    %c0_i32_1 = arith.constant 0 : i32
    return %c0_i32, %c0_i32_0 : i32, i32
  }
  func.func @transform_3(%arg0: i32) -> (i32, i32) {
    %c0_i32 = arith.constant 0 : i32
    %c0_i32_0 = arith.constant 0 : i32
    return %c0_i32, %arg0 : i32, i32
  }
  func.func @transform_4(%arg0: i32) -> (i32, i32) {
    %c0_i32 = arith.constant 0 : i32
    %c0_i32_0 = arith.constant 0 : i32
    return %c0_i32, %arg0 : i32, i32
  }
}

</mosaic_0001>

<llo_original>
// kernel: single_scale_generator.10
$region0: #{single_scale_generator.10}
  #allocation0 [shape = 'u32[]', space=smem, size = 0x4, offset = 0x4, fixed_abs, tag = 'smem constant byte address 0x4 - core index']
  #allocation1 [shape = 'u32[144,128]{1,0:T(1,128)}', space=vmem, size = 0x12000, scoped, tag = 'internal scratch']
  %s0 = inlined_call_operand.vmem [shape: f32[32,1024], index: 0, kind: input, shape index: {}]
  %s1 = inlined_call_operand.vmem [shape: f32[32,1], index: 1, kind: input, shape index: {}]
  %s2 = inlined_call_operand.vmem [shape: f32[32,1], index: 2, kind: input, shape index: {}]
  %s3 = inlined_call_operand.vmem [shape: f32[32,1024], index: 3, kind: output, shape index: {}]
  %s4 = sld [smem:[#allocation0]]
  $region87: #{single_scale_generator.10} parent=0
    _
  %s6 = ssub.s32 1, %s4
  %s7 = scalar_select 0, %s6, %s4
  $region1: #{single_scale_generator.10} parent=0
    #allocation2 [shape = 'u8[131072]{0}', space=vmem, size = 0x20000, scoped, tag = 'input window, operand 0']
    #allocation3 [shape = 'u8[131072]{0}', space=vmem, size = 0x20000, scoped, tag = 'output window, operand 0']
    loop: start=0, step=1, limit=4
    $region2: #{single_scale_generator.10} parent=1 // loop_pre_header
      _
    $region3: #{single_scale_generator.10} parent=1 // loop_header
      %s9 = sphi 0, %s13
      %p10 = scmp.ge.s32.totalorder %s9, 4
      %s19 = sphi 0, %s21
      %s22 = sphi 0, %s19
      %s23 = sphi 0, %s22
      %s39 = sphi 0, %s23
      %s43 = sphi 0, %s43
      %s45 = sphi 0, %s43
      %s46 = sphi 0, %s45
      %s60 = sphi 0, %s46
      %s64 = sphi 0, %s64
      %s66 = sphi 0, %s64
      %s67 = sphi 0, %s66
      %s81 = sphi 0, %s67
      %s87 = sphi 0, %s89
      %s90 = sphi 0, %s87
      %s91 = sphi 0, %s90
      %s107 = sphi 0, %s91
    $region4: #{single_scale_generator.10} parent=1 // loop_header_branch
      %12 = sbr.rel (%p10) target = $region8
    $region5: #{single_scale_generator.10} parent=1 // loop_body
      %s14 = ssub.s32 %s9, 1
      %s15 = ssub.s32 %s9, 2
      %s16 = sadd.s32 %s9, 1
      %s17 = ssub.s32 %s9, %s16
      %p18 = scmp.eq.s32.totalorder %s17, 0
      %s20 = sadd.s32 %s19, 1
      %s21 = scalar_select %p18, %s19, %s20
      %p24 = pneg %p18
      %p25 = scmp.eq.s32.totalorder %s9, 1
      %p26 = por %p24, %p25
      %p27 = scmp.ne.s32.totalorder %s19, %s22
      %p28 = scmp.eq.s32.totalorder %s9, 0
      %p29 = por %p27, %p28
      %p30 = scmp.ne.s32.totalorder %s19, %s22
      %p31 = scmp.eq.s32.totalorder %s14, 1
      %p32 = por %p30, %p31
      %p33 = scmp.ne.s32.totalorder %s22, %s23
      %p34 = scmp.eq.s32.totalorder %s14, 0
      %p35 = por %p33, %p34
      %p36 = scmp.ne.s32.totalorder %s22, %s23
      %p37 = scmp.eq.s32.totalorder %s15, 1
      %p38 = por %p36, %p37
      %p40 = scmp.ne.s32.totalorder %s23, %s39
      %p41 = scmp.eq.s32.totalorder %s15, 0
      %p42 = por %p40, %p41
      %s44 = sadd.s32 %s43, 1
      %p47 = scmp.eq.s32.totalorder %s9, 1
      %p48 = scmp.ne.s32.totalorder %s43, %s45
      %p49 = scmp.eq.s32.totalorder %s9, 0
      %p50 = por %p48, %p49
      %p51 = scmp.ne.s32.totalorder %s43, %s45
      %p52 = scmp.eq.s32.totalorder %s14, 1
      %p53 = por %p51, %p52
      %p54 = scmp.ne.s32.totalorder %s45, %s46
      %p55 = scmp.eq.s32.totalorder %s14, 0
      %p56 = por %p54, %p55
      %p57 = scmp.ne.s32.totalorder %s45, %s46
      %p58 = scmp.eq.s32.totalorder %s15, 1
      %p59 = por %p57, %p58
      %p61 = scmp.ne.s32.totalorder %s46, %s60
      %p62 = scmp.eq.s32.totalorder %s15, 0
      %p63 = por %p61, %p62
      %s65 = sadd.s32 %s64, 1
      %p68 = scmp.eq.s32.totalorder %s9, 1
      %p69 = scmp.ne.s32.totalorder %s64, %s66
      %p70 = scmp.eq.s32.totalorder %s9, 0
      %p71 = por %p69, %p70
      %p72 = scmp.ne.s32.totalorder %s64, %s66
      %p73 = scmp.eq.s32.totalorder %s14, 1
      %p74 = por %p72, %p73
      %p75 = scmp.ne.s32.totalorder %s66, %s67
      %p76 = scmp.eq.s32.totalorder %s14, 0
      %p77 = por %p75, %p76
      %p78 = scmp.ne.s32.totalorder %s66, %s67
      %p79 = scmp.eq.s32.totalorder %s15, 1
      %p80 = por %p78, %p79
      %p82 = scmp.ne.s32.totalorder %s67, %s81
      %p83 = scmp.eq.s32.totalorder %s15, 0
      %p84 = por %p82, %p83
      %s85 = ssub.s32 %s9, %s16
      %p86 = scmp.eq.s32.totalorder %s85, 0
      %s88 = sadd.s32 %s87, 1
      %s89 = scalar_select %p86, %s87, %s88
      %p92 = pneg %p86
      %p93 = scmp.eq.s32.totalorder %s9, 1
      %p94 = por %p92, %p93
      %p95 = scmp.ne.s32.totalorder %s87, %s90
      %p96 = scmp.eq.s32.totalorder %s9, 0
      %p97 = por %p95, %p96
      %p98 = scmp.ne.s32.totalorder %s87, %s90
      %p99 = scmp.eq.s32.totalorder %s14, 1
      %p100 = por %p98, %p99
      %p101 = scmp.ne.s32.totalorder %s90, %s91
      %p102 = scmp.eq.s32.totalorder %s14, 0
      %p103 = por %p101, %p102
      %p104 = scmp.ne.s32.totalorder %s90, %s91
      %p105 = scmp.eq.s32.totalorder %s15, 1
      %p106 = por %p104, %p105
      %p108 = scmp.ne.s32.totalorder %s91, %s107
      %p109 = scmp.eq.s32.totalorder %s15, 0
      %p110 = por %p108, %p109
      %p111 = scmp.le.s32.totalorder 1, %s9
      %p112 = scmp.lt.s32.totalorder %s9, 3
      %p113 = pnand %p111, %p112
      %p114 = pneg %p113
      // Predicated region
      $region9: #{single_scale_generator.10} parent=5 // pred_check
        _
      $region10: #{single_scale_generator.10} parent=5 // pred_check_branch
        %116 = sbr.rel (%p113) target = $region12
      $region11: #{single_scale_generator.10} parent=5 // pred_region
        %s117 = ssub.s32 %s9, 1
        // Predicated region
        $region13: #{single_scale_generator.10} parent=11 // pred_check
          %p118 = pneg %p56
        $region14: #{single_scale_generator.10} parent=11 // pred_check_branch
          %120 = sbr.rel (%p118) target = $region16
        $region15: #{single_scale_generator.10} parent=11 // pred_region
          _
        $region16: #{single_scale_generator.10} parent=11 // pred_fallthru
          _
        // Predicated region
        $region17: #{single_scale_generator.10} parent=11 // pred_check
          %p121 = pneg %p77
        $region18: #{single_scale_generator.10} parent=11 // pred_check_branch
          %123 = sbr.rel (%p121) target = $region20
        $region19: #{single_scale_generator.10} parent=11 // pred_region
          _
        $region20: #{single_scale_generator.10} parent=11 // pred_fallthru
          _
      $region12: #{single_scale_generator.10} parent=5 // pred_fallthru
        _
      %p124 = scmp.lt.s32.totalorder %s9, 2
      // Predicated region
      $region21: #{single_scale_generator.10} parent=5 // pred_check
        %p125 = pneg %p124
      $region22: #{single_scale_generator.10} parent=5 // pred_check_branch
        %127 = sbr.rel (%p125) target = $region24
      $region23: #{single_scale_generator.10} parent=5 // pred_region
        // Predicated region
        $region25: #{single_scale_generator.10} parent=23 // pred_check
          %p128 = pneg %p29
        $region26: #{single_scale_generator.10} parent=23 // pred_check_branch
          %130 = sbr.rel (%p128) target = $region28
        $region27: #{single_scale_generator.10} parent=23 // pred_region
          %s131 = sand.u32 %s19, 1
          %s132 = sand.u32 %s19, 1
          %s133 = smul.addr %s132, 128
          %s134 = scalar_lea.vmem [#allocation2], %s133
          %s135 = smul.u32 4, %s9
          %s136 = smul.addr %s135, 8
          %s137 = scalar_lea.vmem %s0, %s136
          // Predicated region
          $region29: #{single_scale_generator.10} parent=27 // pred_check
            _
          $region30: #{single_scale_generator.10} parent=27 // pred_check_branch
            %139 = sbr.rel (0) target = $region32
          $region31: #{single_scale_generator.10} parent=27 // pred_region
            // Predicated region
            $region33: #{single_scale_generator.10} parent=31 // pred_check
              _
            $region34: #{single_scale_generator.10} parent=31 // pred_check_branch
              %141 = sbr.rel (0) target = $region36
            $region35: #{single_scale_generator.10} parent=31 // pred_region
              loop: start=0, step=1, limit=1
              $region37: #{single_scale_generator.10} parent=35 // loop_pre_header
                _
              $region38: #{single_scale_generator.10} parent=35 // loop_header
                %s143 = sphi 0, %s147
                %p144 = scmp.ge.s32.totalorder %s143, 1
                %s148 = sphi %s137, %s137
                %s149 = sphi %s134, %s134
              $region39: #{single_scale_generator.10} parent=35 // loop_header_branch
                %146 = sbr.rel (%p144) target = $region43
              $region40: #{single_scale_generator.10} parent=35 // loop_body
                %v150 = vld [vmem:[%s148] sm:$0xff]
                %151 = vst [vmem:[%s149] sm:$0xff] %v150
                %v152 = vld [vmem:[%s148 + $0x8] sm:$0xff]
                %153 = vst [vmem:[%s149 + $0x8] sm:$0xff] %v152
                %v154 = vld [vmem:[%s148 + $0x10] sm:$0xff]
                %155 = vst [vmem:[%s149 + $0x10] sm:$0xff] %v154
                %v156 = vld [vmem:[%s148 + $0x18] sm:$0xff]
                %157 = vst [vmem:[%s149 + $0x18] sm:$0xff] %v156
                %v158 = vld [vmem:[%s148 + $0x40] sm:$0xff]
                %159 = vst [vmem:[%s149 + $0x20] sm:$0xff] %v158
                %v160 = vld [vmem:[%s148 + $0x48] sm:$0xff]
                %161 = vst [vmem:[%s149 + $0x28] sm:$0xff] %v160
                %v162 = vld [vmem:[%s148 + $0x50] sm:$0xff]
                %163 = vst [vmem:[%s149 + $0x30] sm:$0xff] %v162
                %v164 = vld [vmem:[%s148 + $0x58] sm:$0xff]
                %165 = vst [vmem:[%s149 + $0x38] sm:$0xff] %v164
                %v166 = vld [vmem:[%s148 + $0x80] sm:$0xff]
                %167 = vst [vmem:[%s149 + $0x40] sm:$0xff] %v166
                %v168 = vld [vmem:[%s148 + $0x88] sm:$0xff]
                %169 = vst [vmem:[%s149 + $0x48] sm:$0xff] %v168
                %v170 = vld [vmem:[%s148 + $0x90] sm:$0xff]
                %171 = vst [vmem:[%s149 + $0x50] sm:$0xff] %v170
                %v172 = vld [vmem:[%s148 + $0x98] sm:$0xff]
                %173 = vst [vmem:[%s149 + $0x58] sm:$0xff] %v172
                %v174 = vld [vmem:[%s148 + $0xc0] sm:$0xff]
                %175 = vst [vmem:[%s149 + $0x60] sm:$0xff] %v174
                %v176 = vld [vmem:[%s148 + $0xc8] sm:$0xff]
                %177 = vst [vmem:[%s149 + $0x68] sm:$0xff] %v176
                %v178 = vld [vmem:[%s148 + $0xd0] sm:$0xff]
                %179 = vst [vmem:[%s149 + $0x70] sm:$0xff] %v178
                %v180 = vld [vmem:[%s148 + $0xd8] sm:$0xff]
                %181 = vst [vmem:[%s149 + $0x78] sm:$0xff] %v180
              $region41: #{single_scale_generator.10} parent=35 // loop_footer
                %s147 = sadd.s32 1, %s143
              $region42: #{single_scale_generator.10} parent=35 // loop_footer_branch
                %142 = sbr.rel target = $region38
              $region43: #{single_scale_generator.10} parent=35 // loop_exit
                _
            $region36: #{single_scale_generator.10} parent=31 // pred_fallthru
              _
            // Predicated region
            $region44: #{single_scale_generator.10} parent=31 // pred_check
              _
            $region45: #{single_scale_generator.10} parent=31 // pred_check_branch
              %183 = sbr.rel target = $region47
            $region46: #{single_scale_generator.10} parent=31 // pred_region
              _
            $region47: #{single_scale_generator.10} parent=31 // pred_fallthru
              _
          $region32: #{single_scale_generator.10} parent=27 // pred_fallthru
            _
          %184 = vnop
        $region28: #{single_scale_generator.10} parent=23 // pred_fallthru
          _
      $region24: #{single_scale_generator.10} parent=5 // pred_fallthru
        _
      %p185 = scmp.le.s32.totalorder 1, %s9
      %p186 = scmp.lt.s32.totalorder %s9, 3
      %p187 = pnand %p185, %p186
      %p188 = pneg %p187
      // Predicated region
      $region48: #{single_scale_generator.10} parent=5 // pred_check
        _
      $region49: #{single_scale_generator.10} parent=5 // pred_check_branch
        %190 = sbr.rel (%p187) target = $region51
      $region50: #{single_scale_generator.10} parent=5 // pred_region
        %s191 = ssub.s32 %s9, 1
        %s192 = sand.u32 %s22, 1
        %s193 = sand.u32 %s22, 1
        %s194 = smul.addr %s193, 128
        %s195 = scalar_lea.vmem [#allocation2], %s194
        // Predicated region
        $region52: #{single_scale_generator.10} parent=50 // pred_check
          %p196 = pneg %p35
        $region53: #{single_scale_generator.10} parent=50 // pred_check_branch
          %198 = sbr.rel (%p196) target = $region55
        $region54: #{single_scale_generator.10} parent=50 // pred_region
          _
        $region55: #{single_scale_generator.10} parent=50 // pred_fallthru
          _
        %s199 = sand.u32 %s22, 1
        %s200 = sand.u32 %s22, 1
        %s201 = smul.addr %s200, 128
        %s202 = scalar_lea.vmem [#allocation2], %s201
        %p203 = pneg %p35
        %p204 = pneg %p32
        %p205 = pneg %p56
        %p206 = pneg %p53
        %p207 = pneg %p77
        %p208 = pneg %p74
        %p209 = pneg %p103
        %p210 = pneg %p100
        %s211 = sand.u32 %s90, 1
        %s212 = sand.u32 %s90, 1
        %s213 = smul.addr %s212, 128
        %s214 = scalar_lea.vmem [#allocation3], %s213
        %s215 = smul.u32 4, %s14
        %s216 = smul.u32 4, %s14
        %v217 = vld [vmem:[%s195] sm:$0xff]
        %v218 = vld [vmem:[%s195 + $0x8] sm:$0xff]
        %v219 = vld [vmem:[%s195 + $0x10] sm:$0xff]
        %v220 = vld [vmem:[%s195 + $0x18] sm:$0xff]
        %v221 = vld [vmem:[%s195 + $0x20] sm:$0xff]
        %v222 = vld [vmem:[%s195 + $0x28] sm:$0xff]
        %v223 = vld [vmem:[%s195 + $0x30] sm:$0xff]
        %v224 = vld [vmem:[%s195 + $0x38] sm:$0xff]
        %v225 = vld [vmem:[%s195 + $0x40] sm:$0xff]
        %v226 = vld [vmem:[%s195 + $0x48] sm:$0xff]
        %v227 = vld [vmem:[%s195 + $0x50] sm:$0xff]
        %v228 = vld [vmem:[%s195 + $0x58] sm:$0xff]
        %v229 = vld [vmem:[%s195 + $0x60] sm:$0xff]
        %v230 = vld [vmem:[%s195 + $0x68] sm:$0xff]
        %v231 = vld [vmem:[%s195 + $0x70] sm:$0xff]
        %v232 = vld [vmem:[%s195 + $0x78] sm:$0xff]
        %v233 = vld [vmem:[%s1] sm:$0xff]
        %v234 = vld [vmem:[%s1 + $0x8] sm:$0xff]
        %v235 = vld [vmem:[%s1 + $0x10] sm:$0xff]
        %v236 = vld [vmem:[%s1 + $0x18] sm:$0xff]
        %238 = vset.pattern.permute.xlu0 0
        %239 = vperm.xlu0 %238, %v233
        %v240 = vpop.permute.xlu0 %239
        %243 = vset.pattern.permute.xlu0 0
        %244 = vperm.xlu0 %243, %v234
        %v245 = vpop.permute.xlu0 %244
        %248 = vset.pattern.permute.xlu0 0
        %249 = vperm.xlu0 %248, %v235
        %v250 = vpop.permute.xlu0 %249
        %253 = vset.pattern.permute.xlu0 0
        %254 = vperm.xlu0 %253, %v236
        %v255 = vpop.permute.xlu0 %254
        %v257 = vmul.f32 %v217, %v240
        %v258 = vmul.f32 %v218, %v240
        %v259 = vmul.f32 %v219, %v240
        %v260 = vmul.f32 %v220, %v240
        %v261 = vmul.f32 %v221, %v245
        %v262 = vmul.f32 %v222, %v245
        %v263 = vmul.f32 %v223, %v245
        %v264 = vmul.f32 %v224, %v245
        %v265 = vmul.f32 %v225, %v250
        %v266 = vmul.f32 %v226, %v250
        %v267 = vmul.f32 %v227, %v250
        %v268 = vmul.f32 %v228, %v250
        %v269 = vmul.f32 %v229, %v255
        %v270 = vmul.f32 %v230, %v255
        %v271 = vmul.f32 %v231, %v255
        %v272 = vmul.f32 %v232, %v255
        %v273 = vld [vmem:[%s2] sm:$0xff]
        %v274 = vld [vmem:[%s2 + $0x8] sm:$0xff]
        %v275 = vld [vmem:[%s2 + $0x10] sm:$0xff]
        %v276 = vld [vmem:[%s2 + $0x18] sm:$0xff]
        %278 = vset.pattern.permute.xlu0 0
        %279 = vperm.xlu0 %278, %v273
        %v280 = vpop.permute.xlu0 %279
        %283 = vset.pattern.permute.xlu0 0
        %284 = vperm.xlu0 %283, %v274
        %v285 = vpop.permute.xlu0 %284
        %288 = vset.pattern.permute.xlu0 0
        %289 = vperm.xlu0 %288, %v275
        %v290 = vpop.permute.xlu0 %289
        %293 = vset.pattern.permute.xlu0 0
        %294 = vperm.xlu0 %293, %v276
        %v295 = vpop.permute.xlu0 %294
        %v297 = vadd.f32 %v257, %v280
        %v298 = vadd.f32 %v258, %v280
        %v299 = vadd.f32 %v259, %v280
        %v300 = vadd.f32 %v260, %v280
        %v301 = vadd.f32 %v261, %v285
        %v302 = vadd.f32 %v262, %v285
        %v303 = vadd.f32 %v263, %v285
        %v304 = vadd.f32 %v264, %v285
        %v305 = vadd.f32 %v265, %v290
        %v306 = vadd.f32 %v266, %v290
        %v307 = vadd.f32 %v267, %v290
        %v308 = vadd.f32 %v268, %v290
        %v309 = vadd.f32 %v269, %v295
        %v310 = vadd.f32 %v270, %v295
        %v311 = vadd.f32 %v271, %v295
        %v312 = vadd.f32 %v272, %v295
        %vm313 = vcmp.ge.f32.partialorder %v297, 0.0
        %vm314 = vcmp.ge.f32.partialorder %v298, 0.0
        %vm315 = vcmp.ge.f32.partialorder %v299, 0.0
        %vm316 = vcmp.ge.f32.partialorder %v300, 0.0
        %vm317 = vcmp.ge.f32.partialorder %v301, 0.0
        %vm318 = vcmp.ge.f32.partialorder %v302, 0.0
        %vm319 = vcmp.ge.f32.partialorder %v303, 0.0
        %vm320 = vcmp.ge.f32.partialorder %v304, 0.0
        %vm321 = vcmp.ge.f32.partialorder %v305, 0.0
        %vm322 = vcmp.ge.f32.partialorder %v306, 0.0
        %vm323 = vcmp.ge.f32.partialorder %v307, 0.0
        %vm324 = vcmp.ge.f32.partialorder %v308, 0.0
        %vm325 = vcmp.ge.f32.partialorder %v309, 0.0
        %vm326 = vcmp.ge.f32.partialorder %v310, 0.0
        %vm327 = vcmp.ge.f32.partialorder %v311, 0.0
        %vm328 = vcmp.ge.f32.partialorder %v312, 0.0
        %v329 = vmul.f32 %v297, 0.2
        %v330 = vmul.f32 %v298, 0.2
        %v331 = vmul.f32 %v299, 0.2
        %v332 = vmul.f32 %v300, 0.2
        %v333 = vmul.f32 %v301, 0.2
        %v334 = vmul.f32 %v302, 0.2
        %v335 = vmul.f32 %v303, 0.2
        %v336 = vmul.f32 %v304, 0.2
        %v337 = vmul.f32 %v305, 0.2
        %v338 = vmul.f32 %v306, 0.2
        %v339 = vmul.f32 %v307, 0.2
        %v340 = vmul.f32 %v308, 0.2
        %v341 = vmul.f32 %v309, 0.2
        %v342 = vmul.f32 %v310, 0.2
        %v343 = vmul.f32 %v311, 0.2
        %v344 = vmul.f32 %v312, 0.2
        %v345 = vsel %vm313, %v297, %v329
        %v346 = vsel %vm314, %v298, %v330
        %v347 = vsel %vm315, %v299, %v331
        %v348 = vsel %vm316, %v300, %v332
        %v349 = vsel %vm317, %v301, %v333
        %v350 = vsel %vm318, %v302, %v334
        %v351 = vsel %vm319, %v303, %v335
        %v352 = vsel %vm320, %v304, %v336
        %v353 = vsel %vm321, %v305, %v337
        %v354 = vsel %vm322, %v306, %v338
        %v355 = vsel %vm323, %v307, %v339
        %v356 = vsel %vm324, %v308, %v340
        %v357 = vsel %vm325, %v309, %v341
        %v358 = vsel %vm326, %v310, %v342
        %v359 = vsel %vm327, %v311, %v343
        %v360 = vsel %vm328, %v312, %v344
        %361 = vst [vmem:[%s214] sm:$0xff] %v345
        %362 = vst [vmem:[%s214 + $0x8] sm:$0xff] %v346
        %363 = vst [vmem:[%s214 + $0x10] sm:$0xff] %v347
        %364 = vst [vmem:[%s214 + $0x18] sm:$0xff] %v348
        %365 = vst [vmem:[%s214 + $0x20] sm:$0xff] %v349
        %366 = vst [vmem:[%s214 + $0x28] sm:$0xff] %v350
        %367 = vst [vmem:[%s214 + $0x30] sm:$0xff] %v351
        %368 = vst [vmem:[%s214 + $0x38] sm:$0xff] %v352
        %369 = vst [vmem:[%s214 + $0x40] sm:$0xff] %v353
        %370 = vst [vmem:[%s214 + $0x48] sm:$0xff] %v354
        %371 = vst [vmem:[%s214 + $0x50] sm:$0xff] %v355
        %372 = vst [vmem:[%s214 + $0x58] sm:$0xff] %v356
        %373 = vst [vmem:[%s214 + $0x60] sm:$0xff] %v357
        %374 = vst [vmem:[%s214 + $0x68] sm:$0xff] %v358
        %375 = vst [vmem:[%s214 + $0x70] sm:$0xff] %v359
        %376 = vst [vmem:[%s214 + $0x78] sm:$0xff] %v360
        %s377 = sand.u32 %s90, 1
        %s378 = sand.u32 %s90, 1
        %s379 = smul.addr %s378, 128
        %s380 = scalar_lea.vmem [#allocation3], %s379
        // Predicated region
        $region56: #{single_scale_generator.10} parent=50 // pred_check
          %p381 = pneg %p100
        $region57: #{single_scale_generator.10} parent=50 // pred_check_branch
          %383 = sbr.rel (%p381) target = $region59
        $region58: #{single_scale_generator.10} parent=50 // pred_region
          %s384 = smul.u32 4, %s14
          %s385 = smul.addr %s384, 8
          %s386 = scalar_lea.vmem %s3, %s385
          // Predicated region
          $region60: #{single_scale_generator.10} parent=58 // pred_check
            _
          $region61: #{single_scale_generator.10} parent=58 // pred_check_branch
            %388 = sbr.rel (0) target = $region63
          $region62: #{single_scale_generator.10} parent=58 // pred_region
            // Predicated region
            $region64: #{single_scale_generator.10} parent=62 // pred_check
              _
            $region65: #{single_scale_generator.10} parent=62 // pred_check_branch
              %390 = sbr.rel (0) target = $region67
            $region66: #{single_scale_generator.10} parent=62 // pred_region
              loop: start=0, step=1, limit=1
              $region68: #{single_scale_generator.10} parent=66 // loop_pre_header
                _
              $region69: #{single_scale_generator.10} parent=66 // loop_header
                %s392 = sphi 0, %s396
                %p393 = scmp.ge.s32.totalorder %s392, 1
                %s397 = sphi %s380, %s380
                %s398 = sphi %s386, %s386
              $region70: #{single_scale_generator.10} parent=66 // loop_header_branch
                %395 = sbr.rel (%p393) target = $region74
              $region71: #{single_scale_generator.10} parent=66 // loop_body
                %v399 = vld [vmem:[%s397] sm:$0xff]
                %400 = vst [vmem:[%s398] sm:$0xff] %v399
                %v401 = vld [vmem:[%s397 + $0x8] sm:$0xff]
                %402 = vst [vmem:[%s398 + $0x8] sm:$0xff] %v401
                %v403 = vld [vmem:[%s397 + $0x10] sm:$0xff]
                %404 = vst [vmem:[%s398 + $0x10] sm:$0xff] %v403
                %v405 = vld [vmem:[%s397 + $0x18] sm:$0xff]
                %406 = vst [vmem:[%s398 + $0x18] sm:$0xff] %v405
                %v407 = vld [vmem:[%s397 + $0x20] sm:$0xff]
                %408 = vst [vmem:[%s398 + $0x40] sm:$0xff] %v407
                %v409 = vld [vmem:[%s397 + $0x28] sm:$0xff]
                %410 = vst [vmem:[%s398 + $0x48] sm:$0xff] %v409
                %v411 = vld [vmem:[%s397 + $0x30] sm:$0xff]
                %412 = vst [vmem:[%s398 + $0x50] sm:$0xff] %v411
                %v413 = vld [vmem:[%s397 + $0x38] sm:$0xff]
                %414 = vst [vmem:[%s398 + $0x58] sm:$0xff] %v413
                %v415 = vld [vmem:[%s397 + $0x40] sm:$0xff]
                %416 = vst [vmem:[%s398 + $0x80] sm:$0xff] %v415
                %v417 = vld [vmem:[%s397 + $0x48] sm:$0xff]
                %418 = vst [vmem:[%s398 + $0x88] sm:$0xff] %v417
                %v419 = vld [vmem:[%s397 + $0x50] sm:$0xff]
                %420 = vst [vmem:[%s398 + $0x90] sm:$0xff] %v419
                %v421 = vld [vmem:[%s397 + $0x58] sm:$0xff]
                %422 = vst [vmem:[%s398 + $0x98] sm:$0xff] %v421
                %v423 = vld [vmem:[%s397 + $0x60] sm:$0xff]
                %424 = vst [vmem:[%s398 + $0xc0] sm:$0xff] %v423
                %v425 = vld [vmem:[%s397 + $0x68] sm:$0xff]
                %426 = vst [vmem:[%s398 + $0xc8] sm:$0xff] %v425
                %v427 = vld [vmem:[%s397 + $0x70] sm:$0xff]
                %428 = vst [vmem:[%s398 + $0xd0] sm:$0xff] %v427
                %v429 = vld [vmem:[%s397 + $0x78] sm:$0xff]
                %430 = vst [vmem:[%s398 + $0xd8] sm:$0xff] %v429
              $region72: #{single_scale_generator.10} parent=66 // loop_footer
                %s396 = sadd.s32 1, %s392
              $region73: #{single_scale_generator.10} parent=66 // loop_footer_branch
                %391 = sbr.rel target = $region69
              $region74: #{single_scale_generator.10} parent=66 // loop_exit
                _
            $region67: #{single_scale_generator.10} parent=62 // pred_fallthru
              _
            // Predicated region
            $region75: #{single_scale_generator.10} parent=62 // pred_check
              _
            $region76: #{single_scale_generator.10} parent=62 // pred_check_branch
              %432 = sbr.rel target = $region78
            $region77: #{single_scale_generator.10} parent=62 // pred_region
              _
            $region78: #{single_scale_generator.10} parent=62 // pred_fallthru
              _
          $region63: #{single_scale_generator.10} parent=58 // pred_fallthru
            _
          %433 = vnop
        $region59: #{single_scale_generator.10} parent=50 // pred_fallthru
          _
      $region51: #{single_scale_generator.10} parent=5 // pred_fallthru
        _
      %p434 = scmp.le.s32.totalorder 2, %s9
      // Predicated region
      $region79: #{single_scale_generator.10} parent=5 // pred_check
        %p435 = pneg %p434
      $region80: #{single_scale_generator.10} parent=5 // pred_check_branch
        %437 = sbr.rel (%p435) target = $region82
      $region81: #{single_scale_generator.10} parent=5 // pred_region
        %s438 = ssub.s32 %s9, 2
        // Predicated region
        $region83: #{single_scale_generator.10} parent=81 // pred_check
          %p439 = pneg %p106
        $region84: #{single_scale_generator.10} parent=81 // pred_check_branch
          %441 = sbr.rel (%p439) target = $region86
        $region85: #{single_scale_generator.10} parent=81 // pred_region
          %s442 = sand.u32 %s91, 1
          %s443 = sand.u32 %s91, 1
          %s444 = smul.addr %s443, 128
          %s445 = scalar_lea.vmem [#allocation3], %s444
        $region86: #{single_scale_generator.10} parent=81 // pred_fallthru
          _
      $region82: #{single_scale_generator.10} parent=5 // pred_fallthru
        _
    $region6: #{single_scale_generator.10} parent=1 // loop_footer
      %s13 = sadd.s32 1, %s9
    $region7: #{single_scale_generator.10} parent=1 // loop_footer_branch
      %8 = sbr.rel target = $region3
    $region8: #{single_scale_generator.10} parent=1 // loop_exit
      _

// kernel: single_scale_generator.9
$region0: #{single_scale_generator.9}
  #allocation0 [shape = 'u32[]', space=smem, size = 0x4, offset = 0x4, fixed_abs, tag = 'smem constant byte address 0x4 - core index']
  #allocation1 [shape = 'u32[144,128]{1,0:T(1,128)}', space=vmem, size = 0x12000, scoped, tag = 'internal scratch']
  %s0 = inlined_call_operand.vmem [shape: bf16[27,1024], index: 0, kind: input, shape index: {}]
  %s1 = inlined_call_operand.vmem [shape: bf16[32,27], index: 1, kind: input, shape index: {}]
  %s2 = inlined_call_operand.vmem [shape: f32[32,1], index: 2, kind: input, shape index: {}]
  %s3 = inlined_call_operand.vmem [shape: f32[32,1024], index: 3, kind: output, shape index: {0}]
  %s4 = inlined_call_operand.vmem [shape: f32[32,1], index: 4, kind: output, shape index: {1}]
  %s5 = inlined_call_operand.vmem [shape: f32[32,1], index: 5, kind: output, shape index: {2}]
  %6 = xla_tuple %s3, %s4, %s5
  %s7 = sld [smem:[#allocation0]]
  $region107: #{single_scale_generator.9} parent=0
    _
  %s9 = ssub.s32 1, %s7
  %s10 = scalar_select 0, %s9, %s7
  $region1: #{single_scale_generator.9} parent=0
    #allocation2 [shape = 'u8[65536]{0}', space=vmem, size = 0x10000, scoped, tag = 'input window, operand 0']
    #allocation3 [shape = 'u8[131072]{0}', space=vmem, size = 0x20000, scoped, tag = 'output window, operand 0']
    loop: start=0, step=1, limit=4
    $region2: #{single_scale_generator.9} parent=1 // loop_pre_header
      _
    $region3: #{single_scale_generator.9} parent=1 // loop_header
      %s12 = sphi 0, %s16
      %p13 = scmp.ge.s32.totalorder %s12, 4
      %s22 = sphi 0, %s24
      %s25 = sphi 0, %s22
      %s26 = sphi 0, %s25
      %s42 = sphi 0, %s26
      %s46 = sphi 0, %s46
      %s48 = sphi 0, %s46
      %s49 = sphi 0, %s48
      %s63 = sphi 0, %s49
      %s67 = sphi 0, %s67
      %s69 = sphi 0, %s67
      %s70 = sphi 0, %s69
      %s84 = sphi 0, %s70
      %s90 = sphi 0, %s92
      %s93 = sphi 0, %s90
      %s94 = sphi 0, %s93
      %s110 = sphi 0, %s94
      %s114 = sphi 0, %s114
      %s116 = sphi 0, %s114
      %s117 = sphi 0, %s116
      %s131 = sphi 0, %s117
      %s135 = sphi 0, %s135
      %s137 = sphi 0, %s135
      %s138 = sphi 0, %s137
      %s152 = sphi 0, %s138
    $region4: #{single_scale_generator.9} parent=1 // loop_header_branch
      %15 = sbr.rel (%p13) target = $region8
    $region5: #{single_scale_generator.9} parent=1 // loop_body
      %s17 = ssub.s32 %s12, 1
      %s18 = ssub.s32 %s12, 2
      %s19 = sadd.s32 %s12, 1
      %s20 = ssub.s32 %s12, %s19
      %p21 = scmp.eq.s32.totalorder %s20, 0
      %s23 = sadd.s32 %s22, 1
      %s24 = scalar_select %p21, %s22, %s23
      %p27 = pneg %p21
      %p28 = scmp.eq.s32.totalorder %s12, 1
      %p29 = por %p27, %p28
      %p30 = scmp.ne.s32.totalorder %s22, %s25
      %p31 = scmp.eq.s32.totalorder %s12, 0
      %p32 = por %p30, %p31
      %p33 = scmp.ne.s32.totalorder %s22, %s25
      %p34 = scmp.eq.s32.totalorder %s17, 1
      %p35 = por %p33, %p34
      %p36 = scmp.ne.s32.totalorder %s25, %s26
      %p37 = scmp.eq.s32.totalorder %s17, 0
      %p38 = por %p36, %p37
      %p39 = scmp.ne.s32.totalorder %s25, %s26
      %p40 = scmp.eq.s32.totalorder %s18, 1
      %p41 = por %p39, %p40
      %p43 = scmp.ne.s32.totalorder %s26, %s42
      %p44 = scmp.eq.s32.totalorder %s18, 0
      %p45 = por %p43, %p44
      %s47 = sadd.s32 %s46, 1
      %p50 = scmp.eq.s32.totalorder %s12, 1
      %p51 = scmp.ne.s32.totalorder %s46, %s48
      %p52 = scmp.eq.s32.totalorder %s12, 0
      %p53 = por %p51, %p52
      %p54 = scmp.ne.s32.totalorder %s46, %s48
      %p55 = scmp.eq.s32.totalorder %s17, 1
      %p56 = por %p54, %p55
      %p57 = scmp.ne.s32.totalorder %s48, %s49
      %p58 = scmp.eq.s32.totalorder %s17, 0
      %p59 = por %p57, %p58
      %p60 = scmp.ne.s32.totalorder %s48, %s49
      %p61 = scmp.eq.s32.totalorder %s18, 1
      %p62 = por %p60, %p61
      %p64 = scmp.ne.s32.totalorder %s49, %s63
      %p65 = scmp.eq.s32.totalorder %s18, 0
      %p66 = por %p64, %p65
      %s68 = sadd.s32 %s67, 1
      %p71 = scmp.eq.s32.totalorder %s12, 1
      %p72 = scmp.ne.s32.totalorder %s67, %s69
      %p73 = scmp.eq.s32.totalorder %s12, 0
      %p74 = por %p72, %p73
      %p75 = scmp.ne.s32.totalorder %s67, %s69
      %p76 = scmp.eq.s32.totalorder %s17, 1
      %p77 = por %p75, %p76
      %p78 = scmp.ne.s32.totalorder %s69, %s70
      %p79 = scmp.eq.s32.totalorder %s17, 0
      %p80 = por %p78, %p79
      %p81 = scmp.ne.s32.totalorder %s69, %s70
      %p82 = scmp.eq.s32.totalorder %s18, 1
      %p83 = por %p81, %p82
      %p85 = scmp.ne.s32.totalorder %s70, %s84
      %p86 = scmp.eq.s32.totalorder %s18, 0
      %p87 = por %p85, %p86
      %s88 = ssub.s32 %s12, %s19
      %p89 = scmp.eq.s32.totalorder %s88, 0
      %s91 = sadd.s32 %s90, 1
      %s92 = scalar_select %p89, %s90, %s91
      %p95 = pneg %p89
      %p96 = scmp.eq.s32.totalorder %s12, 1
      %p97 = por %p95, %p96
      %p98 = scmp.ne.s32.totalorder %s90, %s93
      %p99 = scmp.eq.s32.totalorder %s12, 0
      %p100 = por %p98, %p99
      %p101 = scmp.ne.s32.totalorder %s90, %s93
      %p102 = scmp.eq.s32.totalorder %s17, 1
      %p103 = por %p101, %p102
      %p104 = scmp.ne.s32.totalorder %s93, %s94
      %p105 = scmp.eq.s32.totalorder %s17, 0
      %p106 = por %p104, %p105
      %p107 = scmp.ne.s32.totalorder %s93, %s94
      %p108 = scmp.eq.s32.totalorder %s18, 1
      %p109 = por %p107, %p108
      %p111 = scmp.ne.s32.totalorder %s94, %s110
      %p112 = scmp.eq.s32.totalorder %s18, 0
      %p113 = por %p111, %p112
      %s115 = sadd.s32 %s114, 1
      %p118 = scmp.eq.s32.totalorder %s12, 1
      %p119 = scmp.ne.s32.totalorder %s114, %s116
      %p120 = scmp.eq.s32.totalorder %s12, 0
      %p121 = por %p119, %p120
      %p122 = scmp.ne.s32.totalorder %s114, %s116
      %p123 = scmp.eq.s32.totalorder %s17, 1
      %p124 = por %p122, %p123
      %p125 = scmp.ne.s32.totalorder %s116, %s117
      %p126 = scmp.eq.s32.totalorder %s17, 0
      %p127 = por %p125, %p126
      %p128 = scmp.ne.s32.totalorder %s116, %s117
      %p129 = scmp.eq.s32.totalorder %s18, 1
      %p130 = por %p128, %p129
      %p132 = scmp.ne.s32.totalorder %s117, %s131
      %p133 = scmp.eq.s32.totalorder %s18, 0
      %p134 = por %p132, %p133
      %s136 = sadd.s32 %s135, 1
      %p139 = scmp.eq.s32.totalorder %s12, 1
      %p140 = scmp.ne.s32.totalorder %s135, %s137
      %p141 = scmp.eq.s32.totalorder %s12, 0
      %p142 = por %p140, %p141
      %p143 = scmp.ne.s32.totalorder %s135, %s137
      %p144 = scmp.eq.s32.totalorder %s17, 1
      %p145 = por %p143, %p144
      %p146 = scmp.ne.s32.totalorder %s137, %s138
      %p147 = scmp.eq.s32.totalorder %s17, 0
      %p148 = por %p146, %p147
      %p149 = scmp.ne.s32.totalorder %s137, %s138
      %p150 = scmp.eq.s32.totalorder %s18, 1
      %p151 = por %p149, %p150
      %p153 = scmp.ne.s32.totalorder %s138, %s152
      %p154 = scmp.eq.s32.totalorder %s18, 0
      %p155 = por %p153, %p154
      %p156 = scmp.le.s32.totalorder 1, %s12
      %p157 = scmp.lt.s32.totalorder %s12, 3
      %p158 = pnand %p156, %p157
      %p159 = pneg %p158
      // Predicated region
      $region9: #{single_scale_generator.9} parent=5 // pred_check
        _
      $region10: #{single_scale_generator.9} parent=5 // pred_check_branch
        %161 = sbr.rel (%p158) target = $region12
      $region11: #{single_scale_generator.9} parent=5 // pred_region
        %s162 = ssub.s32 %s12, 1
        // Predicated region
        $region13: #{single_scale_generator.9} parent=11 // pred_check
          %p163 = pneg %p59
        $region14: #{single_scale_generator.9} parent=11 // pred_check_branch
          %165 = sbr.rel (%p163) target = $region16
        $region15: #{single_scale_generator.9} parent=11 // pred_region
          _
        $region16: #{single_scale_generator.9} parent=11 // pred_fallthru
          _
        // Predicated region
        $region17: #{single_scale_generator.9} parent=11 // pred_check
          %p166 = pneg %p80
        $region18: #{single_scale_generator.9} parent=11 // pred_check_branch
          %168 = sbr.rel (%p166) target = $region20
        $region19: #{single_scale_generator.9} parent=11 // pred_region
          _
        $region20: #{single_scale_generator.9} parent=11 // pred_fallthru
          _
      $region12: #{single_scale_generator.9} parent=5 // pred_fallthru
        _
      %p169 = scmp.lt.s32.totalorder %s12, 2
      // Predicated region
      $region21: #{single_scale_generator.9} parent=5 // pred_check
        %p170 = pneg %p169
      $region22: #{single_scale_generator.9} parent=5 // pred_check_branch
        %172 = sbr.rel (%p170) target = $region24
      $region23: #{single_scale_generator.9} parent=5 // pred_region
        // Predicated region
        $region25: #{single_scale_generator.9} parent=23 // pred_check
          %p173 = pneg %p32
        $region26: #{single_scale_generator.9} parent=23 // pred_check_branch
          %175 = sbr.rel (%p173) target = $region28
        $region27: #{single_scale_generator.9} parent=23 // pred_region
          %s176 = sand.u32 %s22, 1
          %s177 = sand.u32 %s22, 1
          %s178 = smul.addr %s177, 64
          %s179 = scalar_lea.vmem [#allocation2], %s178
          %s180 = smul.u32 4, %s12
          %s181 = smul.addr %s180, 4
          %s182 = scalar_lea.vmem %s0, %s181
          // Predicated region
          $region29: #{single_scale_generator.9} parent=27 // pred_check
            _
          $region30: #{single_scale_generator.9} parent=27 // pred_check_branch
            %184 = sbr.rel (0) target = $region32
          $region31: #{single_scale_generator.9} parent=27 // pred_region
            // Predicated region
            $region33: #{single_scale_generator.9} parent=31 // pred_check
              _
            $region34: #{single_scale_generator.9} parent=31 // pred_check_branch
              %186 = sbr.rel (0) target = $region36
            $region35: #{single_scale_generator.9} parent=31 // pred_region
              loop: start=0, step=1, limit=1
              $region37: #{single_scale_generator.9} parent=35 // loop_pre_header
                _
              $region38: #{single_scale_generator.9} parent=35 // loop_header
                %s188 = sphi 0, %s192
                %p189 = scmp.ge.s32.totalorder %s188, 1
                %s193 = sphi %s182, %s182
                %s194 = sphi %s179, %s179
              $region39: #{single_scale_generator.9} parent=35 // loop_header_branch
                %191 = sbr.rel (%p189) target = $region43
              $region40: #{single_scale_generator.9} parent=35 // loop_body
                %v195 = vld [vmem:[%s193] sm:$0xff]
                %196 = vst [vmem:[%s194] sm:$0xff] %v195
                %v197 = vld [vmem:[%s193 + $0x8] sm:$0xff]
                %198 = vst [vmem:[%s194 + $0x8] sm:$0xff] %v197
                %v199 = vld [vmem:[%s193 + $0x20] sm:$0xff]
                %200 = vst [vmem:[%s194 + $0x10] sm:$0xff] %v199
                %v201 = vld [vmem:[%s193 + $0x28] sm:$0xff]
                %202 = vst [vmem:[%s194 + $0x18] sm:$0xff] %v201
                %v203 = vld [vmem:[%s193 + $0x40] sm:$0xff]
                %204 = vst [vmem:[%s194 + $0x20] sm:$0xff] %v203
                %v205 = vld [vmem:[%s193 + $0x48] sm:$0xff]
                %206 = vst [vmem:[%s194 + $0x28] sm:$0xff] %v205
                %v207 = vld [vmem:[%s193 + $0x60] sm:$0xff]
                %208 = vst [vmem:[%s194 + $0x30] sm:$0xff] %v207
                %v209 = vld [vmem:[%s193 + $0x68] sm:$0xff]
                %210 = vst [vmem:[%s194 + $0x38] sm:$0xff] %v209
              $region41: #{single_scale_generator.9} parent=35 // loop_footer
                %s192 = sadd.s32 1, %s188
              $region42: #{single_scale_generator.9} parent=35 // loop_footer_branch
                %187 = sbr.rel target = $region38
              $region43: #{single_scale_generator.9} parent=35 // loop_exit
                _
            $region36: #{single_scale_generator.9} parent=31 // pred_fallthru
              _
            // Predicated region
            $region44: #{single_scale_generator.9} parent=31 // pred_check
              _
            $region45: #{single_scale_generator.9} parent=31 // pred_check_branch
              %212 = sbr.rel target = $region47
            $region46: #{single_scale_generator.9} parent=31 // pred_region
              _
            $region47: #{single_scale_generator.9} parent=31 // pred_fallthru
              _
          $region32: #{single_scale_generator.9} parent=27 // pred_fallthru
            _
          %213 = vnop
        $region28: #{single_scale_generator.9} parent=23 // pred_fallthru
          _
      $region24: #{single_scale_generator.9} parent=5 // pred_fallthru
        _
      %p214 = scmp.le.s32.totalorder 1, %s12
      %p215 = scmp.lt.s32.totalorder %s12, 3
      %p216 = pnand %p214, %p215
      %p217 = pneg %p216
      // Predicated region
      $region48: #{single_scale_generator.9} parent=5 // pred_check
        _
      $region49: #{single_scale_generator.9} parent=5 // pred_check_branch
        %219 = sbr.rel (%p216) target = $region51
      $region50: #{single_scale_generator.9} parent=5 // pred_region
        %s220 = ssub.s32 %s12, 1
        %s221 = sand.u32 %s25, 1
        %s222 = sand.u32 %s25, 1
        %s223 = smul.addr %s222, 64
        %s224 = scalar_lea.vmem [#allocation2], %s223
        // Predicated region
        $region52: #{single_scale_generator.9} parent=50 // pred_check
          %p225 = pneg %p38
        $region53: #{single_scale_generator.9} parent=50 // pred_check_branch
          %227 = sbr.rel (%p225) target = $region55
        $region54: #{single_scale_generator.9} parent=50 // pred_region
          _
        $region55: #{single_scale_generator.9} parent=50 // pred_fallthru
          _
        %s228 = sand.u32 %s25, 1
        %s229 = sand.u32 %s25, 1
        %s230 = smul.addr %s229, 64
        %s231 = scalar_lea.vmem [#allocation2], %s230
        %p232 = pneg %p38
        %p233 = pneg %p35
        %p234 = pneg %p59
        %p235 = pneg %p56
        %p236 = pneg %p80
        %p237 = pneg %p77
        %p238 = pneg %p106
        %p239 = pneg %p103
        %s240 = sand.u32 %s93, 1
        %s241 = sand.u32 %s93, 1
        %s242 = smul.addr %s241, 128
        %s243 = scalar_lea.vmem [#allocation3], %s242
        %p244 = pneg %p127
        %p245 = pneg %p124
        %p246 = pneg %p148
        %p247 = pneg %p145
        %s248 = smul.u32 4, %s17
        %s249 = smul.u32 4, %s17
        %p251 = scmp.eq.s32.totalorder %s17, 0
        // Predicated region
        $region56: #{single_scale_generator.9} parent=50 // pred_check
          %p252 = pneg %p251
        $region57: #{single_scale_generator.9} parent=50 // pred_check_branch
          %254 = sbr.rel (%p252) target = $region59
        $region58: #{single_scale_generator.9} parent=50 // pred_region
          %vm255 = vcmask 7168
          %256 = vst.msk [vmem:[%s4] sm:$0xff] %vm255, 0.0
          %257 = vst.msk [vmem:[%s4 + $0x8] sm:$0xff] %vm255, 0.0
          %258 = vst.msk [vmem:[%s4 + $0x10] sm:$0xff] %vm255, 0.0
          %259 = vst.msk [vmem:[%s4 + $0x18] sm:$0xff] %vm255, 0.0
          %260 = vst.msk [vmem:[%s5] sm:$0xff] %vm255, 0.0
          %261 = vst.msk [vmem:[%s5 + $0x8] sm:$0xff] %vm255, 0.0
          %262 = vst.msk [vmem:[%s5 + $0x10] sm:$0xff] %vm255, 0.0
          %263 = vst.msk [vmem:[%s5 + $0x18] sm:$0xff] %vm255, 0.0
        $region59: #{single_scale_generator.9} parent=50 // pred_fallthru
          _
        %v264 = vld [vmem:[%s1] sm:$0xf]
        %v265 = vld [vmem:[%s1 + $0x4] sm:$0xf]
        %v266 = vld [vmem:[%s1 + $0x8] sm:$0xf]
        %v267 = vld [vmem:[%s1 + $0xc] sm:$0xf]
        %v268 = vld [vmem:[%s224] sm:$0xff]
        %v269 = vld [vmem:[%s224 + $0x8] sm:$0xff]
        %v270 = vld [vmem:[%s224 + $0x10] sm:$0xff]
        %v271 = vld [vmem:[%s224 + $0x18] sm:$0xff]
        %v272 = vld [vmem:[%s224 + $0x20] sm:$0xff]
        %v273 = vld [vmem:[%s224 + $0x28] sm:$0xff]
        %v274 = vld [vmem:[%s224 + $0x30] sm:$0x33]
        %v275 = vld [vmem:[%s224 + $0x38] sm:$0x33]
        %v276 = vld [vmem:[%s2] sm:$0xff]
        %v277 = vld [vmem:[%s2 + $0x8] sm:$0xff]
        %v278 = vld [vmem:[%s2 + $0x10] sm:$0xff]
        %v279 = vld [vmem:[%s2 + $0x18] sm:$0xff]
        %281 = vset.pattern.permute.xlu0 0
        %282 = vperm.xlu0 %281, %v276
        %v283 = vpop.permute.xlu0 %282
        %286 = vset.pattern.permute.xlu0 0
        %287 = vperm.xlu0 %286, %v277
        %v288 = vpop.permute.xlu0 %287
        %291 = vset.pattern.permute.xlu0 0
        %292 = vperm.xlu0 %291, %v278
        %v293 = vpop.permute.xlu0 %292
        %296 = vset.pattern.permute.xlu0 0
        %297 = vperm.xlu0 %296, %v279
        %v298 = vpop.permute.xlu0 %297
        %v304 = vunpack.c.l.b16 %v264
        %v305 = vunpack.c.l.b16 %v265
        %v306 = vunpack.c.l.b16 %v266
        %v307 = vunpack.c.l.b16 %v267
        %v308 = vpack.c.b16 %v305, %v304
        %v309 = vpack.c.b16 %v307, %v306
        %v318 = vunpack.c.l.b16 %v268
        %v319 = vunpack.c.h.b16 %v268
        %v320 = vunpack.c.l.b16 %v269
        %v321 = vunpack.c.h.b16 %v269
        %v322 = vunpack.c.l.b16 %v270
        %v323 = vunpack.c.h.b16 %v270
        %v324 = vunpack.c.l.b16 %v271
        %v325 = vunpack.c.h.b16 %v271
        %v326 = vunpack.c.l.b16 %v272
        %v327 = vunpack.c.h.b16 %v272
        %v328 = vunpack.c.l.b16 %v273
        %v329 = vunpack.c.h.b16 %v273
        %v330 = vunpack.c.l.b16 %v274
        %v331 = vunpack.c.h.b16 %v274
        %v332 = vunpack.c.l.b16 %v275
        %v333 = vunpack.c.h.b16 %v275
        %v334 = vpack.c.b16 %v322, %v318
        %v335 = vpack.c.b16 %v323, %v319
        %v336 = vpack.c.b16 %v324, %v320
        %v337 = vpack.c.b16 %v325, %v321
        %v338 = vpack.c.b16 %v330, %v326
        %v339 = vpack.c.b16 %v331, %v327
        %v340 = vpack.c.b16 %v332, %v328
        %v341 = vpack.c.b16 %v333, %v329
        %vm346 = vcmask 220160
        %v348 = vsel %vm346, %v308, 0
        %v351 = vsel %vm346, %v309, 0
        %vm353 = vcmask 1044480
        %vm354 = vcmask 1045504
        %v355 = vsel %vm353, 4294967295, 65535
        %v356 = vsel %vm354, %v355, 0
        %v358 = vand.u32 %v338, %v356
        %v361 = vand.u32 %v339, %v356
        %v364 = vand.u32 %v340, %v356
        %v367 = vand.u32 %v341, %v356
        %369 = vmatprep.subr.bf16.mxu0 %v335
        %370 = vmatpush1.bf16.msra.mxu0 %v334
        %371 = vmatprep.subr.bf16.mxu0 %v361
        %372 = vmatpush1.bf16.msra.mxu0 %v358
        %373 = vmatprep.subr.bf16.mxu0 0
        %374 = vmatpush1.bf16.msra.mxu0 0
        %375 = vmatprep.subr.bf16.mxu0 0
        %376 = vmatpush1.bf16.msra.mxu0 0
        %377 = vmatprep.subr.bf16.mxu0 0
        %378 = vmatpush1.bf16.msra.mxu0 0
        %379 = vmatprep.subr.bf16.mxu0 0
        %380 = vmatpush1.bf16.msra.mxu0 0
        %381 = vmatprep.subr.bf16.mxu0 0
        %382 = vmatpush1.bf16.msra.mxu0 0
        %383 = vmatprep.subr.bf16.mxu0 0
        %384 = vmatpush1.bf16.msra.mxu0 0
        %385 = vmatprep.subr.bf16.mxu0 0
        %386 = vmatpush1.bf16.msra.mxu0 0
        %387 = vmatprep.subr.bf16.mxu0 0
        %388 = vmatpush1.bf16.msra.mxu0 0
        %389 = vmatprep.subr.bf16.mxu0 0
        %390 = vmatpush1.bf16.msra.mxu0 0
        %391 = vmatprep.subr.bf16.mxu0 0
        %392 = vmatpush1.bf16.msra.mxu0 0
        %393 = vmatprep.subr.bf16.mxu0 0
        %394 = vmatpush1.bf16.msra.mxu0 0
        %395 = vmatprep.subr.bf16.mxu0 0
        %396 = vmatpush1.bf16.msra.mxu0 0
        %397 = vmatprep.subr.bf16.mxu0 0
        %398 = vmatpush1.bf16.msra.mxu0 0
        %399 = vmatprep.subr.bf16.mxu0 0
        %400 = vmatpush1.bf16.msra.mxu0 0
        %401 = vmatprep.mubr.bf16.mxu0 0
        %402 = vmatmul.mubr.bf16.gmra.mrb[0].mxu0 %v348
        %v403 = vpop.f32.mrb[0].mxu0
        %v404 = vadd.f32 %v283, %v403
        %v405 = vpop.f32.mrb[0].mxu0
        %v406 = vadd.f32 %v283, %v405
        %v407 = vpop.f32.mrb[0].mxu0
        %v408 = vadd.f32 %v288, %v407
        %v409 = vpop.f32.mrb[0].mxu0
        %v410 = vadd.f32 %v288, %v409
        %411 = vmatprep.mubr.bf16.mxu0 0
        %412 = vmatmul.mubr.bf16.gmra.mrb[0].mxu0 %v351
        %v413 = vpop.f32.mrb[0].mxu0
        %v414 = vadd.f32 %v293, %v413
        %v415 = vpop.f32.mrb[0].mxu0
        %v416 = vadd.f32 %v293, %v415
        %v417 = vpop.f32.mrb[0].mxu0
        %v418 = vadd.f32 %v298, %v417
        %v419 = vpop.f32.mrb[0].mxu0
        %v420 = vadd.f32 %v298, %v419
        %421 = vdwg.mxu0
        %422 = vmatprep.subr.bf16.mxu0 %v337
        %423 = vmatpush1.bf16.msra.mxu0 %v336
        %424 = vmatprep.subr.bf16.mxu0 %v367
        %425 = vmatpush1.bf16.msra.mxu0 %v364
        %426 = vmatprep.subr.bf16.mxu0 0
        %427 = vmatpush1.bf16.msra.mxu0 0
        %428 = vmatprep.subr.bf16.mxu0 0
        %429 = vmatpush1.bf16.msra.mxu0 0
        %430 = vmatprep.subr.bf16.mxu0 0
        %431 = vmatpush1.bf16.msra.mxu0 0
        %432 = vmatprep.subr.bf16.mxu0 0
        %433 = vmatpush1.bf16.msra.mxu0 0
        %434 = vmatprep.subr.bf16.mxu0 0
        %435 = vmatpush1.bf16.msra.mxu0 0
        %436 = vmatprep.subr.bf16.mxu0 0
        %437 = vmatpush1.bf16.msra.mxu0 0
        %438 = vmatprep.subr.bf16.mxu0 0
        %439 = vmatpush1.bf16.msra.mxu0 0
        %440 = vmatprep.subr.bf16.mxu0 0
        %441 = vmatpush1.bf16.msra.mxu0 0
        %442 = vmatprep.subr.bf16.mxu0 0
        %443 = vmatpush1.bf16.msra.mxu0 0
        %444 = vmatprep.subr.bf16.mxu0 0
        %445 = vmatpush1.bf16.msra.mxu0 0
        %446 = vmatprep.subr.bf16.mxu0 0
        %447 = vmatpush1.bf16.msra.mxu0 0
        %448 = vmatprep.subr.bf16.mxu0 0
        %449 = vmatpush1.bf16.msra.mxu0 0
        %450 = vmatprep.subr.bf16.mxu0 0
        %451 = vmatpush1.bf16.msra.mxu0 0
        %452 = vmatprep.subr.bf16.mxu0 0
        %453 = vmatpush1.bf16.msra.mxu0 0
        %454 = vmatprep.mubr.bf16.mxu0 0
        %455 = vmatmul.mubr.bf16.gmra.mrb[0].mxu0 %v348
        %v456 = vpop.f32.mrb[0].mxu0
        %v457 = vadd.f32 %v283, %v456
        %v458 = vpop.f32.mrb[0].mxu0
        %v459 = vadd.f32 %v283, %v458
        %v460 = vpop.f32.mrb[0].mxu0
        %v461 = vadd.f32 %v288, %v460
        %v462 = vpop.f32.mrb[0].mxu0
        %v463 = vadd.f32 %v288, %v462
        %464 = vmatprep.mubr.bf16.mxu0 0
        %465 = vmatmul.mubr.bf16.gmra.mrb[0].mxu0 %v351
        %v466 = vpop.f32.mrb[0].mxu0
        %v467 = vadd.f32 %v293, %v466
        %v468 = vpop.f32.mrb[0].mxu0
        %v469 = vadd.f32 %v293, %v468
        %v470 = vpop.f32.mrb[0].mxu0
        %v471 = vadd.f32 %v298, %v470
        %v472 = vpop.f32.mrb[0].mxu0
        %v473 = vadd.f32 %v298, %v472
        %474 = vdwg.mxu0
        %475 = vst [vmem:[%s243] sm:$0xff] %v404
        %476 = vst [vmem:[%s243 + $0x8] sm:$0xff] %v406
        %477 = vst [vmem:[%s243 + $0x10] sm:$0xff] %v457
        %478 = vst [vmem:[%s243 + $0x18] sm:$0xff] %v459
        %479 = vst [vmem:[%s243 + $0x20] sm:$0xff] %v408
        %480 = vst [vmem:[%s243 + $0x28] sm:$0xff] %v410
        %481 = vst [vmem:[%s243 + $0x30] sm:$0xff] %v461
        %482 = vst [vmem:[%s243 + $0x38] sm:$0xff] %v463
        %483 = vst [vmem:[%s243 + $0x40] sm:$0xff] %v414
        %484 = vst [vmem:[%s243 + $0x48] sm:$0xff] %v416
        %485 = vst [vmem:[%s243 + $0x50] sm:$0xff] %v467
        %486 = vst [vmem:[%s243 + $0x58] sm:$0xff] %v469
        %487 = vst [vmem:[%s243 + $0x60] sm:$0xff] %v418
        %488 = vst [vmem:[%s243 + $0x68] sm:$0xff] %v420
        %489 = vst [vmem:[%s243 + $0x70] sm:$0xff] %v471
        %490 = vst [vmem:[%s243 + $0x78] sm:$0xff] %v473
        %v491 = vlaneseq
        %v492 = vand.u32 %v491, 127
        %v493 = vadd.s32 %v492, 128
        %v494 = vadd.s32 %v492, 256
        %v495 = vadd.s32 %v492, 384
        %s496 = smul.u32 %s17, 512
        %v497 = vstv %s496
        %v498 = vadd.s32 %v492, %v497
        %v499 = vadd.s32 %v493, %v497
        %v500 = vadd.s32 %v494, %v497
        %v501 = vadd.s32 %v495, %v497
        %vm502 = vcmp.lt.s32.totalorder %v498, 800
        %vm503 = vcmp.lt.s32.totalorder %v499, 800
        %vm504 = vcmp.lt.s32.totalorder %v500, 800
        %vm505 = vcmp.lt.s32.totalorder %v501, 800
        %v506 = vsel %vm502, 1, 0
        %v507 = vsel %vm503, 1, 0
        %v508 = vsel %vm504, 1, 0
        %v509 = vsel %vm505, 1, 0
        %vm510 = vcmp.eq.s32.totalorder %v506, 1
        %vm511 = vcmp.eq.s32.totalorder %v507, 1
        %vm512 = vcmp.eq.s32.totalorder %v508, 1
        %vm513 = vcmp.eq.s32.totalorder %v509, 1
        %v514 = vsel %vm510, %v404, 0.0
        %v515 = vsel %vm511, %v406, 0.0
        %v516 = vsel %vm512, %v457, 0.0
        %v517 = vsel %vm513, %v459, 0.0
        %v518 = vsel %vm510, %v408, 0.0
        %v519 = vsel %vm511, %v410, 0.0
        %v520 = vsel %vm512, %v461, 0.0
        %v521 = vsel %vm513, %v463, 0.0
        %v522 = vsel %vm510, %v414, 0.0
        %v523 = vsel %vm511, %v416, 0.0
        %v524 = vsel %vm512, %v467, 0.0
        %v525 = vsel %vm513, %v469, 0.0
        %v526 = vsel %vm510, %v418, 0.0
        %v527 = vsel %vm511, %v420, 0.0
        %v528 = vsel %vm512, %v471, 0.0
        %v529 = vsel %vm513, %v473, 0.0
        %v530 = vld [vmem:[%s4] sm:$0xff]
        %v531 = vld [vmem:[%s4 + $0x8] sm:$0xff]
        %v532 = vld [vmem:[%s4 + $0x10] sm:$0xff]
        %v533 = vld [vmem:[%s4 + $0x18] sm:$0xff]
        %v534 = vadd.f32 %v514, %v515
        %v535 = vadd.f32 %v534, %v516
        %v536 = vadd.f32 %v535, %v517
        %537 = vadd.xlane.f32.xlu0 %v536
        %v538 = vpop.xlane.xlu0 %537
        %v539 = vadd.f32 %v518, %v519
        %v540 = vadd.f32 %v539, %v520
        %v541 = vadd.f32 %v540, %v521
        %542 = vadd.xlane.f32.xlu0 %v541
        %v543 = vpop.xlane.xlu0 %542
        %v544 = vadd.f32 %v522, %v523
        %v545 = vadd.f32 %v544, %v524
        %v546 = vadd.f32 %v545, %v525
        %547 = vadd.xlane.f32.xlu0 %v546
        %v548 = vpop.xlane.xlu0 %547
        %v549 = vadd.f32 %v526, %v527
        %v550 = vadd.f32 %v549, %v528
        %v551 = vadd.f32 %v550, %v529
        %552 = vadd.xlane.f32.xlu0 %v551
        %v553 = vpop.xlane.xlu0 %552
        %v554 = vadd.f32 %v530, %v538
        %v555 = vadd.f32 %v531, %v543
        %v556 = vadd.f32 %v532, %v548
        %v557 = vadd.f32 %v533, %v553
        %vm558 = vcmask 7168
        %559 = vst.msk [vmem:[%s4] sm:$0xff] %vm558, %v554
        %560 = vst.msk [vmem:[%s4 + $0x8] sm:$0xff] %vm558, %v555
        %561 = vst.msk [vmem:[%s4 + $0x10] sm:$0xff] %vm558, %v556
        %562 = vst.msk [vmem:[%s4 + $0x18] sm:$0xff] %vm558, %v557
        %v563 = vld [vmem:[%s5] sm:$0xff]
        %v564 = vld [vmem:[%s5 + $0x8] sm:$0xff]
        %v565 = vld [vmem:[%s5 + $0x10] sm:$0xff]
        %v566 = vld [vmem:[%s5 + $0x18] sm:$0xff]
        %v567 = vmul.f32 %v514, %v514
        %v568 = vmul.f32 %v515, %v515
        %v569 = vmul.f32 %v516, %v516
        %v570 = vmul.f32 %v517, %v517
        %v571 = vmul.f32 %v518, %v518
        %v572 = vmul.f32 %v519, %v519
        %v573 = vmul.f32 %v520, %v520
        %v574 = vmul.f32 %v521, %v521
        %v575 = vmul.f32 %v522, %v522
        %v576 = vmul.f32 %v523, %v523
        %v577 = vmul.f32 %v524, %v524
        %v578 = vmul.f32 %v525, %v525
        %v579 = vmul.f32 %v526, %v526
        %v580 = vmul.f32 %v527, %v527
        %v581 = vmul.f32 %v528, %v528
        %v582 = vmul.f32 %v529, %v529
        %v583 = vadd.f32 %v567, %v568
        %v584 = vadd.f32 %v583, %v569
        %v585 = vadd.f32 %v584, %v570
        %586 = vadd.xlane.f32.xlu0 %v585
        %v587 = vpop.xlane.xlu0 %586
        %v588 = vadd.f32 %v571, %v572
        %v589 = vadd.f32 %v588, %v573
        %v590 = vadd.f32 %v589, %v574
        %591 = vadd.xlane.f32.xlu0 %v590
        %v592 = vpop.xlane.xlu0 %591
        %v593 = vadd.f32 %v575, %v576
        %v594 = vadd.f32 %v593, %v577
        %v595 = vadd.f32 %v594, %v578
        %596 = vadd.xlane.f32.xlu0 %v595
        %v597 = vpop.xlane.xlu0 %596
        %v598 = vadd.f32 %v579, %v580
        %v599 = vadd.f32 %v598, %v581
        %v600 = vadd.f32 %v599, %v582
        %601 = vadd.xlane.f32.xlu0 %v600
        %v602 = vpop.xlane.xlu0 %601
        %v603 = vadd.f32 %v563, %v587
        %v604 = vadd.f32 %v564, %v592
        %v605 = vadd.f32 %v565, %v597
        %v606 = vadd.f32 %v566, %v602
        %607 = vst.msk [vmem:[%s5] sm:$0xff] %vm558, %v603
        %608 = vst.msk [vmem:[%s5 + $0x8] sm:$0xff] %vm558, %v604
        %609 = vst.msk [vmem:[%s5 + $0x10] sm:$0xff] %vm558, %v605
        %610 = vst.msk [vmem:[%s5 + $0x18] sm:$0xff] %vm558, %v606
        %s611 = sand.u32 %s93, 1
        %s612 = sand.u32 %s93, 1
        %s613 = smul.addr %s612, 128
        %s614 = scalar_lea.vmem [#allocation3], %s613
        // Predicated region
        $region60: #{single_scale_generator.9} parent=50 // pred_check
          %p615 = pneg %p103
        $region61: #{single_scale_generator.9} parent=50 // pred_check_branch
          %617 = sbr.rel (%p615) target = $region63
        $region62: #{single_scale_generator.9} parent=50 // pred_region
          %s618 = smul.u32 4, %s17
          %s619 = smul.addr %s618, 8
          %s620 = scalar_lea.vmem %s3, %s619
          // Predicated region
          $region64: #{single_scale_generator.9} parent=62 // pred_check
            _
          $region65: #{single_scale_generator.9} parent=62 // pred_check_branch
            %622 = sbr.rel (0) target = $region67
          $region66: #{single_scale_generator.9} parent=62 // pred_region
            // Predicated region
            $region68: #{single_scale_generator.9} parent=66 // pred_check
              _
            $region69: #{single_scale_generator.9} parent=66 // pred_check_branch
              %624 = sbr.rel (0) target = $region71
            $region70: #{single_scale_generator.9} parent=66 // pred_region
              loop: start=0, step=1, limit=1
              $region72: #{single_scale_generator.9} parent=70 // loop_pre_header
                _
              $region73: #{single_scale_generator.9} parent=70 // loop_header
                %s626 = sphi 0, %s630
                %p627 = scmp.ge.s32.totalorder %s626, 1
                %s631 = sphi %s614, %s614
                %s632 = sphi %s620, %s620
              $region74: #{single_scale_generator.9} parent=70 // loop_header_branch
                %629 = sbr.rel (%p627) target = $region78
              $region75: #{single_scale_generator.9} parent=70 // loop_body
                %v633 = vld [vmem:[%s631] sm:$0xff]
                %634 = vst [vmem:[%s632] sm:$0xff] %v633
                %v635 = vld [vmem:[%s631 + $0x8] sm:$0xff]
                %636 = vst [vmem:[%s632 + $0x8] sm:$0xff] %v635
                %v637 = vld [vmem:[%s631 + $0x10] sm:$0xff]
                %638 = vst [vmem:[%s632 + $0x10] sm:$0xff] %v637
                %v639 = vld [vmem:[%s631 + $0x18] sm:$0xff]
                %640 = vst [vmem:[%s632 + $0x18] sm:$0xff] %v639
                %v641 = vld [vmem:[%s631 + $0x20] sm:$0xff]
                %642 = vst [vmem:[%s632 + $0x40] sm:$0xff] %v641
                %v643 = vld [vmem:[%s631 + $0x28] sm:$0xff]
                %644 = vst [vmem:[%s632 + $0x48] sm:$0xff] %v643
                %v645 = vld [vmem:[%s631 + $0x30] sm:$0xff]
                %646 = vst [vmem:[%s632 + $0x50] sm:$0xff] %v645
                %v647 = vld [vmem:[%s631 + $0x38] sm:$0xff]
                %648 = vst [vmem:[%s632 + $0x58] sm:$0xff] %v647
                %v649 = vld [vmem:[%s631 + $0x40] sm:$0xff]
                %650 = vst [vmem:[%s632 + $0x80] sm:$0xff] %v649
                %v651 = vld [vmem:[%s631 + $0x48] sm:$0xff]
                %652 = vst [vmem:[%s632 + $0x88] sm:$0xff] %v651
                %v653 = vld [vmem:[%s631 + $0x50] sm:$0xff]
                %654 = vst [vmem:[%s632 + $0x90] sm:$0xff] %v653
                %v655 = vld [vmem:[%s631 + $0x58] sm:$0xff]
                %656 = vst [vmem:[%s632 + $0x98] sm:$0xff] %v655
                %v657 = vld [vmem:[%s631 + $0x60] sm:$0xff]
                %658 = vst [vmem:[%s632 + $0xc0] sm:$0xff] %v657
                %v659 = vld [vmem:[%s631 + $0x68] sm:$0xff]
                %660 = vst [vmem:[%s632 + $0xc8] sm:$0xff] %v659
                %v661 = vld [vmem:[%s631 + $0x70] sm:$0xff]
                %662 = vst [vmem:[%s632 + $0xd0] sm:$0xff] %v661
                %v663 = vld [vmem:[%s631 + $0x78] sm:$0xff]
                %664 = vst [vmem:[%s632 + $0xd8] sm:$0xff] %v663
              $region76: #{single_scale_generator.9} parent=70 // loop_footer
                %s630 = sadd.s32 1, %s626
              $region77: #{single_scale_generator.9} parent=70 // loop_footer_branch
                %625 = sbr.rel target = $region73
              $region78: #{single_scale_generator.9} parent=70 // loop_exit
                _
            $region71: #{single_scale_generator.9} parent=66 // pred_fallthru
              _
            // Predicated region
            $region79: #{single_scale_generator.9} parent=66 // pred_check
              _
            $region80: #{single_scale_generator.9} parent=66 // pred_check_branch
              %666 = sbr.rel target = $region82
            $region81: #{single_scale_generator.9} parent=66 // pred_region
              _
            $region82: #{single_scale_generator.9} parent=66 // pred_fallthru
              _
          $region67: #{single_scale_generator.9} parent=62 // pred_fallthru
            _
          %667 = vnop
        $region63: #{single_scale_generator.9} parent=50 // pred_fallthru
          _
        // Predicated region
        $region83: #{single_scale_generator.9} parent=50 // pred_check
          %p668 = pneg %p124
        $region84: #{single_scale_generator.9} parent=50 // pred_check_branch
          %670 = sbr.rel (%p668) target = $region86
        $region85: #{single_scale_generator.9} parent=50 // pred_region
          _
        $region86: #{single_scale_generator.9} parent=50 // pred_fallthru
          _
        // Predicated region
        $region87: #{single_scale_generator.9} parent=50 // pred_check
          %p671 = pneg %p145
        $region88: #{single_scale_generator.9} parent=50 // pred_check_branch
          %673 = sbr.rel (%p671) target = $region90
        $region89: #{single_scale_generator.9} parent=50 // pred_region
          _
        $region90: #{single_scale_generator.9} parent=50 // pred_fallthru
          _
        // Predicated region
        $region91: #{single_scale_generator.9} parent=50 // pred_check
          %p674 = pneg %p124
        $region92: #{single_scale_generator.9} parent=50 // pred_check_branch
          %676 = sbr.rel (%p674) target = $region94
        $region93: #{single_scale_generator.9} parent=50 // pred_region
          _
        $region94: #{single_scale_generator.9} parent=50 // pred_fallthru
          _
        // Predicated region
        $region95: #{single_scale_generator.9} parent=50 // pred_check
          %p677 = pneg %p145
        $region96: #{single_scale_generator.9} parent=50 // pred_check_branch
          %679 = sbr.rel (%p677) target = $region98
        $region97: #{single_scale_generator.9} parent=50 // pred_region
          _
        $region98: #{single_scale_generator.9} parent=50 // pred_fallthru
          _
      $region51: #{single_scale_generator.9} parent=5 // pred_fallthru
        _
      %p680 = scmp.le.s32.totalorder 2, %s12
      // Predicated region
      $region99: #{single_scale_generator.9} parent=5 // pred_check
        %p681 = pneg %p680
      $region100: #{single_scale_generator.9} parent=5 // pred_check_branch
        %683 = sbr.rel (%p681) target = $region102
      $region101: #{single_scale_generator.9} parent=5 // pred_region
        %s684 = ssub.s32 %s12, 2
        // Predicated region
        $region103: #{single_scale_generator.9} parent=101 // pred_check
          %p685 = pneg %p109
        $region104: #{single_scale_generator.9} parent=101 // pred_check_branch
          %687 = sbr.rel (%p685) target = $region106
        $region105: #{single_scale_generator.9} parent=101 // pred_region
          %s688 = sand.u32 %s94, 1
          %s689 = sand.u32 %s94, 1
          %s690 = smul.addr %s689, 128
          %s691 = scalar_lea.vmem [#allocation3], %s690
        $region106: #{single_scale_generator.9} parent=101 // pred_fallthru
          _
      $region102: #{single_scale_generator.9} parent=5 // pred_fallthru
        _
    $region6: #{single_scale_generator.9} parent=1 // loop_footer
      %s16 = sadd.s32 1, %s12
    $region7: #{single_scale_generator.9} parent=1 // loop_footer_branch
      %11 = sbr.rel target = $region3
    $region8: #{single_scale_generator.9} parent=1 // loop_exit
      _

// kernel: single_scale_generator.11
$region0: #{single_scale_generator.11}
  #allocation0 [shape = 'u32[]', space=smem, size = 0x4, offset = 0x4, fixed_abs, tag = 'smem constant byte address 0x4 - core index']
  #allocation1 [shape = 'u32[144,128]{1,0:T(1,128)}', space=vmem, size = 0x12000, scoped, tag = 'internal scratch']
  %s0 = inlined_call_operand.vmem [shape: bf16[288,1024], index: 0, kind: input, shape index: {}]
  %s1 = inlined_call_operand.vmem [shape: bf16[32,288], index: 1, kind: input, shape index: {}]
  %s2 = inlined_call_operand.vmem [shape: f32[32,1], index: 2, kind: input, shape index: {}]
  %s3 = inlined_call_operand.vmem [shape: f32[32,1024], index: 3, kind: output, shape index: {0}]
  %s4 = inlined_call_operand.vmem [shape: f32[32,1], index: 4, kind: output, shape index: {1}]
  %s5 = inlined_call_operand.vmem [shape: f32[32,1], index: 5, kind: output, shape index: {2}]
  %6 = xla_tuple %s3, %s4, %s5
  %s7 = sld [smem:[#allocation0]]
  $region107: #{single_scale_generator.11} parent=0
    _
  %s9 = ssub.s32 1, %s7
  %s10 = scalar_select 0, %s9, %s7
  $region1: #{single_scale_generator.11} parent=0
    #allocation2 [shape = 'u8[589824]{0}', space=vmem, size = 0x90000, scoped, tag = 'input window, operand 0']
    #allocation3 [shape = 'u8[131072]{0}', space=vmem, size = 0x20000, scoped, tag = 'output window, operand 0']
    loop: start=0, step=1, limit=4
    $region2: #{single_scale_generator.11} parent=1 // loop_pre_header
      _
    $region3: #{single_scale_generator.11} parent=1 // loop_header
      %s12 = sphi 0, %s16
      %p13 = scmp.ge.s32.totalorder %s12, 4
      %s22 = sphi 0, %s24
      %s25 = sphi 0, %s22
      %s26 = sphi 0, %s25
      %s42 = sphi 0, %s26
      %s46 = sphi 0, %s46
      %s48 = sphi 0, %s46
      %s49 = sphi 0, %s48
      %s63 = sphi 0, %s49
      %s67 = sphi 0, %s67
      %s69 = sphi 0, %s67
      %s70 = sphi 0, %s69
      %s84 = sphi 0, %s70
      %s90 = sphi 0, %s92
      %s93 = sphi 0, %s90
      %s94 = sphi 0, %s93
      %s110 = sphi 0, %s94
      %s114 = sphi 0, %s114
      %s116 = sphi 0, %s114
      %s117 = sphi 0, %s116
      %s131 = sphi 0, %s117
      %s135 = sphi 0, %s135
      %s137 = sphi 0, %s135
      %s138 = sphi 0, %s137
      %s152 = sphi 0, %s138
    $region4: #{single_scale_generator.11} parent=1 // loop_header_branch
      %15 = sbr.rel (%p13) target = $region8
    $region5: #{single_scale_generator.11} parent=1 // loop_body
      %s17 = ssub.s32 %s12, 1
      %s18 = ssub.s32 %s12, 2
      %s19 = sadd.s32 %s12, 1
      %s20 = ssub.s32 %s12, %s19
      %p21 = scmp.eq.s32.totalorder %s20, 0
      %s23 = sadd.s32 %s22, 1
      %s24 = scalar_select %p21, %s22, %s23
      %p27 = pneg %p21
      %p28 = scmp.eq.s32.totalorder %s12, 1
      %p29 = por %p27, %p28
      %p30 = scmp.ne.s32.totalorder %s22, %s25
      %p31 = scmp.eq.s32.totalorder %s12, 0
      %p32 = por %p30, %p31
      %p33 = scmp.ne.s32.totalorder %s22, %s25
      %p34 = scmp.eq.s32.totalorder %s17, 1
      %p35 = por %p33, %p34
      %p36 = scmp.ne.s32.totalorder %s25, %s26
      %p37 = scmp.eq.s32.totalorder %s17, 0
      %p38 = por %p36, %p37
      %p39 = scmp.ne.s32.totalorder %s25, %s26
      %p40 = scmp.eq.s32.totalorder %s18, 1
      %p41 = por %p39, %p40
      %p43 = scmp.ne.s32.totalorder %s26, %s42
      %p44 = scmp.eq.s32.totalorder %s18, 0
      %p45 = por %p43, %p44
      %s47 = sadd.s32 %s46, 1
      %p50 = scmp.eq.s32.totalorder %s12, 1
      %p51 = scmp.ne.s32.totalorder %s46, %s48
      %p52 = scmp.eq.s32.totalorder %s12, 0
      %p53 = por %p51, %p52
      %p54 = scmp.ne.s32.totalorder %s46, %s48
      %p55 = scmp.eq.s32.totalorder %s17, 1
      %p56 = por %p54, %p55
      %p57 = scmp.ne.s32.totalorder %s48, %s49
      %p58 = scmp.eq.s32.totalorder %s17, 0
      %p59 = por %p57, %p58
      %p60 = scmp.ne.s32.totalorder %s48, %s49
      %p61 = scmp.eq.s32.totalorder %s18, 1
      %p62 = por %p60, %p61
      %p64 = scmp.ne.s32.totalorder %s49, %s63
      %p65 = scmp.eq.s32.totalorder %s18, 0
      %p66 = por %p64, %p65
      %s68 = sadd.s32 %s67, 1
      %p71 = scmp.eq.s32.totalorder %s12, 1
      %p72 = scmp.ne.s32.totalorder %s67, %s69
      %p73 = scmp.eq.s32.totalorder %s12, 0
      %p74 = por %p72, %p73
      %p75 = scmp.ne.s32.totalorder %s67, %s69
      %p76 = scmp.eq.s32.totalorder %s17, 1
      %p77 = por %p75, %p76
      %p78 = scmp.ne.s32.totalorder %s69, %s70
      %p79 = scmp.eq.s32.totalorder %s17, 0
      %p80 = por %p78, %p79
      %p81 = scmp.ne.s32.totalorder %s69, %s70
      %p82 = scmp.eq.s32.totalorder %s18, 1
      %p83 = por %p81, %p82
      %p85 = scmp.ne.s32.totalorder %s70, %s84
      %p86 = scmp.eq.s32.totalorder %s18, 0
      %p87 = por %p85, %p86
      %s88 = ssub.s32 %s12, %s19
      %p89 = scmp.eq.s32.totalorder %s88, 0
      %s91 = sadd.s32 %s90, 1
      %s92 = scalar_select %p89, %s90, %s91
      %p95 = pneg %p89
      %p96 = scmp.eq.s32.totalorder %s12, 1
      %p97 = por %p95, %p96
      %p98 = scmp.ne.s32.totalorder %s90, %s93
      %p99 = scmp.eq.s32.totalorder %s12, 0
      %p100 = por %p98, %p99
      %p101 = scmp.ne.s32.totalorder %s90, %s93
      %p102 = scmp.eq.s32.totalorder %s17, 1
      %p103 = por %p101, %p102
      %p104 = scmp.ne.s32.totalorder %s93, %s94
      %p105 = scmp.eq.s32.totalorder %s17, 0
      %p106 = por %p104, %p105
      %p107 = scmp.ne.s32.totalorder %s93, %s94
      %p108 = scmp.eq.s32.totalorder %s18, 1
      %p109 = por %p107, %p108
      %p111 = scmp.ne.s32.totalorder %s94, %s110
      %p112 = scmp.eq.s32.totalorder %s18, 0
      %p113 = por %p111, %p112
      %s115 = sadd.s32 %s114, 1
      %p118 = scmp.eq.s32.totalorder %s12, 1
      %p119 = scmp.ne.s32.totalorder %s114, %s116
      %p120 = scmp.eq.s32.totalorder %s12, 0
      %p121 = por %p119, %p120
      %p122 = scmp.ne.s32.totalorder %s114, %s116
      %p123 = scmp.eq.s32.totalorder %s17, 1
      %p124 = por %p122, %p123
      %p125 = scmp.ne.s32.totalorder %s116, %s117
      %p126 = scmp.eq.s32.totalorder %s17, 0
      %p127 = por %p125, %p126
      %p128 = scmp.ne.s32.totalorder %s116, %s117
      %p129 = scmp.eq.s32.totalorder %s18, 1
      %p130 = por %p128, %p129
      %p132 = scmp.ne.s32.totalorder %s117, %s131
      %p133 = scmp.eq.s32.totalorder %s18, 0
      %p134 = por %p132, %p133
      %s136 = sadd.s32 %s135, 1
      %p139 = scmp.eq.s32.totalorder %s12, 1
      %p140 = scmp.ne.s32.totalorder %s135, %s137
      %p141 = scmp.eq.s32.totalorder %s12, 0
      %p142 = por %p140, %p141
      %p143 = scmp.ne.s32.totalorder %s135, %s137
      %p144 = scmp.eq.s32.totalorder %s17, 1
      %p145 = por %p143, %p144
      %p146 = scmp.ne.s32.totalorder %s137, %s138
      %p147 = scmp.eq.s32.totalorder %s17, 0
      %p148 = por %p146, %p147
      %p149 = scmp.ne.s32.totalorder %s137, %s138
      %p150 = scmp.eq.s32.totalorder %s18, 1
      %p151 = por %p149, %p150
      %p153 = scmp.ne.s32.totalorder %s138, %s152
      %p154 = scmp.eq.s32.totalorder %s18, 0
      %p155 = por %p153, %p154
      %p156 = scmp.le.s32.totalorder 1, %s12
      %p157 = scmp.lt.s32.totalorder %s12, 3
      %p158 = pnand %p156, %p157
      %p159 = pneg %p158
      // Predicated region
      $region9: #{single_scale_generator.11} parent=5 // pred_check
        _
      $region10: #{single_scale_generator.11} parent=5 // pred_check_branch
        %161 = sbr.rel (%p158) target = $region12
      $region11: #{single_scale_generator.11} parent=5 // pred_region
        %s162 = ssub.s32 %s12, 1
        // Predicated region
        $region13: #{single_scale_generator.11} parent=11 // pred_check
          %p163 = pneg %p59
        $region14: #{single_scale_generator.11} parent=11 // pred_check_branch
          %165 = sbr.rel (%p163) target = $region16
        $region15: #{single_scale_generator.11} parent=11 // pred_region
          _
        $region16: #{single_scale_generator.11} parent=11 // pred_fallthru
          _
        // Predicated region
        $region17: #{single_scale_generator.11} parent=11 // pred_check
          %p166 = pneg %p80
        $region18: #{single_scale_generator.11} parent=11 // pred_check_branch
          %168 = sbr.rel (%p166) target = $region20
        $region19: #{single_scale_generator.11} parent=11 // pred_region
          _
        $region20: #{single_scale_generator.11} parent=11 // pred_fallthru
          _
      $region12: #{single_scale_generator.11} parent=5 // pred_fallthru
        _
      %p169 = scmp.lt.s32.totalorder %s12, 2
      // Predicated region
      $region21: #{single_scale_generator.11} parent=5 // pred_check
        %p170 = pneg %p169
      $region22: #{single_scale_generator.11} parent=5 // pred_check_branch
        %172 = sbr.rel (%p170) target = $region24
      $region23: #{single_scale_generator.11} parent=5 // pred_region
        // Predicated region
        $region25: #{single_scale_generator.11} parent=23 // pred_check
          %p173 = pneg %p32
        $region26: #{single_scale_generator.11} parent=23 // pred_check_branch
          %175 = sbr.rel (%p173) target = $region28
        $region27: #{single_scale_generator.11} parent=23 // pred_region
          %s176 = sand.u32 %s22, 1
          %s177 = sand.u32 %s22, 1
          %s178 = smul.addr %s177, 576
          %s179 = scalar_lea.vmem [#allocation2], %s178
          %s180 = smul.u32 4, %s12
          %s181 = smul.addr %s180, 4
          %s182 = scalar_lea.vmem %s0, %s181
          // Predicated region
          $region29: #{single_scale_generator.11} parent=27 // pred_check
            _
          $region30: #{single_scale_generator.11} parent=27 // pred_check_branch
            %184 = sbr.rel (0) target = $region32
          $region31: #{single_scale_generator.11} parent=27 // pred_region
            // Predicated region
            $region33: #{single_scale_generator.11} parent=31 // pred_check
              _
            $region34: #{single_scale_generator.11} parent=31 // pred_check_branch
              %186 = sbr.rel (0) target = $region36
            $region35: #{single_scale_generator.11} parent=31 // pred_region
              loop: start=0, step=1, limit=1
              $region37: #{single_scale_generator.11} parent=35 // loop_pre_header
                _
              $region38: #{single_scale_generator.11} parent=35 // loop_header
                %s188 = sphi 0, %s192
                %p189 = scmp.ge.s32.totalorder %s188, 1
                %s193 = sphi %s182, %s182
                %s194 = sphi %s179, %s179
              $region39: #{single_scale_generator.11} parent=35 // loop_header_branch
                %191 = sbr.rel (%p189) target = $region43
              $region40: #{single_scale_generator.11} parent=35 // loop_body
                %v195 = vld [vmem:[%s193] sm:$0xff]
                %196 = vst [vmem:[%s194] sm:$0xff] %v195
                %v197 = vld [vmem:[%s193 + $0x8] sm:$0xff]
                %198 = vst [vmem:[%s194 + $0x8] sm:$0xff] %v197
                %v199 = vld [vmem:[%s193 + $0x20] sm:$0xff]
                %200 = vst [vmem:[%s194 + $0x10] sm:$0xff] %v199
                %v201 = vld [vmem:[%s193 + $0x28] sm:$0xff]
                %202 = vst [vmem:[%s194 + $0x18] sm:$0xff] %v201
                %v203 = vld [vmem:[%s193 + $0x40] sm:$0xff]
                %204 = vst [vmem:[%s194 + $0x20] sm:$0xff] %v203
                %v205 = vld [vmem:[%s193 + $0x48] sm:$0xff]
                %206 = vst [vmem:[%s194 + $0x28] sm:$0xff] %v205
                %v207 = vld [vmem:[%s193 + $0x60] sm:$0xff]
                %208 = vst [vmem:[%s194 + $0x30] sm:$0xff] %v207
                %v209 = vld [vmem:[%s193 + $0x68] sm:$0xff]
                %210 = vst [vmem:[%s194 + $0x38] sm:$0xff] %v209
                %v211 = vld [vmem:[%s193 + $0x80] sm:$0xff]
                %212 = vst [vmem:[%s194 + $0x40] sm:$0xff] %v211
                %v213 = vld [vmem:[%s193 + $0x88] sm:$0xff]
                %214 = vst [vmem:[%s194 + $0x48] sm:$0xff] %v213
                %v215 = vld [vmem:[%s193 + $0xa0] sm:$0xff]
                %216 = vst [vmem:[%s194 + $0x50] sm:$0xff] %v215
                %v217 = vld [vmem:[%s193 + $0xa8] sm:$0xff]
                %218 = vst [vmem:[%s194 + $0x58] sm:$0xff] %v217
                %v219 = vld [vmem:[%s193 + $0xc0] sm:$0xff]
                %220 = vst [vmem:[%s194 + $0x60] sm:$0xff] %v219
                %v221 = vld [vmem:[%s193 + $0xc8] sm:$0xff]
                %222 = vst [vmem:[%s194 + $0x68] sm:$0xff] %v221
                %v223 = vld [vmem:[%s193 + $0xe0] sm:$0xff]
                %224 = vst [vmem:[%s194 + $0x70] sm:$0xff] %v223
                %v225 = vld [vmem:[%s193 + $0xe8] sm:$0xff]
                %226 = vst [vmem:[%s194 + $0x78] sm:$0xff] %v225
                %v227 = vld [vmem:[%s193 + $0x100] sm:$0xff]
                %228 = vst [vmem:[%s194 + $0x80] sm:$0xff] %v227
                %v229 = vld [vmem:[%s193 + $0x108] sm:$0xff]
                %230 = vst [vmem:[%s194 + $0x88] sm:$0xff] %v229
                %v231 = vld [vmem:[%s193 + $0x120] sm:$0xff]
                %232 = vst [vmem:[%s194 + $0x90] sm:$0xff] %v231
                %v233 = vld [vmem:[%s193 + $0x128] sm:$0xff]
                %234 = vst [vmem:[%s194 + $0x98] sm:$0xff] %v233
                %v235 = vld [vmem:[%s193 + $0x140] sm:$0xff]
                %236 = vst [vmem:[%s194 + $0xa0] sm:$0xff] %v235
                %v237 = vld [vmem:[%s193 + $0x148] sm:$0xff]
                %238 = vst [vmem:[%s194 + $0xa8] sm:$0xff] %v237
                %v239 = vld [vmem:[%s193 + $0x160] sm:$0xff]
                %240 = vst [vmem:[%s194 + $0xb0] sm:$0xff] %v239
                %v241 = vld [vmem:[%s193 + $0x168] sm:$0xff]
                %242 = vst [vmem:[%s194 + $0xb8] sm:$0xff] %v241
                %v243 = vld [vmem:[%s193 + $0x180] sm:$0xff]
                %244 = vst [vmem:[%s194 + $0xc0] sm:$0xff] %v243
                %v245 = vld [vmem:[%s193 + $0x188] sm:$0xff]
                %246 = vst [vmem:[%s194 + $0xc8] sm:$0xff] %v245
                %v247 = vld [vmem:[%s193 + $0x1a0] sm:$0xff]
                %248 = vst [vmem:[%s194 + $0xd0] sm:$0xff] %v247
                %v249 = vld [vmem:[%s193 + $0x1a8] sm:$0xff]
                %250 = vst [vmem:[%s194 + $0xd8] sm:$0xff] %v249
                %v251 = vld [vmem:[%s193 + $0x1c0] sm:$0xff]
                %252 = vst [vmem:[%s194 + $0xe0] sm:$0xff] %v251
                %v253 = vld [vmem:[%s193 + $0x1c8] sm:$0xff]
                %254 = vst [vmem:[%s194 + $0xe8] sm:$0xff] %v253
                %v255 = vld [vmem:[%s193 + $0x1e0] sm:$0xff]
                %256 = vst [vmem:[%s194 + $0xf0] sm:$0xff] %v255
                %v257 = vld [vmem:[%s193 + $0x1e8] sm:$0xff]
                %258 = vst [vmem:[%s194 + $0xf8] sm:$0xff] %v257
                %v259 = vld [vmem:[%s193 + $0x200] sm:$0xff]
                %260 = vst [vmem:[%s194 + $0x100] sm:$0xff] %v259
                %v261 = vld [vmem:[%s193 + $0x208] sm:$0xff]
                %262 = vst [vmem:[%s194 + $0x108] sm:$0xff] %v261
                %v263 = vld [vmem:[%s193 + $0x220] sm:$0xff]
                %264 = vst [vmem:[%s194 + $0x110] sm:$0xff] %v263
                %v265 = vld [vmem:[%s193 + $0x228] sm:$0xff]
                %266 = vst [vmem:[%s194 + $0x118] sm:$0xff] %v265
                %v267 = vld [vmem:[%s193 + $0x240] sm:$0xff]
                %268 = vst [vmem:[%s194 + $0x120] sm:$0xff] %v267
                %v269 = vld [vmem:[%s193 + $0x248] sm:$0xff]
                %270 = vst [vmem:[%s194 + $0x128] sm:$0xff] %v269
                %v271 = vld [vmem:[%s193 + $0x260] sm:$0xff]
                %272 = vst [vmem:[%s194 + $0x130] sm:$0xff] %v271
                %v273 = vld [vmem:[%s193 + $0x268] sm:$0xff]
                %274 = vst [vmem:[%s194 + $0x138] sm:$0xff] %v273
                %v275 = vld [vmem:[%s193 + $0x280] sm:$0xff]
                %276 = vst [vmem:[%s194 + $0x140] sm:$0xff] %v275
                %v277 = vld [vmem:[%s193 + $0x288] sm:$0xff]
                %278 = vst [vmem:[%s194 + $0x148] sm:$0xff] %v277
                %v279 = vld [vmem:[%s193 + $0x2a0] sm:$0xff]
                %280 = vst [vmem:[%s194 + $0x150] sm:$0xff] %v279
                %v281 = vld [vmem:[%s193 + $0x2a8] sm:$0xff]
                %282 = vst [vmem:[%s194 + $0x158] sm:$0xff] %v281
                %v283 = vld [vmem:[%s193 + $0x2c0] sm:$0xff]
                %284 = vst [vmem:[%s194 + $0x160] sm:$0xff] %v283
                %v285 = vld [vmem:[%s193 + $0x2c8] sm:$0xff]
                %286 = vst [vmem:[%s194 + $0x168] sm:$0xff] %v285
                %v287 = vld [vmem:[%s193 + $0x2e0] sm:$0xff]
                %288 = vst [vmem:[%s194 + $0x170] sm:$0xff] %v287
                %v289 = vld [vmem:[%s193 + $0x2e8] sm:$0xff]
                %290 = vst [vmem:[%s194 + $0x178] sm:$0xff] %v289
                %v291 = vld [vmem:[%s193 + $0x300] sm:$0xff]
                %292 = vst [vmem:[%s194 + $0x180] sm:$0xff] %v291
                %v293 = vld [vmem:[%s193 + $0x308] sm:$0xff]
                %294 = vst [vmem:[%s194 + $0x188] sm:$0xff] %v293
                %v295 = vld [vmem:[%s193 + $0x320] sm:$0xff]
                %296 = vst [vmem:[%s194 + $0x190] sm:$0xff] %v295
                %v297 = vld [vmem:[%s193 + $0x328] sm:$0xff]
                %298 = vst [vmem:[%s194 + $0x198] sm:$0xff] %v297
                %v299 = vld [vmem:[%s193 + $0x340] sm:$0xff]
                %300 = vst [vmem:[%s194 + $0x1a0] sm:$0xff] %v299
                %v301 = vld [vmem:[%s193 + $0x348] sm:$0xff]
                %302 = vst [vmem:[%s194 + $0x1a8] sm:$0xff] %v301
                %v303 = vld [vmem:[%s193 + $0x360] sm:$0xff]
                %304 = vst [vmem:[%s194 + $0x1b0] sm:$0xff] %v303
                %v305 = vld [vmem:[%s193 + $0x368] sm:$0xff]
                %306 = vst [vmem:[%s194 + $0x1b8] sm:$0xff] %v305
                %v307 = vld [vmem:[%s193 + $0x380] sm:$0xff]
                %308 = vst [vmem:[%s194 + $0x1c0] sm:$0xff] %v307
                %v309 = vld [vmem:[%s193 + $0x388] sm:$0xff]
                %310 = vst [vmem:[%s194 + $0x1c8] sm:$0xff] %v309
                %v311 = vld [vmem:[%s193 + $0x3a0] sm:$0xff]
                %312 = vst [vmem:[%s194 + $0x1d0] sm:$0xff] %v311
                %v313 = vld [vmem:[%s193 + $0x3a8] sm:$0xff]
                %314 = vst [vmem:[%s194 + $0x1d8] sm:$0xff] %v313
                %v315 = vld [vmem:[%s193 + $0x3c0] sm:$0xff]
                %316 = vst [vmem:[%s194 + $0x1e0] sm:$0xff] %v315
                %v317 = vld [vmem:[%s193 + $0x3c8] sm:$0xff]
                %318 = vst [vmem:[%s194 + $0x1e8] sm:$0xff] %v317
                %v319 = vld [vmem:[%s193 + $0x3e0] sm:$0xff]
                %320 = vst [vmem:[%s194 + $0x1f0] sm:$0xff] %v319
                %v321 = vld [vmem:[%s193 + $0x3e8] sm:$0xff]
                %322 = vst [vmem:[%s194 + $0x1f8] sm:$0xff] %v321
                %v323 = vld [vmem:[%s193 + $0x400] sm:$0xff]
                %324 = vst [vmem:[%s194 + $0x200] sm:$0xff] %v323
                %v325 = vld [vmem:[%s193 + $0x408] sm:$0xff]
                %326 = vst [vmem:[%s194 + $0x208] sm:$0xff] %v325
                %v327 = vld [vmem:[%s193 + $0x420] sm:$0xff]
                %328 = vst [vmem:[%s194 + $0x210] sm:$0xff] %v327
                %v329 = vld [vmem:[%s193 + $0x428] sm:$0xff]
                %330 = vst [vmem:[%s194 + $0x218] sm:$0xff] %v329
                %v331 = vld [vmem:[%s193 + $0x440] sm:$0xff]
                %332 = vst [vmem:[%s194 + $0x220] sm:$0xff] %v331
                %v333 = vld [vmem:[%s193 + $0x448] sm:$0xff]
                %334 = vst [vmem:[%s194 + $0x228] sm:$0xff] %v333
                %v335 = vld [vmem:[%s193 + $0x460] sm:$0xff]
                %336 = vst [vmem:[%s194 + $0x230] sm:$0xff] %v335
                %v337 = vld [vmem:[%s193 + $0x468] sm:$0xff]
                %338 = vst [vmem:[%s194 + $0x238] sm:$0xff] %v337
              $region41: #{single_scale_generator.11} parent=35 // loop_footer
                %s192 = sadd.s32 1, %s188
              $region42: #{single_scale_generator.11} parent=35 // loop_footer_branch
                %187 = sbr.rel target = $region38
              $region43: #{single_scale_generator.11} parent=35 // loop_exit
                _
            $region36: #{single_scale_generator.11} parent=31 // pred_fallthru
              _
            // Predicated region
            $region44: #{single_scale_generator.11} parent=31 // pred_check
              _
            $region45: #{single_scale_generator.11} parent=31 // pred_check_branch
              %340 = sbr.rel target = $region47
            $region46: #{single_scale_generator.11} parent=31 // pred_region
              _
            $region47: #{single_scale_generator.11} parent=31 // pred_fallthru
              _
          $region32: #{single_scale_generator.11} parent=27 // pred_fallthru
            _
          %341 = vnop
        $region28: #{single_scale_generator.11} parent=23 // pred_fallthru
          _
      $region24: #{single_scale_generator.11} parent=5 // pred_fallthru
        _
      %p342 = scmp.le.s32.totalorder 1, %s12
      %p343 = scmp.lt.s32.totalorder %s12, 3
      %p344 = pnand %p342, %p343
      %p345 = pneg %p344
      // Predicated region
      $region48: #{single_scale_generator.11} parent=5 // pred_check
        _
      $region49: #{single_scale_generator.11} parent=5 // pred_check_branch
        %347 = sbr.rel (%p344) target = $region51
      $region50: #{single_scale_generator.11} parent=5 // pred_region
        %s348 = ssub.s32 %s12, 1
        %s349 = sand.u32 %s25, 1
        %s350 = sand.u32 %s25, 1
        %s351 = smul.addr %s350, 576
        %s352 = scalar_lea.vmem [#allocation2], %s351
        // Predicated region
        $region52: #{single_scale_generator.11} parent=50 // pred_check
          %p353 = pneg %p38
        $region53: #{single_scale_generator.11} parent=50 // pred_check_branch
          %355 = sbr.rel (%p353) target = $region55
        $region54: #{single_scale_generator.11} parent=50 // pred_region
          _
        $region55: #{single_scale_generator.11} parent=50 // pred_fallthru
          _
        %s356 = sand.u32 %s25, 1
        %s357 = sand.u32 %s25, 1
        %s358 = smul.addr %s357, 576
        %s359 = scalar_lea.vmem [#allocation2], %s358
        %p360 = pneg %p38
        %p361 = pneg %p35
        %p362 = pneg %p59
        %p363 = pneg %p56
        %p364 = pneg %p80
        %p365 = pneg %p77
        %p366 = pneg %p106
        %p367 = pneg %p103
        %s368 = sand.u32 %s93, 1
        %s369 = sand.u32 %s93, 1
        %s370 = smul.addr %s369, 128
        %s371 = scalar_lea.vmem [#allocation3], %s370
        %p372 = pneg %p127
        %p373 = pneg %p124
        %p374 = pneg %p148
        %p375 = pneg %p145
        %s376 = smul.u32 4, %s17
        %s377 = smul.u32 4, %s17
        %p379 = scmp.eq.s32.totalorder %s17, 0
        // Predicated region
        $region56: #{single_scale_generator.11} parent=50 // pred_check
          %p380 = pneg %p379
        $region57: #{single_scale_generator.11} parent=50 // pred_check_branch
          %382 = sbr.rel (%p380) target = $region59
        $region58: #{single_scale_generator.11} parent=50 // pred_region
          %vm383 = vcmask 7168
          %384 = vst.msk [vmem:[%s4] sm:$0xff] %vm383, 0.0
          %385 = vst.msk [vmem:[%s4 + $0x8] sm:$0xff] %vm383, 0.0
          %386 = vst.msk [vmem:[%s4 + $0x10] sm:$0xff] %vm383, 0.0
          %387 = vst.msk [vmem:[%s4 + $0x18] sm:$0xff] %vm383, 0.0
          %388 = vst.msk [vmem:[%s5] sm:$0xff] %vm383, 0.0
          %389 = vst.msk [vmem:[%s5 + $0x8] sm:$0xff] %vm383, 0.0
          %390 = vst.msk [vmem:[%s5 + $0x10] sm:$0xff] %vm383, 0.0
          %391 = vst.msk [vmem:[%s5 + $0x18] sm:$0xff] %vm383, 0.0
        $region59: #{single_scale_generator.11} parent=50 // pred_fallthru
          _
        %v392 = vld [vmem:[%s1] sm:$0xff]
        %v393 = vld [vmem:[%s1 + $0x8] sm:$0xf]
        %v394 = vld [vmem:[%s1 + $0xc] sm:$0xff]
        %v395 = vld [vmem:[%s1 + $0x14] sm:$0xf]
        %v396 = vld [vmem:[%s1 + $0x18] sm:$0xff]
        %v397 = vld [vmem:[%s1 + $0x20] sm:$0xf]
        %v398 = vld [vmem:[%s1 + $0x24] sm:$0xff]
        %v399 = vld [vmem:[%s1 + $0x2c] sm:$0xf]
        %v400 = vld [vmem:[%s352] sm:$0xff]
        %v401 = vld [vmem:[%s352 + $0x8] sm:$0xff]
        %v402 = vld [vmem:[%s352 + $0x10] sm:$0xff]
        %v403 = vld [vmem:[%s352 + $0x18] sm:$0xff]
        %v404 = vld [vmem:[%s352 + $0x20] sm:$0xff]
        %v405 = vld [vmem:[%s352 + $0x28] sm:$0xff]
        %v406 = vld [vmem:[%s352 + $0x30] sm:$0xff]
        %v407 = vld [vmem:[%s352 + $0x38] sm:$0xff]
        %v408 = vld [vmem:[%s352 + $0x40] sm:$0xff]
        %v409 = vld [vmem:[%s352 + $0x48] sm:$0xff]
        %v410 = vld [vmem:[%s352 + $0x50] sm:$0xff]
        %v411 = vld [vmem:[%s352 + $0x58] sm:$0xff]
        %v412 = vld [vmem:[%s352 + $0x60] sm:$0xff]
        %v413 = vld [vmem:[%s352 + $0x68] sm:$0xff]
        %v414 = vld [vmem:[%s352 + $0x70] sm:$0xff]
        %v415 = vld [vmem:[%s352 + $0x78] sm:$0xff]
        %v416 = vld [vmem:[%s352 + $0x80] sm:$0xff]
        %v417 = vld [vmem:[%s352 + $0x88] sm:$0xff]
        %v418 = vld [vmem:[%s352 + $0x90] sm:$0xff]
        %v419 = vld [vmem:[%s352 + $0x98] sm:$0xff]
        %v420 = vld [vmem:[%s352 + $0xa0] sm:$0xff]
        %v421 = vld [vmem:[%s352 + $0xa8] sm:$0xff]
        %v422 = vld [vmem:[%s352 + $0xb0] sm:$0xff]
        %v423 = vld [vmem:[%s352 + $0xb8] sm:$0xff]
        %v424 = vld [vmem:[%s352 + $0xc0] sm:$0xff]
        %v425 = vld [vmem:[%s352 + $0xc8] sm:$0xff]
        %v426 = vld [vmem:[%s352 + $0xd0] sm:$0xff]
        %v427 = vld [vmem:[%s352 + $0xd8] sm:$0xff]
        %v428 = vld [vmem:[%s352 + $0xe0] sm:$0xff]
        %v429 = vld [vmem:[%s352 + $0xe8] sm:$0xff]
        %v430 = vld [vmem:[%s352 + $0xf0] sm:$0xff]
        %v431 = vld [vmem:[%s352 + $0xf8] sm:$0xff]
        %v432 = vld [vmem:[%s352 + $0x100] sm:$0xff]
        %v433 = vld [vmem:[%s352 + $0x108] sm:$0xff]
        %v434 = vld [vmem:[%s352 + $0x110] sm:$0xff]
        %v435 = vld [vmem:[%s352 + $0x118] sm:$0xff]
        %v436 = vld [vmem:[%s352 + $0x120] sm:$0xff]
        %v437 = vld [vmem:[%s352 + $0x128] sm:$0xff]
        %v438 = vld [vmem:[%s352 + $0x130] sm:$0xff]
        %v439 = vld [vmem:[%s352 + $0x138] sm:$0xff]
        %v440 = vld [vmem:[%s352 + $0x140] sm:$0xff]
        %v441 = vld [vmem:[%s352 + $0x148] sm:$0xff]
        %v442 = vld [vmem:[%s352 + $0x150] sm:$0xff]
        %v443 = vld [vmem:[%s352 + $0x158] sm:$0xff]
        %v444 = vld [vmem:[%s352 + $0x160] sm:$0xff]
        %v445 = vld [vmem:[%s352 + $0x168] sm:$0xff]
        %v446 = vld [vmem:[%s352 + $0x170] sm:$0xff]
        %v447 = vld [vmem:[%s352 + $0x178] sm:$0xff]
        %v448 = vld [vmem:[%s352 + $0x180] sm:$0xff]
        %v449 = vld [vmem:[%s352 + $0x188] sm:$0xff]
        %v450 = vld [vmem:[%s352 + $0x190] sm:$0xff]
        %v451 = vld [vmem:[%s352 + $0x198] sm:$0xff]
        %v452 = vld [vmem:[%s352 + $0x1a0] sm:$0xff]
        %v453 = vld [vmem:[%s352 + $0x1a8] sm:$0xff]
        %v454 = vld [vmem:[%s352 + $0x1b0] sm:$0xff]
        %v455 = vld [vmem:[%s352 + $0x1b8] sm:$0xff]
        %v456 = vld [vmem:[%s352 + $0x1c0] sm:$0xff]
        %v457 = vld [vmem:[%s352 + $0x1c8] sm:$0xff]
        %v458 = vld [vmem:[%s352 + $0x1d0] sm:$0xff]
        %v459 = vld [vmem:[%s352 + $0x1d8] sm:$0xff]
        %v460 = vld [vmem:[%s352 + $0x1e0] sm:$0xff]
        %v461 = vld [vmem:[%s352 + $0x1e8] sm:$0xff]
        %v462 = vld [vmem:[%s352 + $0x1f0] sm:$0xff]
        %v463 = vld [vmem:[%s352 + $0x1f8] sm:$0xff]
        %v464 = vld [vmem:[%s352 + $0x200] sm:$0xff]
        %v465 = vld [vmem:[%s352 + $0x208] sm:$0xff]
        %v466 = vld [vmem:[%s352 + $0x210] sm:$0xff]
        %v467 = vld [vmem:[%s352 + $0x218] sm:$0xff]
        %v468 = vld [vmem:[%s352 + $0x220] sm:$0xff]
        %v469 = vld [vmem:[%s352 + $0x228] sm:$0xff]
        %v470 = vld [vmem:[%s352 + $0x230] sm:$0xff]
        %v471 = vld [vmem:[%s352 + $0x238] sm:$0xff]
        %v472 = vld [vmem:[%s2] sm:$0xff]
        %v473 = vld [vmem:[%s2 + $0x8] sm:$0xff]
        %v474 = vld [vmem:[%s2 + $0x10] sm:$0xff]
        %v475 = vld [vmem:[%s2 + $0x18] sm:$0xff]
        %477 = vset.pattern.permute.xlu0 0
        %478 = vperm.xlu0 %477, %v472
        %v479 = vpop.permute.xlu0 %478
        %482 = vset.pattern.permute.xlu0 0
        %483 = vperm.xlu0 %482, %v473
        %v484 = vpop.permute.xlu0 %483
        %487 = vset.pattern.permute.xlu0 0
        %488 = vperm.xlu0 %487, %v474
        %v489 = vpop.permute.xlu0 %488
        %492 = vset.pattern.permute.xlu0 0
        %493 = vperm.xlu0 %492, %v475
        %v494 = vpop.permute.xlu0 %493
        %v504 = vunpack.c.l.b16 %v392
        %v505 = vunpack.c.h.b16 %v392
        %v506 = vunpack.c.l.b16 %v393
        %v507 = vunpack.c.l.b16 %v394
        %v508 = vunpack.c.h.b16 %v394
        %v509 = vunpack.c.l.b16 %v395
        %v510 = vunpack.c.l.b16 %v396
        %v511 = vunpack.c.h.b16 %v396
        %v512 = vunpack.c.l.b16 %v397
        %v513 = vunpack.c.l.b16 %v398
        %v514 = vunpack.c.h.b16 %v398
        %v515 = vunpack.c.l.b16 %v399
        %v516 = vpack.c.b16 %v507, %v504
        %v517 = vpack.c.b16 %v508, %v505
        %v518 = vpack.c.b16 %v509, %v506
        %v519 = vpack.c.b16 %v513, %v510
        %v520 = vpack.c.b16 %v514, %v511
        %v521 = vpack.c.b16 %v515, %v512
        %v598 = vunpack.c.l.b16 %v400
        %v599 = vunpack.c.h.b16 %v400
        %v600 = vunpack.c.l.b16 %v401
        %v601 = vunpack.c.h.b16 %v401
        %v602 = vunpack.c.l.b16 %v402
        %v603 = vunpack.c.h.b16 %v402
        %v604 = vunpack.c.l.b16 %v403
        %v605 = vunpack.c.h.b16 %v403
        %v606 = vunpack.c.l.b16 %v404
        %v607 = vunpack.c.h.b16 %v404
        %v608 = vunpack.c.l.b16 %v405
        %v609 = vunpack.c.h.b16 %v405
        %v610 = vunpack.c.l.b16 %v406
        %v611 = vunpack.c.h.b16 %v406
        %v612 = vunpack.c.l.b16 %v407
        %v613 = vunpack.c.h.b16 %v407
        %v614 = vunpack.c.l.b16 %v408
        %v615 = vunpack.c.h.b16 %v408
        %v616 = vunpack.c.l.b16 %v409
        %v617 = vunpack.c.h.b16 %v409
        %v618 = vunpack.c.l.b16 %v410
        %v619 = vunpack.c.h.b16 %v410
        %v620 = vunpack.c.l.b16 %v411
        %v621 = vunpack.c.h.b16 %v411
        %v622 = vunpack.c.l.b16 %v412
        %v623 = vunpack.c.h.b16 %v412
        %v624 = vunpack.c.l.b16 %v413
        %v625 = vunpack.c.h.b16 %v413
        %v626 = vunpack.c.l.b16 %v414
        %v627 = vunpack.c.h.b16 %v414
        %v628 = vunpack.c.l.b16 %v415
        %v629 = vunpack.c.h.b16 %v415
        %v630 = vunpack.c.l.b16 %v416
        %v631 = vunpack.c.h.b16 %v416
        %v632 = vunpack.c.l.b16 %v417
        %v633 = vunpack.c.h.b16 %v417
        %v634 = vunpack.c.l.b16 %v418
        %v635 = vunpack.c.h.b16 %v418
        %v636 = vunpack.c.l.b16 %v419
        %v637 = vunpack.c.h.b16 %v419
        %v638 = vunpack.c.l.b16 %v420
        %v639 = vunpack.c.h.b16 %v420
        %v640 = vunpack.c.l.b16 %v421
        %v641 = vunpack.c.h.b16 %v421
        %v642 = vunpack.c.l.b16 %v422
        %v643 = vunpack.c.h.b16 %v422
        %v644 = vunpack.c.l.b16 %v423
        %v645 = vunpack.c.h.b16 %v423
        %v646 = vunpack.c.l.b16 %v424
        %v647 = vunpack.c.h.b16 %v424
        %v648 = vunpack.c.l.b16 %v425
        %v649 = vunpack.c.h.b16 %v425
        %v650 = vunpack.c.l.b16 %v426
        %v651 = vunpack.c.h.b16 %v426
        %v652 = vunpack.c.l.b16 %v427
        %v653 = vunpack.c.h.b16 %v427
        %v654 = vunpack.c.l.b16 %v428
        %v655 = vunpack.c.h.b16 %v428
        %v656 = vunpack.c.l.b16 %v429
        %v657 = vunpack.c.h.b16 %v429
        %v658 = vunpack.c.l.b16 %v430
        %v659 = vunpack.c.h.b16 %v430
        %v660 = vunpack.c.l.b16 %v431
        %v661 = vunpack.c.h.b16 %v431
        %v662 = vunpack.c.l.b16 %v432
        %v663 = vunpack.c.h.b16 %v432
        %v664 = vunpack.c.l.b16 %v433
        %v665 = vunpack.c.h.b16 %v433
        %v666 = vunpack.c.l.b16 %v434
        %v667 = vunpack.c.h.b16 %v434
        %v668 = vunpack.c.l.b16 %v435
        %v669 = vunpack.c.h.b16 %v435
        %v670 = vunpack.c.l.b16 %v436
        %v671 = vunpack.c.h.b16 %v436
        %v672 = vunpack.c.l.b16 %v437
        %v673 = vunpack.c.h.b16 %v437
        %v674 = vunpack.c.l.b16 %v438
        %v675 = vunpack.c.h.b16 %v438
        %v676 = vunpack.c.l.b16 %v439
        %v677 = vunpack.c.h.b16 %v439
        %v678 = vunpack.c.l.b16 %v440
        %v679 = vunpack.c.h.b16 %v440
        %v680 = vunpack.c.l.b16 %v441
        %v681 = vunpack.c.h.b16 %v441
        %v682 = vunpack.c.l.b16 %v442
        %v683 = vunpack.c.h.b16 %v442
        %v684 = vunpack.c.l.b16 %v443
        %v685 = vunpack.c.h.b16 %v443
        %v686 = vunpack.c.l.b16 %v444
        %v687 = vunpack.c.h.b16 %v444
        %v688 = vunpack.c.l.b16 %v445
        %v689 = vunpack.c.h.b16 %v445
        %v690 = vunpack.c.l.b16 %v446
        %v691 = vunpack.c.h.b16 %v446
        %v692 = vunpack.c.l.b16 %v447
        %v693 = vunpack.c.h.b16 %v447
        %v694 = vunpack.c.l.b16 %v448
        %v695 = vunpack.c.h.b16 %v448
        %v696 = vunpack.c.l.b16 %v449
        %v697 = vunpack.c.h.b16 %v449
        %v698 = vunpack.c.l.b16 %v450
        %v699 = vunpack.c.h.b16 %v450
        %v700 = vunpack.c.l.b16 %v451
        %v701 = vunpack.c.h.b16 %v451
        %v702 = vunpack.c.l.b16 %v452
        %v703 = vunpack.c.h.b16 %v452
        %v704 = vunpack.c.l.b16 %v453
        %v705 = vunpack.c.h.b16 %v453
        %v706 = vunpack.c.l.b16 %v454
        %v707 = vunpack.c.h.b16 %v454
        %v708 = vunpack.c.l.b16 %v455
        %v709 = vunpack.c.h.b16 %v455
        %v710 = vunpack.c.l.b16 %v456
        %v711 = vunpack.c.h.b16 %v456
        %v712 = vunpack.c.l.b16 %v457
        %v713 = vunpack.c.h.b16 %v457
        %v714 = vunpack.c.l.b16 %v458
        %v715 = vunpack.c.h.b16 %v458
        %v716 = vunpack.c.l.b16 %v459
        %v717 = vunpack.c.h.b16 %v459
        %v718 = vunpack.c.l.b16 %v460
        %v719 = vunpack.c.h.b16 %v460
        %v720 = vunpack.c.l.b16 %v461
        %v721 = vunpack.c.h.b16 %v461
        %v722 = vunpack.c.l.b16 %v462
        %v723 = vunpack.c.h.b16 %v462
        %v724 = vunpack.c.l.b16 %v463
        %v725 = vunpack.c.h.b16 %v463
        %v726 = vunpack.c.l.b16 %v464
        %v727 = vunpack.c.h.b16 %v464
        %v728 = vunpack.c.l.b16 %v465
        %v729 = vunpack.c.h.b16 %v465
        %v730 = vunpack.c.l.b16 %v466
        %v731 = vunpack.c.h.b16 %v466
        %v732 = vunpack.c.l.b16 %v467
        %v733 = vunpack.c.h.b16 %v467
        %v734 = vunpack.c.l.b16 %v468
        %v735 = vunpack.c.h.b16 %v468
        %v736 = vunpack.c.l.b16 %v469
        %v737 = vunpack.c.h.b16 %v469
        %v738 = vunpack.c.l.b16 %v470
        %v739 = vunpack.c.h.b16 %v470
        %v740 = vunpack.c.l.b16 %v471
        %v741 = vunpack.c.h.b16 %v471
        %v742 = vpack.c.b16 %v602, %v598
        %v743 = vpack.c.b16 %v603, %v599
        %v744 = vpack.c.b16 %v604, %v600
        %v745 = vpack.c.b16 %v605, %v601
        %v746 = vpack.c.b16 %v610, %v606
        %v747 = vpack.c.b16 %v611, %v607
        %v748 = vpack.c.b16 %v612, %v608
        %v749 = vpack.c.b16 %v613, %v609
        %v750 = vpack.c.b16 %v618, %v614
        %v751 = vpack.c.b16 %v619, %v615
        %v752 = vpack.c.b16 %v620, %v616
        %v753 = vpack.c.b16 %v621, %v617
        %v754 = vpack.c.b16 %v626, %v622
        %v755 = vpack.c.b16 %v627, %v623
        %v756 = vpack.c.b16 %v628, %v624
        %v757 = vpack.c.b16 %v629, %v625
        %v758 = vpack.c.b16 %v634, %v630
        %v759 = vpack.c.b16 %v635, %v631
        %v760 = vpack.c.b16 %v636, %v632
        %v761 = vpack.c.b16 %v637, %v633
        %v762 = vpack.c.b16 %v642, %v638
        %v763 = vpack.c.b16 %v643, %v639
        %v764 = vpack.c.b16 %v644, %v640
        %v765 = vpack.c.b16 %v645, %v641
        %v766 = vpack.c.b16 %v650, %v646
        %v767 = vpack.c.b16 %v651, %v647
        %v768 = vpack.c.b16 %v652, %v648
        %v769 = vpack.c.b16 %v653, %v649
        %v770 = vpack.c.b16 %v658, %v654
        %v771 = vpack.c.b16 %v659, %v655
        %v772 = vpack.c.b16 %v660, %v656
        %v773 = vpack.c.b16 %v661, %v657
        %v774 = vpack.c.b16 %v666, %v662
        %v775 = vpack.c.b16 %v667, %v663
        %v776 = vpack.c.b16 %v668, %v664
        %v777 = vpack.c.b16 %v669, %v665
        %v778 = vpack.c.b16 %v674, %v670
        %v779 = vpack.c.b16 %v675, %v671
        %v780 = vpack.c.b16 %v676, %v672
        %v781 = vpack.c.b16 %v677, %v673
        %v782 = vpack.c.b16 %v682, %v678
        %v783 = vpack.c.b16 %v683, %v679
        %v784 = vpack.c.b16 %v684, %v680
        %v785 = vpack.c.b16 %v685, %v681
        %v786 = vpack.c.b16 %v690, %v686
        %v787 = vpack.c.b16 %v691, %v687
        %v788 = vpack.c.b16 %v692, %v688
        %v789 = vpack.c.b16 %v693, %v689
        %v790 = vpack.c.b16 %v698, %v694
        %v791 = vpack.c.b16 %v699, %v695
        %v792 = vpack.c.b16 %v700, %v696
        %v793 = vpack.c.b16 %v701, %v697
        %v794 = vpack.c.b16 %v706, %v702
        %v795 = vpack.c.b16 %v707, %v703
        %v796 = vpack.c.b16 %v708, %v704
        %v797 = vpack.c.b16 %v709, %v705
        %v798 = vpack.c.b16 %v714, %v710
        %v799 = vpack.c.b16 %v715, %v711
        %v800 = vpack.c.b16 %v716, %v712
        %v801 = vpack.c.b16 %v717, %v713
        %v802 = vpack.c.b16 %v722, %v718
        %v803 = vpack.c.b16 %v723, %v719
        %v804 = vpack.c.b16 %v724, %v720
        %v805 = vpack.c.b16 %v725, %v721
        %v806 = vpack.c.b16 %v730, %v726
        %v807 = vpack.c.b16 %v731, %v727
        %v808 = vpack.c.b16 %v732, %v728
        %v809 = vpack.c.b16 %v733, %v729
        %v810 = vpack.c.b16 %v738, %v734
        %v811 = vpack.c.b16 %v739, %v735
        %v812 = vpack.c.b16 %v740, %v736
        %v813 = vpack.c.b16 %v741, %v737
        %vm886 = vcmask 261120
        %v888 = vsel %vm886, %v518, 0
        %v891 = vsel %vm886, %v521, 0
        %893 = vmatprep.subr.bf16.mxu0 %v743
        %894 = vmatpush1.bf16.msra.mxu0 %v742
        %895 = vmatprep.subr.bf16.mxu0 %v747
        %896 = vmatpush1.bf16.msra.mxu0 %v746
        %897 = vmatprep.subr.bf16.mxu0 %v751
        %898 = vmatpush1.bf16.msra.mxu0 %v750
        %899 = vmatprep.subr.bf16.mxu0 %v755
        %900 = vmatpush1.bf16.msra.mxu0 %v754
        %901 = vmatprep.subr.bf16.mxu0 %v759
        %902 = vmatpush1.bf16.msra.mxu0 %v758
        %903 = vmatprep.subr.bf16.mxu0 %v763
        %904 = vmatpush1.bf16.msra.mxu0 %v762
        %905 = vmatprep.subr.bf16.mxu0 %v767
        %906 = vmatpush1.bf16.msra.mxu0 %v766
        %907 = vmatprep.subr.bf16.mxu0 %v771
        %908 = vmatpush1.bf16.msra.mxu0 %v770
        %909 = vmatprep.subr.bf16.mxu0 %v775
        %910 = vmatpush1.bf16.msra.mxu0 %v774
        %911 = vmatprep.subr.bf16.mxu0 %v779
        %912 = vmatpush1.bf16.msra.mxu0 %v778
        %913 = vmatprep.subr.bf16.mxu0 %v783
        %914 = vmatpush1.bf16.msra.mxu0 %v782
        %915 = vmatprep.subr.bf16.mxu0 %v787
        %916 = vmatpush1.bf16.msra.mxu0 %v786
        %917 = vmatprep.subr.bf16.mxu0 %v791
        %918 = vmatpush1.bf16.msra.mxu0 %v790
        %919 = vmatprep.subr.bf16.mxu0 %v795
        %920 = vmatpush1.bf16.msra.mxu0 %v794
        %921 = vmatprep.subr.bf16.mxu0 %v799
        %922 = vmatpush1.bf16.msra.mxu0 %v798
        %923 = vmatprep.subr.bf16.mxu0 %v803
        %924 = vmatpush1.bf16.msra.mxu0 %v802
        %925 = vmatprep.mubr.bf16.mxu0 %v517
        %926 = vmatmul.mubr.bf16.gmra.mrb[0].mxu0 %v516
        %v927 = vpop.f32.mrb[0].mxu0
        %v928 = vadd.f32 %v479, %v927
        %v929 = vpop.f32.mrb[0].mxu0
        %v930 = vadd.f32 %v479, %v929
        %v931 = vpop.f32.mrb[0].mxu0
        %v932 = vadd.f32 %v484, %v931
        %v933 = vpop.f32.mrb[0].mxu0
        %v934 = vadd.f32 %v484, %v933
        %935 = vmatprep.mubr.bf16.mxu0 %v520
        %936 = vmatmul.mubr.bf16.gmra.mrb[0].mxu0 %v519
        %v937 = vpop.f32.mrb[0].mxu0
        %v938 = vadd.f32 %v489, %v937
        %v939 = vpop.f32.mrb[0].mxu0
        %v940 = vadd.f32 %v489, %v939
        %v941 = vpop.f32.mrb[0].mxu0
        %v942 = vadd.f32 %v494, %v941
        %v943 = vpop.f32.mrb[0].mxu0
        %v944 = vadd.f32 %v494, %v943
        %945 = vdwg.mxu0
        %946 = vmatprep.subr.bf16.mxu0 %v807
        %947 = vmatpush1.bf16.msra.mxu0 %v806
        %948 = vmatprep.subr.bf16.mxu0 %v811
        %949 = vmatpush1.bf16.msra.mxu0 %v810
        %950 = vmatprep.subr.bf16.mxu0 0
        %951 = vmatpush1.bf16.msra.mxu0 0
        %952 = vmatprep.subr.bf16.mxu0 0
        %953 = vmatpush1.bf16.msra.mxu0 0
        %954 = vmatprep.subr.bf16.mxu0 0
        %955 = vmatpush1.bf16.msra.mxu0 0
        %956 = vmatprep.subr.bf16.mxu0 0
        %957 = vmatpush1.bf16.msra.mxu0 0
        %958 = vmatprep.subr.bf16.mxu0 0
        %959 = vmatpush1.bf16.msra.mxu0 0
        %960 = vmatprep.subr.bf16.mxu0 0
        %961 = vmatpush1.bf16.msra.mxu0 0
        %962 = vmatprep.subr.bf16.mxu0 0
        %963 = vmatpush1.bf16.msra.mxu0 0
        %964 = vmatprep.subr.bf16.mxu0 0
        %965 = vmatpush1.bf16.msra.mxu0 0
        %966 = vmatprep.subr.bf16.mxu0 0
        %967 = vmatpush1.bf16.msra.mxu0 0
        %968 = vmatprep.subr.bf16.mxu0 0
        %969 = vmatpush1.bf16.msra.mxu0 0
        %970 = vmatprep.subr.bf16.mxu0 0
        %971 = vmatpush1.bf16.msra.mxu0 0
        %972 = vmatprep.subr.bf16.mxu0 0
        %973 = vmatpush1.bf16.msra.mxu0 0
        %974 = vmatprep.subr.bf16.mxu0 0
        %975 = vmatpush1.bf16.msra.mxu0 0
        %976 = vmatprep.subr.bf16.mxu0 0
        %977 = vmatpush1.bf16.msra.mxu0 0
        %978 = vmatprep.mubr.bf16.mxu0 0
        %979 = vmatmul.mubr.bf16.gmra.mrb[0].mxu0 %v888
        %v980 = vpop.f32.mrb[0].mxu0
        %v981 = vadd.f32 %v928, %v980
        %v982 = vpop.f32.mrb[0].mxu0
        %v983 = vadd.f32 %v930, %v982
        %v984 = vpop.f32.mrb[0].mxu0
        %v985 = vadd.f32 %v932, %v984
        %v986 = vpop.f32.mrb[0].mxu0
        %v987 = vadd.f32 %v934, %v986
        %988 = vmatprep.mubr.bf16.mxu0 0
        %989 = vmatmul.mubr.bf16.gmra.mrb[0].mxu0 %v891
        %v990 = vpop.f32.mrb[0].mxu0
        %v991 = vadd.f32 %v938, %v990
        %v992 = vpop.f32.mrb[0].mxu0
        %v993 = vadd.f32 %v940, %v992
        %v994 = vpop.f32.mrb[0].mxu0
        %v995 = vadd.f32 %v942, %v994
        %v996 = vpop.f32.mrb[0].mxu0
        %v997 = vadd.f32 %v944, %v996
        %998 = vdwg.mxu0
        %999 = vmatprep.subr.bf16.mxu0 %v745
        %1000 = vmatpush1.bf16.msra.mxu0 %v744
        %1001 = vmatprep.subr.bf16.mxu0 %v749
        %1002 = vmatpush1.bf16.msra.mxu0 %v748
        %1003 = vmatprep.subr.bf16.mxu0 %v753
        %1004 = vmatpush1.bf16.msra.mxu0 %v752
        %1005 = vmatprep.subr.bf16.mxu0 %v757
        %1006 = vmatpush1.bf16.msra.mxu0 %v756
        %1007 = vmatprep.subr.bf16.mxu0 %v761
        %1008 = vmatpush1.bf16.msra.mxu0 %v760
        %1009 = vmatprep.subr.bf16.mxu0 %v765
        %1010 = vmatpush1.bf16.msra.mxu0 %v764
        %1011 = vmatprep.subr.bf16.mxu0 %v769
        %1012 = vmatpush1.bf16.msra.mxu0 %v768
        %1013 = vmatprep.subr.bf16.mxu0 %v773
        %1014 = vmatpush1.bf16.msra.mxu0 %v772
        %1015 = vmatprep.subr.bf16.mxu0 %v777
        %1016 = vmatpush1.bf16.msra.mxu0 %v776
        %1017 = vmatprep.subr.bf16.mxu0 %v781
        %1018 = vmatpush1.bf16.msra.mxu0 %v780
        %1019 = vmatprep.subr.bf16.mxu0 %v785
        %1020 = vmatpush1.bf16.msra.mxu0 %v784
        %1021 = vmatprep.subr.bf16.mxu0 %v789
        %1022 = vmatpush1.bf16.msra.mxu0 %v788
        %1023 = vmatprep.subr.bf16.mxu0 %v793
        %1024 = vmatpush1.bf16.msra.mxu0 %v792
        %1025 = vmatprep.subr.bf16.mxu0 %v797
        %1026 = vmatpush1.bf16.msra.mxu0 %v796
        %1027 = vmatprep.subr.bf16.mxu0 %v801
        %1028 = vmatpush1.bf16.msra.mxu0 %v800
        %1029 = vmatprep.subr.bf16.mxu0 %v805
        %1030 = vmatpush1.bf16.msra.mxu0 %v804
        %1031 = vmatprep.mubr.bf16.mxu0 %v517
        %1032 = vmatmul.mubr.bf16.gmra.mrb[0].mxu0 %v516
        %v1033 = vpop.f32.mrb[0].mxu0
        %v1034 = vadd.f32 %v479, %v1033
        %v1035 = vpop.f32.mrb[0].mxu0
        %v1036 = vadd.f32 %v479, %v1035
        %v1037 = vpop.f32.mrb[0].mxu0
        %v1038 = vadd.f32 %v484, %v1037
        %v1039 = vpop.f32.mrb[0].mxu0
        %v1040 = vadd.f32 %v484, %v1039
        %1041 = vmatprep.mubr.bf16.mxu0 %v520
        %1042 = vmatmul.mubr.bf16.gmra.mrb[0].mxu0 %v519
        %v1043 = vpop.f32.mrb[0].mxu0
        %v1044 = vadd.f32 %v489, %v1043
        %v1045 = vpop.f32.mrb[0].mxu0
        %v1046 = vadd.f32 %v489, %v1045
        %v1047 = vpop.f32.mrb[0].mxu0
        %v1048 = vadd.f32 %v494, %v1047
        %v1049 = vpop.f32.mrb[0].mxu0
        %v1050 = vadd.f32 %v494, %v1049
        %1051 = vdwg.mxu0
        %1052 = vmatprep.subr.bf16.mxu0 %v809
        %1053 = vmatpush1.bf16.msra.mxu0 %v808
        %1054 = vmatprep.subr.bf16.mxu0 %v813
        %1055 = vmatpush1.bf16.msra.mxu0 %v812
        %1056 = vmatprep.subr.bf16.mxu0 0
        %1057 = vmatpush1.bf16.msra.mxu0 0
        %1058 = vmatprep.subr.bf16.mxu0 0
        %1059 = vmatpush1.bf16.msra.mxu0 0
        %1060 = vmatprep.subr.bf16.mxu0 0
        %1061 = vmatpush1.bf16.msra.mxu0 0
        %1062 = vmatprep.subr.bf16.mxu0 0
        %1063 = vmatpush1.bf16.msra.mxu0 0
        %1064 = vmatprep.subr.bf16.mxu0 0
        %1065 = vmatpush1.bf16.msra.mxu0 0
        %1066 = vmatprep.subr.bf16.mxu0 0
        %1067 = vmatpush1.bf16.msra.mxu0 0
        %1068 = vmatprep.subr.bf16.mxu0 0
        %1069 = vmatpush1.bf16.msra.mxu0 0
        %1070 = vmatprep.subr.bf16.mxu0 0
        %1071 = vmatpush1.bf16.msra.mxu0 0
        %1072 = vmatprep.subr.bf16.mxu0 0
        %1073 = vmatpush1.bf16.msra.mxu0 0
        %1074 = vmatprep.subr.bf16.mxu0 0
        %1075 = vmatpush1.bf16.msra.mxu0 0
        %1076 = vmatprep.subr.bf16.mxu0 0
        %1077 = vmatpush1.bf16.msra.mxu0 0
        %1078 = vmatprep.subr.bf16.mxu0 0
        %1079 = vmatpush1.bf16.msra.mxu0 0
        %1080 = vmatprep.subr.bf16.mxu0 0
        %1081 = vmatpush1.bf16.msra.mxu0 0
        %1082 = vmatprep.subr.bf16.mxu0 0
        %1083 = vmatpush1.bf16.msra.mxu0 0
        %1084 = vmatprep.mubr.bf16.mxu0 0
        %1085 = vmatmul.mubr.bf16.gmra.mrb[0].mxu0 %v888
        %v1086 = vpop.f32.mrb[0].mxu0
        %v1087 = vadd.f32 %v1034, %v1086
        %v1088 = vpop.f32.mrb[0].mxu0
        %v1089 = vadd.f32 %v1036, %v1088
        %v1090 = vpop.f32.mrb[0].mxu0
        %v1091 = vadd.f32 %v1038, %v1090
        %v1092 = vpop.f32.mrb[0].mxu0
        %v1093 = vadd.f32 %v1040, %v1092
        %1094 = vmatprep.mubr.bf16.mxu0 0
        %1095 = vmatmul.mubr.bf16.gmra.mrb[0].mxu0 %v891
        %v1096 = vpop.f32.mrb[0].mxu0
        %v1097 = vadd.f32 %v1044, %v1096
        %v1098 = vpop.f32.mrb[0].mxu0
        %v1099 = vadd.f32 %v1046, %v1098
        %v1100 = vpop.f32.mrb[0].mxu0
        %v1101 = vadd.f32 %v1048, %v1100
        %v1102 = vpop.f32.mrb[0].mxu0
        %v1103 = vadd.f32 %v1050, %v1102
        %1104 = vdwg.mxu0
        %1105 = vst [vmem:[%s371] sm:$0xff] %v981
        %1106 = vst [vmem:[%s371 + $0x8] sm:$0xff] %v983
        %1107 = vst [vmem:[%s371 + $0x10] sm:$0xff] %v1087
        %1108 = vst [vmem:[%s371 + $0x18] sm:$0xff] %v1089
        %1109 = vst [vmem:[%s371 + $0x20] sm:$0xff] %v985
        %1110 = vst [vmem:[%s371 + $0x28] sm:$0xff] %v987
        %1111 = vst [vmem:[%s371 + $0x30] sm:$0xff] %v1091
        %1112 = vst [vmem:[%s371 + $0x38] sm:$0xff] %v1093
        %1113 = vst [vmem:[%s371 + $0x40] sm:$0xff] %v991
        %1114 = vst [vmem:[%s371 + $0x48] sm:$0xff] %v993
        %1115 = vst [vmem:[%s371 + $0x50] sm:$0xff] %v1097
        %1116 = vst [vmem:[%s371 + $0x58] sm:$0xff] %v1099
        %1117 = vst [vmem:[%s371 + $0x60] sm:$0xff] %v995
        %1118 = vst [vmem:[%s371 + $0x68] sm:$0xff] %v997
        %1119 = vst [vmem:[%s371 + $0x70] sm:$0xff] %v1101
        %1120 = vst [vmem:[%s371 + $0x78] sm:$0xff] %v1103
        %v1121 = vlaneseq
        %v1122 = vand.u32 %v1121, 127
        %v1123 = vadd.s32 %v1122, 128
        %v1124 = vadd.s32 %v1122, 256
        %v1125 = vadd.s32 %v1122, 384
        %s1126 = smul.u32 %s17, 512
        %v1127 = vstv %s1126
        %v1128 = vadd.s32 %v1122, %v1127
        %v1129 = vadd.s32 %v1123, %v1127
        %v1130 = vadd.s32 %v1124, %v1127
        %v1131 = vadd.s32 %v1125, %v1127
        %vm1132 = vcmp.lt.s32.totalorder %v1128, 800
        %vm1133 = vcmp.lt.s32.totalorder %v1129, 800
        %vm1134 = vcmp.lt.s32.totalorder %v1130, 800
        %vm1135 = vcmp.lt.s32.totalorder %v1131, 800
        %v1136 = vsel %vm1132, 1, 0
        %v1137 = vsel %vm1133, 1, 0
        %v1138 = vsel %vm1134, 1, 0
        %v1139 = vsel %vm1135, 1, 0
        %vm1140 = vcmp.eq.s32.totalorder %v1136, 1
        %vm1141 = vcmp.eq.s32.totalorder %v1137, 1
        %vm1142 = vcmp.eq.s32.totalorder %v1138, 1
        %vm1143 = vcmp.eq.s32.totalorder %v1139, 1
        %v1144 = vsel %vm1140, %v981, 0.0
        %v1145 = vsel %vm1141, %v983, 0.0
        %v1146 = vsel %vm1142, %v1087, 0.0
        %v1147 = vsel %vm1143, %v1089, 0.0
        %v1148 = vsel %vm1140, %v985, 0.0
        %v1149 = vsel %vm1141, %v987, 0.0
        %v1150 = vsel %vm1142, %v1091, 0.0
        %v1151 = vsel %vm1143, %v1093, 0.0
        %v1152 = vsel %vm1140, %v991, 0.0
        %v1153 = vsel %vm1141, %v993, 0.0
        %v1154 = vsel %vm1142, %v1097, 0.0
        %v1155 = vsel %vm1143, %v1099, 0.0
        %v1156 = vsel %vm1140, %v995, 0.0
        %v1157 = vsel %vm1141, %v997, 0.0
        %v1158 = vsel %vm1142, %v1101, 0.0
        %v1159 = vsel %vm1143, %v1103, 0.0
        %v1160 = vld [vmem:[%s4] sm:$0xff]
        %v1161 = vld [vmem:[%s4 + $0x8] sm:$0xff]
        %v1162 = vld [vmem:[%s4 + $0x10] sm:$0xff]
        %v1163 = vld [vmem:[%s4 + $0x18] sm:$0xff]
        %v1164 = vadd.f32 %v1144, %v1145
        %v1165 = vadd.f32 %v1164, %v1146
        %v1166 = vadd.f32 %v1165, %v1147
        %1167 = vadd.xlane.f32.xlu0 %v1166
        %v1168 = vpop.xlane.xlu0 %1167
        %v1169 = vadd.f32 %v1148, %v1149
        %v1170 = vadd.f32 %v1169, %v1150
        %v1171 = vadd.f32 %v1170, %v1151
        %1172 = vadd.xlane.f32.xlu0 %v1171
        %v1173 = vpop.xlane.xlu0 %1172
        %v1174 = vadd.f32 %v1152, %v1153
        %v1175 = vadd.f32 %v1174, %v1154
        %v1176 = vadd.f32 %v1175, %v1155
        %1177 = vadd.xlane.f32.xlu0 %v1176
        %v1178 = vpop.xlane.xlu0 %1177
        %v1179 = vadd.f32 %v1156, %v1157
        %v1180 = vadd.f32 %v1179, %v1158
        %v1181 = vadd.f32 %v1180, %v1159
        %1182 = vadd.xlane.f32.xlu0 %v1181
        %v1183 = vpop.xlane.xlu0 %1182
        %v1184 = vadd.f32 %v1160, %v1168
        %v1185 = vadd.f32 %v1161, %v1173
        %v1186 = vadd.f32 %v1162, %v1178
        %v1187 = vadd.f32 %v1163, %v1183
        %vm1188 = vcmask 7168
        %1189 = vst.msk [vmem:[%s4] sm:$0xff] %vm1188, %v1184
        %1190 = vst.msk [vmem:[%s4 + $0x8] sm:$0xff] %vm1188, %v1185
        %1191 = vst.msk [vmem:[%s4 + $0x10] sm:$0xff] %vm1188, %v1186
        %1192 = vst.msk [vmem:[%s4 + $0x18] sm:$0xff] %vm1188, %v1187
        %v1193 = vld [vmem:[%s5] sm:$0xff]
        %v1194 = vld [vmem:[%s5 + $0x8] sm:$0xff]
        %v1195 = vld [vmem:[%s5 + $0x10] sm:$0xff]
        %v1196 = vld [vmem:[%s5 + $0x18] sm:$0xff]
        %v1197 = vmul.f32 %v1144, %v1144
        %v1198 = vmul.f32 %v1145, %v1145
        %v1199 = vmul.f32 %v1146, %v1146
        %v1200 = vmul.f32 %v1147, %v1147
        %v1201 = vmul.f32 %v1148, %v1148
        %v1202 = vmul.f32 %v1149, %v1149
        %v1203 = vmul.f32 %v1150, %v1150
        %v1204 = vmul.f32 %v1151, %v1151
        %v1205 = vmul.f32 %v1152, %v1152
        %v1206 = vmul.f32 %v1153, %v1153
        %v1207 = vmul.f32 %v1154, %v1154
        %v1208 = vmul.f32 %v1155, %v1155
        %v1209 = vmul.f32 %v1156, %v1156
        %v1210 = vmul.f32 %v1157, %v1157
        %v1211 = vmul.f32 %v1158, %v1158
        %v1212 = vmul.f32 %v1159, %v1159
        %v1213 = vadd.f32 %v1197, %v1198
        %v1214 = vadd.f32 %v1213, %v1199
        %v1215 = vadd.f32 %v1214, %v1200
        %1216 = vadd.xlane.f32.xlu0 %v1215
        %v1217 = vpop.xlane.xlu0 %1216
        %v1218 = vadd.f32 %v1201, %v1202
        %v1219 = vadd.f32 %v1218, %v1203
        %v1220 = vadd.f32 %v1219, %v1204
        %1221 = vadd.xlane.f32.xlu0 %v1220
        %v1222 = vpop.xlane.xlu0 %1221
        %v1223 = vadd.f32 %v1205, %v1206
        %v1224 = vadd.f32 %v1223, %v1207
        %v1225 = vadd.f32 %v1224, %v1208
        %1226 = vadd.xlane.f32.xlu0 %v1225
        %v1227 = vpop.xlane.xlu0 %1226
        %v1228 = vadd.f32 %v1209, %v1210
        %v1229 = vadd.f32 %v1228, %v1211
        %v1230 = vadd.f32 %v1229, %v1212
        %1231 = vadd.xlane.f32.xlu0 %v1230
        %v1232 = vpop.xlane.xlu0 %1231
        %v1233 = vadd.f32 %v1193, %v1217
        %v1234 = vadd.f32 %v1194, %v1222
        %v1235 = vadd.f32 %v1195, %v1227
        %v1236 = vadd.f32 %v1196, %v1232
        %1237 = vst.msk [vmem:[%s5] sm:$0xff] %vm1188, %v1233
        %1238 = vst.msk [vmem:[%s5 + $0x8] sm:$0xff] %vm1188, %v1234
        %1239 = vst.msk [vmem:[%s5 + $0x10] sm:$0xff] %vm1188, %v1235
        %1240 = vst.msk [vmem:[%s5 + $0x18] sm:$0xff] %vm1188, %v1236
        %s1241 = sand.u32 %s93, 1
        %s1242 = sand.u32 %s93, 1
        %s1243 = smul.addr %s1242, 128
        %s1244 = scalar_lea.vmem [#allocation3], %s1243
        // Predicated region
        $region60: #{single_scale_generator.11} parent=50 // pred_check
          %p1245 = pneg %p103
        $region61: #{single_scale_generator.11} parent=50 // pred_check_branch
          %1247 = sbr.rel (%p1245) target = $region63
        $region62: #{single_scale_generator.11} parent=50 // pred_region
          %s1248 = smul.u32 4, %s17
          %s1249 = smul.addr %s1248, 8
          %s1250 = scalar_lea.vmem %s3, %s1249
          // Predicated region
          $region64: #{single_scale_generator.11} parent=62 // pred_check
            _
          $region65: #{single_scale_generator.11} parent=62 // pred_check_branch
            %1252 = sbr.rel (0) target = $region67
          $region66: #{single_scale_generator.11} parent=62 // pred_region
            // Predicated region
            $region68: #{single_scale_generator.11} parent=66 // pred_check
              _
            $region69: #{single_scale_generator.11} parent=66 // pred_check_branch
              %1254 = sbr.rel (0) target = $region71
            $region70: #{single_scale_generator.11} parent=66 // pred_region
              loop: start=0, step=1, limit=1
              $region72: #{single_scale_generator.11} parent=70 // loop_pre_header
                _
              $region73: #{single_scale_generator.11} parent=70 // loop_header
                %s1256 = sphi 0, %s1260
                %p1257 = scmp.ge.s32.totalorder %s1256, 1
                %s1261 = sphi %s1244, %s1244
                %s1262 = sphi %s1250, %s1250
              $region74: #{single_scale_generator.11} parent=70 // loop_header_branch
                %1259 = sbr.rel (%p1257) target = $region78
              $region75: #{single_scale_generator.11} parent=70 // loop_body
                %v1263 = vld [vmem:[%s1261] sm:$0xff]
                %1264 = vst [vmem:[%s1262] sm:$0xff] %v1263
                %v1265 = vld [vmem:[%s1261 + $0x8] sm:$0xff]
                %1266 = vst [vmem:[%s1262 + $0x8] sm:$0xff] %v1265
                %v1267 = vld [vmem:[%s1261 + $0x10] sm:$0xff]
                %1268 = vst [vmem:[%s1262 + $0x10] sm:$0xff] %v1267
                %v1269 = vld [vmem:[%s1261 + $0x18] sm:$0xff]
                %1270 = vst [vmem:[%s1262 + $0x18] sm:$0xff] %v1269
                %v1271 = vld [vmem:[%s1261 + $0x20] sm:$0xff]
                %1272 = vst [vmem:[%s1262 + $0x40] sm:$0xff] %v1271
                %v1273 = vld [vmem:[%s1261 + $0x28] sm:$0xff]
                %1274 = vst [vmem:[%s1262 + $0x48] sm:$0xff] %v1273
                %v1275 = vld [vmem:[%s1261 + $0x30] sm:$0xff]
                %1276 = vst [vmem:[%s1262 + $0x50] sm:$0xff] %v1275
                %v1277 = vld [vmem:[%s1261 + $0x38] sm:$0xff]
                %1278 = vst [vmem:[%s1262 + $0x58] sm:$0xff] %v1277
                %v1279 = vld [vmem:[%s1261 + $0x40] sm:$0xff]
                %1280 = vst [vmem:[%s1262 + $0x80] sm:$0xff] %v1279
                %v1281 = vld [vmem:[%s1261 + $0x48] sm:$0xff]
                %1282 = vst [vmem:[%s1262 + $0x88] sm:$0xff] %v1281
                %v1283 = vld [vmem:[%s1261 + $0x50] sm:$0xff]
                %1284 = vst [vmem:[%s1262 + $0x90] sm:$0xff] %v1283
                %v1285 = vld [vmem:[%s1261 + $0x58] sm:$0xff]
                %1286 = vst [vmem:[%s1262 + $0x98] sm:$0xff] %v1285
                %v1287 = vld [vmem:[%s1261 + $0x60] sm:$0xff]
                %1288 = vst [vmem:[%s1262 + $0xc0] sm:$0xff] %v1287
                %v1289 = vld [vmem:[%s1261 + $0x68] sm:$0xff]
                %1290 = vst [vmem:[%s1262 + $0xc8] sm:$0xff] %v1289
                %v1291 = vld [vmem:[%s1261 + $0x70] sm:$0xff]
                %1292 = vst [vmem:[%s1262 + $0xd0] sm:$0xff] %v1291
                %v1293 = vld [vmem:[%s1261 + $0x78] sm:$0xff]
                %1294 = vst [vmem:[%s1262 + $0xd8] sm:$0xff] %v1293
              $region76: #{single_scale_generator.11} parent=70 // loop_footer
                %s1260 = sadd.s32 1, %s1256
              $region77: #{single_scale_generator.11} parent=70 // loop_footer_branch
                %1255 = sbr.rel target = $region73
              $region78: #{single_scale_generator.11} parent=70 // loop_exit
                _
            $region71: #{single_scale_generator.11} parent=66 // pred_fallthru
              _
            // Predicated region
            $region79: #{single_scale_generator.11} parent=66 // pred_check
              _
            $region80: #{single_scale_generator.11} parent=66 // pred_check_branch
              %1296 = sbr.rel target = $region82
            $region81: #{single_scale_generator.11} parent=66 // pred_region
              _
            $region82: #{single_scale_generator.11} parent=66 // pred_fallthru
              _
          $region67: #{single_scale_generator.11} parent=62 // pred_fallthru
            _
          %1297 = vnop
        $region63: #{single_scale_generator.11} parent=50 // pred_fallthru
          _
        // Predicated region
        $region83: #{single_scale_generator.11} parent=50 // pred_check
          %p1298 = pneg %p124
        $region84: #{single_scale_generator.11} parent=50 // pred_check_branch
          %1300 = sbr.rel (%p1298) target = $region86
        $region85: #{single_scale_generator.11} parent=50 // pred_region
          _
        $region86: #{single_scale_generator.11} parent=50 // pred_fallthru
          _
        // Predicated region
        $region87: #{single_scale_generator.11} parent=50 // pred_check
          %p1301 = pneg %p145
        $region88: #{single_scale_generator.11} parent=50 // pred_check_branch
          %1303 = sbr.rel (%p1301) target = $region90
        $region89: #{single_scale_generator.11} parent=50 // pred_region
          _
        $region90: #{single_scale_generator.11} parent=50 // pred_fallthru
          _
        // Predicated region
        $region91: #{single_scale_generator.11} parent=50 // pred_check
          %p1304 = pneg %p124
        $region92: #{single_scale_generator.11} parent=50 // pred_check_branch
          %1306 = sbr.rel (%p1304) target = $region94
        $region93: #{single_scale_generator.11} parent=50 // pred_region
          _
        $region94: #{single_scale_generator.11} parent=50 // pred_fallthru
          _
        // Predicated region
        $region95: #{single_scale_generator.11} parent=50 // pred_check
          %p1307 = pneg %p145
        $region96: #{single_scale_generator.11} parent=50 // pred_check_branch
          %1309 = sbr.rel (%p1307) target = $region98
        $region97: #{single_scale_generator.11} parent=50 // pred_region
          _
        $region98: #{single_scale_generator.11} parent=50 // pred_fallthru
          _
      $region51: #{single_scale_generator.11} parent=5 // pred_fallthru
        _
      %p1310 = scmp.le.s32.totalorder 2, %s12
      // Predicated region
      $region99: #{single_scale_generator.11} parent=5 // pred_check
        %p1311 = pneg %p1310
      $region100: #{single_scale_generator.11} parent=5 // pred_check_branch
        %1313 = sbr.rel (%p1311) target = $region102
      $region101: #{single_scale_generator.11} parent=5 // pred_region
        %s1314 = ssub.s32 %s12, 2
        // Predicated region
        $region103: #{single_scale_generator.11} parent=101 // pred_check
          %p1315 = pneg %p109
        $region104: #{single_scale_generator.11} parent=101 // pred_check_branch
          %1317 = sbr.rel (%p1315) target = $region106
        $region105: #{single_scale_generator.11} parent=101 // pred_region
          %s1318 = sand.u32 %s94, 1
          %s1319 = sand.u32 %s94, 1
          %s1320 = smul.addr %s1319, 128
          %s1321 = scalar_lea.vmem [#allocation3], %s1320
        $region106: #{single_scale_generator.11} parent=101 // pred_fallthru
          _
      $region102: #{single_scale_generator.11} parent=5 // pred_fallthru
        _
    $region6: #{single_scale_generator.11} parent=1 // loop_footer
      %s16 = sadd.s32 1, %s12
    $region7: #{single_scale_generator.11} parent=1 // loop_footer_branch
      %11 = sbr.rel target = $region3
    $region8: #{single_scale_generator.11} parent=1 // loop_exit
      _

// kernel: single_scale_generator.17
$region0: #{single_scale_generator.17}
  #allocation0 [shape = 'u32[]', space=smem, size = 0x4, offset = 0x4, fixed_abs, tag = 'smem constant byte address 0x4 - core index']
  #allocation1 [shape = 'u32[144,128]{1,0:T(1,128)}', space=vmem, size = 0x12000, scoped, tag = 'internal scratch']
  %s0 = inlined_call_operand.vmem [shape: bf16[288,1024], index: 0, kind: input, shape index: {}]
  %s1 = inlined_call_operand.vmem [shape: bf16[3,288], index: 1, kind: input, shape index: {}]
  %s2 = inlined_call_operand.vmem [shape: f32[3,1], index: 2, kind: input, shape index: {}]
  %s3 = inlined_call_operand.vmem [shape: f32[3,1024], index: 3, kind: input, shape index: {}]
  %s4 = inlined_call_operand.vmem [shape: f32[3,1024], index: 4, kind: output, shape index: {}]
  %s5 = sld [smem:[#allocation0]]
  $region72: #{single_scale_generator.17} parent=0
    _
  %s7 = ssub.s32 1, %s5
  %s8 = scalar_select 0, %s7, %s5
  $region1: #{single_scale_generator.17} parent=0
    #allocation2 [shape = 'u8[589824]{0}', space=vmem, size = 0x90000, scoped, tag = 'input window, operand 0']
    loop: start=0, step=1, limit=4
    $region2: #{single_scale_generator.17} parent=1 // loop_pre_header
      _
    $region3: #{single_scale_generator.17} parent=1 // loop_header
      %s10 = sphi 0, %s14
      %p11 = scmp.ge.s32.totalorder %s10, 4
      %s20 = sphi 0, %s22
      %s23 = sphi 0, %s20
      %s24 = sphi 0, %s23
      %s40 = sphi 0, %s24
      %s44 = sphi 0, %s44
      %s46 = sphi 0, %s44
      %s47 = sphi 0, %s46
      %s61 = sphi 0, %s47
      %s65 = sphi 0, %s65
      %s67 = sphi 0, %s65
      %s68 = sphi 0, %s67
      %s82 = sphi 0, %s68
      %s88 = sphi 0, %s90
      %s91 = sphi 0, %s88
      %s92 = sphi 0, %s91
      %s108 = sphi 0, %s92
      %s114 = sphi 0, %s116
      %s117 = sphi 0, %s114
      %s118 = sphi 0, %s117
      %s134 = sphi 0, %s118
    $region4: #{single_scale_generator.17} parent=1 // loop_header_branch
      %13 = sbr.rel (%p11) target = $region8
    $region5: #{single_scale_generator.17} parent=1 // loop_body
      %s15 = ssub.s32 %s10, 1
      %s16 = ssub.s32 %s10, 2
      %s17 = sadd.s32 %s10, 1
      %s18 = ssub.s32 %s10, %s17
      %p19 = scmp.eq.s32.totalorder %s18, 0
      %s21 = sadd.s32 %s20, 1
      %s22 = scalar_select %p19, %s20, %s21
      %p25 = pneg %p19
      %p26 = scmp.eq.s32.totalorder %s10, 1
      %p27 = por %p25, %p26
      %p28 = scmp.ne.s32.totalorder %s20, %s23
      %p29 = scmp.eq.s32.totalorder %s10, 0
      %p30 = por %p28, %p29
      %p31 = scmp.ne.s32.totalorder %s20, %s23
      %p32 = scmp.eq.s32.totalorder %s15, 1
      %p33 = por %p31, %p32
      %p34 = scmp.ne.s32.totalorder %s23, %s24
      %p35 = scmp.eq.s32.totalorder %s15, 0
      %p36 = por %p34, %p35
      %p37 = scmp.ne.s32.totalorder %s23, %s24
      %p38 = scmp.eq.s32.totalorder %s16, 1
      %p39 = por %p37, %p38
      %p41 = scmp.ne.s32.totalorder %s24, %s40
      %p42 = scmp.eq.s32.totalorder %s16, 0
      %p43 = por %p41, %p42
      %s45 = sadd.s32 %s44, 1
      %p48 = scmp.eq.s32.totalorder %s10, 1
      %p49 = scmp.ne.s32.totalorder %s44, %s46
      %p50 = scmp.eq.s32.totalorder %s10, 0
      %p51 = por %p49, %p50
      %p52 = scmp.ne.s32.totalorder %s44, %s46
      %p53 = scmp.eq.s32.totalorder %s15, 1
      %p54 = por %p52, %p53
      %p55 = scmp.ne.s32.totalorder %s46, %s47
      %p56 = scmp.eq.s32.totalorder %s15, 0
      %p57 = por %p55, %p56
      %p58 = scmp.ne.s32.totalorder %s46, %s47
      %p59 = scmp.eq.s32.totalorder %s16, 1
      %p60 = por %p58, %p59
      %p62 = scmp.ne.s32.totalorder %s47, %s61
      %p63 = scmp.eq.s32.totalorder %s16, 0
      %p64 = por %p62, %p63
      %s66 = sadd.s32 %s65, 1
      %p69 = scmp.eq.s32.totalorder %s10, 1
      %p70 = scmp.ne.s32.totalorder %s65, %s67
      %p71 = scmp.eq.s32.totalorder %s10, 0
      %p72 = por %p70, %p71
      %p73 = scmp.ne.s32.totalorder %s65, %s67
      %p74 = scmp.eq.s32.totalorder %s15, 1
      %p75 = por %p73, %p74
      %p76 = scmp.ne.s32.totalorder %s67, %s68
      %p77 = scmp.eq.s32.totalorder %s15, 0
      %p78 = por %p76, %p77
      %p79 = scmp.ne.s32.totalorder %s67, %s68
      %p80 = scmp.eq.s32.totalorder %s16, 1
      %p81 = por %p79, %p80
      %p83 = scmp.ne.s32.totalorder %s68, %s82
      %p84 = scmp.eq.s32.totalorder %s16, 0
      %p85 = por %p83, %p84
      %s86 = ssub.s32 %s10, %s17
      %p87 = scmp.eq.s32.totalorder %s86, 0
      %s89 = sadd.s32 %s88, 1
      %s90 = scalar_select %p87, %s88, %s89
      %p93 = pneg %p87
      %p94 = scmp.eq.s32.totalorder %s10, 1
      %p95 = por %p93, %p94
      %p96 = scmp.ne.s32.totalorder %s88, %s91
      %p97 = scmp.eq.s32.totalorder %s10, 0
      %p98 = por %p96, %p97
      %p99 = scmp.ne.s32.totalorder %s88, %s91
      %p100 = scmp.eq.s32.totalorder %s15, 1
      %p101 = por %p99, %p100
      %p102 = scmp.ne.s32.totalorder %s91, %s92
      %p103 = scmp.eq.s32.totalorder %s15, 0
      %p104 = por %p102, %p103
      %p105 = scmp.ne.s32.totalorder %s91, %s92
      %p106 = scmp.eq.s32.totalorder %s16, 1
      %p107 = por %p105, %p106
      %p109 = scmp.ne.s32.totalorder %s92, %s108
      %p110 = scmp.eq.s32.totalorder %s16, 0
      %p111 = por %p109, %p110
      %s112 = ssub.s32 %s10, %s17
      %p113 = scmp.eq.s32.totalorder %s112, 0
      %s115 = sadd.s32 %s114, 1
      %s116 = scalar_select %p113, %s114, %s115
      %p119 = pneg %p113
      %p120 = scmp.eq.s32.totalorder %s10, 1
      %p121 = por %p119, %p120
      %p122 = scmp.ne.s32.totalorder %s114, %s117
      %p123 = scmp.eq.s32.totalorder %s10, 0
      %p124 = por %p122, %p123
      %p125 = scmp.ne.s32.totalorder %s114, %s117
      %p126 = scmp.eq.s32.totalorder %s15, 1
      %p127 = por %p125, %p126
      %p128 = scmp.ne.s32.totalorder %s117, %s118
      %p129 = scmp.eq.s32.totalorder %s15, 0
      %p130 = por %p128, %p129
      %p131 = scmp.ne.s32.totalorder %s117, %s118
      %p132 = scmp.eq.s32.totalorder %s16, 1
      %p133 = por %p131, %p132
      %p135 = scmp.ne.s32.totalorder %s118, %s134
      %p136 = scmp.eq.s32.totalorder %s16, 0
      %p137 = por %p135, %p136
      %p138 = scmp.le.s32.totalorder 1, %s10
      %p139 = scmp.lt.s32.totalorder %s10, 3
      %p140 = pnand %p138, %p139
      %p141 = pneg %p140
      // Predicated region
      $region9: #{single_scale_generator.17} parent=5 // pred_check
        _
      $region10: #{single_scale_generator.17} parent=5 // pred_check_branch
        %143 = sbr.rel (%p140) target = $region12
      $region11: #{single_scale_generator.17} parent=5 // pred_region
        %s144 = ssub.s32 %s10, 1
        // Predicated region
        $region13: #{single_scale_generator.17} parent=11 // pred_check
          %p145 = pneg %p57
        $region14: #{single_scale_generator.17} parent=11 // pred_check_branch
          %147 = sbr.rel (%p145) target = $region16
        $region15: #{single_scale_generator.17} parent=11 // pred_region
          _
        $region16: #{single_scale_generator.17} parent=11 // pred_fallthru
          _
        // Predicated region
        $region17: #{single_scale_generator.17} parent=11 // pred_check
          %p148 = pneg %p78
        $region18: #{single_scale_generator.17} parent=11 // pred_check_branch
          %150 = sbr.rel (%p148) target = $region20
        $region19: #{single_scale_generator.17} parent=11 // pred_region
          _
        $region20: #{single_scale_generator.17} parent=11 // pred_fallthru
          _
      $region12: #{single_scale_generator.17} parent=5 // pred_fallthru
        _
      %p151 = scmp.lt.s32.totalorder %s10, 2
      // Predicated region
      $region21: #{single_scale_generator.17} parent=5 // pred_check
        %p152 = pneg %p151
      $region22: #{single_scale_generator.17} parent=5 // pred_check_branch
        %154 = sbr.rel (%p152) target = $region24
      $region23: #{single_scale_generator.17} parent=5 // pred_region
        // Predicated region
        $region25: #{single_scale_generator.17} parent=23 // pred_check
          %p155 = pneg %p30
        $region26: #{single_scale_generator.17} parent=23 // pred_check_branch
          %157 = sbr.rel (%p155) target = $region28
        $region27: #{single_scale_generator.17} parent=23 // pred_region
          %s158 = sand.u32 %s20, 1
          %s159 = sand.u32 %s20, 1
          %s160 = smul.addr %s159, 576
          %s161 = scalar_lea.vmem [#allocation2], %s160
          %s162 = smul.u32 4, %s10
          %s163 = smul.addr %s162, 4
          %s164 = scalar_lea.vmem %s0, %s163
          // Predicated region
          $region29: #{single_scale_generator.17} parent=27 // pred_check
            _
          $region30: #{single_scale_generator.17} parent=27 // pred_check_branch
            %166 = sbr.rel (0) target = $region32
          $region31: #{single_scale_generator.17} parent=27 // pred_region
            // Predicated region
            $region33: #{single_scale_generator.17} parent=31 // pred_check
              _
            $region34: #{single_scale_generator.17} parent=31 // pred_check_branch
              %168 = sbr.rel (0) target = $region36
            $region35: #{single_scale_generator.17} parent=31 // pred_region
              loop: start=0, step=1, limit=1
              $region37: #{single_scale_generator.17} parent=35 // loop_pre_header
                _
              $region38: #{single_scale_generator.17} parent=35 // loop_header
                %s170 = sphi 0, %s174
                %p171 = scmp.ge.s32.totalorder %s170, 1
                %s175 = sphi %s164, %s164
                %s176 = sphi %s161, %s161
              $region39: #{single_scale_generator.17} parent=35 // loop_header_branch
                %173 = sbr.rel (%p171) target = $region43
              $region40: #{single_scale_generator.17} parent=35 // loop_body
                %v177 = vld [vmem:[%s175] sm:$0xff]
                %178 = vst [vmem:[%s176] sm:$0xff] %v177
                %v179 = vld [vmem:[%s175 + $0x8] sm:$0xff]
                %180 = vst [vmem:[%s176 + $0x8] sm:$0xff] %v179
                %v181 = vld [vmem:[%s175 + $0x20] sm:$0xff]
                %182 = vst [vmem:[%s176 + $0x10] sm:$0xff] %v181
                %v183 = vld [vmem:[%s175 + $0x28] sm:$0xff]
                %184 = vst [vmem:[%s176 + $0x18] sm:$0xff] %v183
                %v185 = vld [vmem:[%s175 + $0x40] sm:$0xff]
                %186 = vst [vmem:[%s176 + $0x20] sm:$0xff] %v185
                %v187 = vld [vmem:[%s175 + $0x48] sm:$0xff]
                %188 = vst [vmem:[%s176 + $0x28] sm:$0xff] %v187
                %v189 = vld [vmem:[%s175 + $0x60] sm:$0xff]
                %190 = vst [vmem:[%s176 + $0x30] sm:$0xff] %v189
                %v191 = vld [vmem:[%s175 + $0x68] sm:$0xff]
                %192 = vst [vmem:[%s176 + $0x38] sm:$0xff] %v191
                %v193 = vld [vmem:[%s175 + $0x80] sm:$0xff]
                %194 = vst [vmem:[%s176 + $0x40] sm:$0xff] %v193
                %v195 = vld [vmem:[%s175 + $0x88] sm:$0xff]
                %196 = vst [vmem:[%s176 + $0x48] sm:$0xff] %v195
                %v197 = vld [vmem:[%s175 + $0xa0] sm:$0xff]
                %198 = vst [vmem:[%s176 + $0x50] sm:$0xff] %v197
                %v199 = vld [vmem:[%s175 + $0xa8] sm:$0xff]
                %200 = vst [vmem:[%s176 + $0x58] sm:$0xff] %v199
                %v201 = vld [vmem:[%s175 + $0xc0] sm:$0xff]
                %202 = vst [vmem:[%s176 + $0x60] sm:$0xff] %v201
                %v203 = vld [vmem:[%s175 + $0xc8] sm:$0xff]
                %204 = vst [vmem:[%s176 + $0x68] sm:$0xff] %v203
                %v205 = vld [vmem:[%s175 + $0xe0] sm:$0xff]
                %206 = vst [vmem:[%s176 + $0x70] sm:$0xff] %v205
                %v207 = vld [vmem:[%s175 + $0xe8] sm:$0xff]
                %208 = vst [vmem:[%s176 + $0x78] sm:$0xff] %v207
                %v209 = vld [vmem:[%s175 + $0x100] sm:$0xff]
                %210 = vst [vmem:[%s176 + $0x80] sm:$0xff] %v209
                %v211 = vld [vmem:[%s175 + $0x108] sm:$0xff]
                %212 = vst [vmem:[%s176 + $0x88] sm:$0xff] %v211
                %v213 = vld [vmem:[%s175 + $0x120] sm:$0xff]
                %214 = vst [vmem:[%s176 + $0x90] sm:$0xff] %v213
                %v215 = vld [vmem:[%s175 + $0x128] sm:$0xff]
                %216 = vst [vmem:[%s176 + $0x98] sm:$0xff] %v215
                %v217 = vld [vmem:[%s175 + $0x140] sm:$0xff]
                %218 = vst [vmem:[%s176 + $0xa0] sm:$0xff] %v217
                %v219 = vld [vmem:[%s175 + $0x148] sm:$0xff]
                %220 = vst [vmem:[%s176 + $0xa8] sm:$0xff] %v219
                %v221 = vld [vmem:[%s175 + $0x160] sm:$0xff]
                %222 = vst [vmem:[%s176 + $0xb0] sm:$0xff] %v221
                %v223 = vld [vmem:[%s175 + $0x168] sm:$0xff]
                %224 = vst [vmem:[%s176 + $0xb8] sm:$0xff] %v223
                %v225 = vld [vmem:[%s175 + $0x180] sm:$0xff]
                %226 = vst [vmem:[%s176 + $0xc0] sm:$0xff] %v225
                %v227 = vld [vmem:[%s175 + $0x188] sm:$0xff]
                %228 = vst [vmem:[%s176 + $0xc8] sm:$0xff] %v227
                %v229 = vld [vmem:[%s175 + $0x1a0] sm:$0xff]
                %230 = vst [vmem:[%s176 + $0xd0] sm:$0xff] %v229
                %v231 = vld [vmem:[%s175 + $0x1a8] sm:$0xff]
                %232 = vst [vmem:[%s176 + $0xd8] sm:$0xff] %v231
                %v233 = vld [vmem:[%s175 + $0x1c0] sm:$0xff]
                %234 = vst [vmem:[%s176 + $0xe0] sm:$0xff] %v233
                %v235 = vld [vmem:[%s175 + $0x1c8] sm:$0xff]
                %236 = vst [vmem:[%s176 + $0xe8] sm:$0xff] %v235
                %v237 = vld [vmem:[%s175 + $0x1e0] sm:$0xff]
                %238 = vst [vmem:[%s176 + $0xf0] sm:$0xff] %v237
                %v239 = vld [vmem:[%s175 + $0x1e8] sm:$0xff]
                %240 = vst [vmem:[%s176 + $0xf8] sm:$0xff] %v239
                %v241 = vld [vmem:[%s175 + $0x200] sm:$0xff]
                %242 = vst [vmem:[%s176 + $0x100] sm:$0xff] %v241
                %v243 = vld [vmem:[%s175 + $0x208] sm:$0xff]
                %244 = vst [vmem:[%s176 + $0x108] sm:$0xff] %v243
                %v245 = vld [vmem:[%s175 + $0x220] sm:$0xff]
                %246 = vst [vmem:[%s176 + $0x110] sm:$0xff] %v245
                %v247 = vld [vmem:[%s175 + $0x228] sm:$0xff]
                %248 = vst [vmem:[%s176 + $0x118] sm:$0xff] %v247
                %v249 = vld [vmem:[%s175 + $0x240] sm:$0xff]
                %250 = vst [vmem:[%s176 + $0x120] sm:$0xff] %v249
                %v251 = vld [vmem:[%s175 + $0x248] sm:$0xff]
                %252 = vst [vmem:[%s176 + $0x128] sm:$0xff] %v251
                %v253 = vld [vmem:[%s175 + $0x260] sm:$0xff]
                %254 = vst [vmem:[%s176 + $0x130] sm:$0xff] %v253
                %v255 = vld [vmem:[%s175 + $0x268] sm:$0xff]
                %256 = vst [vmem:[%s176 + $0x138] sm:$0xff] %v255
                %v257 = vld [vmem:[%s175 + $0x280] sm:$0xff]
                %258 = vst [vmem:[%s176 + $0x140] sm:$0xff] %v257
                %v259 = vld [vmem:[%s175 + $0x288] sm:$0xff]
                %260 = vst [vmem:[%s176 + $0x148] sm:$0xff] %v259
                %v261 = vld [vmem:[%s175 + $0x2a0] sm:$0xff]
                %262 = vst [vmem:[%s176 + $0x150] sm:$0xff] %v261
                %v263 = vld [vmem:[%s175 + $0x2a8] sm:$0xff]
                %264 = vst [vmem:[%s176 + $0x158] sm:$0xff] %v263
                %v265 = vld [vmem:[%s175 + $0x2c0] sm:$0xff]
                %266 = vst [vmem:[%s176 + $0x160] sm:$0xff] %v265
                %v267 = vld [vmem:[%s175 + $0x2c8] sm:$0xff]
                %268 = vst [vmem:[%s176 + $0x168] sm:$0xff] %v267
                %v269 = vld [vmem:[%s175 + $0x2e0] sm:$0xff]
                %270 = vst [vmem:[%s176 + $0x170] sm:$0xff] %v269
                %v271 = vld [vmem:[%s175 + $0x2e8] sm:$0xff]
                %272 = vst [vmem:[%s176 + $0x178] sm:$0xff] %v271
                %v273 = vld [vmem:[%s175 + $0x300] sm:$0xff]
                %274 = vst [vmem:[%s176 + $0x180] sm:$0xff] %v273
                %v275 = vld [vmem:[%s175 + $0x308] sm:$0xff]
                %276 = vst [vmem:[%s176 + $0x188] sm:$0xff] %v275
                %v277 = vld [vmem:[%s175 + $0x320] sm:$0xff]
                %278 = vst [vmem:[%s176 + $0x190] sm:$0xff] %v277
                %v279 = vld [vmem:[%s175 + $0x328] sm:$0xff]
                %280 = vst [vmem:[%s176 + $0x198] sm:$0xff] %v279
                %v281 = vld [vmem:[%s175 + $0x340] sm:$0xff]
                %282 = vst [vmem:[%s176 + $0x1a0] sm:$0xff] %v281
                %v283 = vld [vmem:[%s175 + $0x348] sm:$0xff]
                %284 = vst [vmem:[%s176 + $0x1a8] sm:$0xff] %v283
                %v285 = vld [vmem:[%s175 + $0x360] sm:$0xff]
                %286 = vst [vmem:[%s176 + $0x1b0] sm:$0xff] %v285
                %v287 = vld [vmem:[%s175 + $0x368] sm:$0xff]
                %288 = vst [vmem:[%s176 + $0x1b8] sm:$0xff] %v287
                %v289 = vld [vmem:[%s175 + $0x380] sm:$0xff]
                %290 = vst [vmem:[%s176 + $0x1c0] sm:$0xff] %v289
                %v291 = vld [vmem:[%s175 + $0x388] sm:$0xff]
                %292 = vst [vmem:[%s176 + $0x1c8] sm:$0xff] %v291
                %v293 = vld [vmem:[%s175 + $0x3a0] sm:$0xff]
                %294 = vst [vmem:[%s176 + $0x1d0] sm:$0xff] %v293
                %v295 = vld [vmem:[%s175 + $0x3a8] sm:$0xff]
                %296 = vst [vmem:[%s176 + $0x1d8] sm:$0xff] %v295
                %v297 = vld [vmem:[%s175 + $0x3c0] sm:$0xff]
                %298 = vst [vmem:[%s176 + $0x1e0] sm:$0xff] %v297
                %v299 = vld [vmem:[%s175 + $0x3c8] sm:$0xff]
                %300 = vst [vmem:[%s176 + $0x1e8] sm:$0xff] %v299
                %v301 = vld [vmem:[%s175 + $0x3e0] sm:$0xff]
                %302 = vst [vmem:[%s176 + $0x1f0] sm:$0xff] %v301
                %v303 = vld [vmem:[%s175 + $0x3e8] sm:$0xff]
                %304 = vst [vmem:[%s176 + $0x1f8] sm:$0xff] %v303
                %v305 = vld [vmem:[%s175 + $0x400] sm:$0xff]
                %306 = vst [vmem:[%s176 + $0x200] sm:$0xff] %v305
                %v307 = vld [vmem:[%s175 + $0x408] sm:$0xff]
                %308 = vst [vmem:[%s176 + $0x208] sm:$0xff] %v307
                %v309 = vld [vmem:[%s175 + $0x420] sm:$0xff]
                %310 = vst [vmem:[%s176 + $0x210] sm:$0xff] %v309
                %v311 = vld [vmem:[%s175 + $0x428] sm:$0xff]
                %312 = vst [vmem:[%s176 + $0x218] sm:$0xff] %v311
                %v313 = vld [vmem:[%s175 + $0x440] sm:$0xff]
                %314 = vst [vmem:[%s176 + $0x220] sm:$0xff] %v313
                %v315 = vld [vmem:[%s175 + $0x448] sm:$0xff]
                %316 = vst [vmem:[%s176 + $0x228] sm:$0xff] %v315
                %v317 = vld [vmem:[%s175 + $0x460] sm:$0xff]
                %318 = vst [vmem:[%s176 + $0x230] sm:$0xff] %v317
                %v319 = vld [vmem:[%s175 + $0x468] sm:$0xff]
                %320 = vst [vmem:[%s176 + $0x238] sm:$0xff] %v319
              $region41: #{single_scale_generator.17} parent=35 // loop_footer
                %s174 = sadd.s32 1, %s170
              $region42: #{single_scale_generator.17} parent=35 // loop_footer_branch
                %169 = sbr.rel target = $region38
              $region43: #{single_scale_generator.17} parent=35 // loop_exit
                _
            $region36: #{single_scale_generator.17} parent=31 // pred_fallthru
              _
            // Predicated region
            $region44: #{single_scale_generator.17} parent=31 // pred_check
              _
            $region45: #{single_scale_generator.17} parent=31 // pred_check_branch
              %322 = sbr.rel target = $region47
            $region46: #{single_scale_generator.17} parent=31 // pred_region
              _
            $region47: #{single_scale_generator.17} parent=31 // pred_fallthru
              _
          $region32: #{single_scale_generator.17} parent=27 // pred_fallthru
            _
          %323 = vnop
        $region28: #{single_scale_generator.17} parent=23 // pred_fallthru
          _
        // Predicated region
        $region48: #{single_scale_generator.17} parent=23 // pred_check
          %p324 = pneg %p98
        $region49: #{single_scale_generator.17} parent=23 // pred_check_branch
          %326 = sbr.rel (%p324) target = $region51
        $region50: #{single_scale_generator.17} parent=23 // pred_region
          %s327 = smul.u32 4, %s10
          %p328 = scmp.lt.s32.totalorder %s327, 7
          %s329 = scalar_select %p328, %s327, 7
          %s330 = smul.addr %s329, 4
          %s331 = scalar_lea.vmem %s3, %s330
          %s332 = smul.u32 4, %s10
        $region51: #{single_scale_generator.17} parent=23 // pred_fallthru
          _
      $region24: #{single_scale_generator.17} parent=5 // pred_fallthru
        _
      %p333 = scmp.le.s32.totalorder 1, %s10
      %p334 = scmp.lt.s32.totalorder %s10, 3
      %p335 = pnand %p333, %p334
      %p336 = pneg %p335
      // Predicated region
      $region52: #{single_scale_generator.17} parent=5 // pred_check
        _
      $region53: #{single_scale_generator.17} parent=5 // pred_check_branch
        %338 = sbr.rel (%p335) target = $region55
      $region54: #{single_scale_generator.17} parent=5 // pred_region
        %s339 = ssub.s32 %s10, 1
        %s340 = sand.u32 %s23, 1
        %s341 = sand.u32 %s23, 1
        %s342 = smul.addr %s341, 576
        %s343 = scalar_lea.vmem [#allocation2], %s342
        // Predicated region
        $region56: #{single_scale_generator.17} parent=54 // pred_check
          %p344 = pneg %p36
        $region57: #{single_scale_generator.17} parent=54 // pred_check_branch
          %346 = sbr.rel (%p344) target = $region59
        $region58: #{single_scale_generator.17} parent=54 // pred_region
          _
        $region59: #{single_scale_generator.17} parent=54 // pred_fallthru
          _
        %s347 = sand.u32 %s23, 1
        %s348 = sand.u32 %s23, 1
        %s349 = smul.addr %s348, 576
        %s350 = scalar_lea.vmem [#allocation2], %s349
        %p351 = pneg %p36
        %p352 = pneg %p33
        %p353 = pneg %p57
        %p354 = pneg %p54
        %p355 = pneg %p78
        %p356 = pneg %p75
        %s357 = smul.u32 4, %s15
        %p358 = scmp.lt.s32.totalorder %s357, 7
        %s359 = scalar_select %p358, %s357, 7
        %s360 = smul.addr %s359, 4
        %s361 = scalar_lea.vmem %s3, %s360
        %p362 = pneg %p104
        %p363 = pneg %p101
        %p364 = pneg %p130
        %p365 = pneg %p127
        %s366 = smul.u32 4, %s15
        %p367 = scmp.lt.s32.totalorder %s366, 7
        %s368 = scalar_select %p367, %s366, 7
        %s369 = smul.addr %s368, 4
        %s370 = scalar_lea.vmem %s4, %s369
        %s371 = smul.u32 4, %s15
        %s372 = smul.u32 4, %s15
        %p373 = scmp.lt.s32.totalorder %s372, 7
        %s374 = scalar_select %p373, %s372, 7
        %s375 = smul.addr %s374, 4
        %s376 = scalar_lea.vmem %s3, %s375
        %s377 = smul.u32 4, %s15
        %s378 = smul.u32 4, %s15
        %p379 = scmp.lt.s32.totalorder %s378, 7
        %s380 = scalar_select %p379, %s378, 7
        %s381 = smul.addr %s380, 4
        %s382 = scalar_lea.vmem %s4, %s381
        %s383 = smul.u32 4, %s15
        %v385 = vld [vmem:[%s1] sm:$0x3f]
        %v386 = vld [vmem:[%s343] sm:$0xff]
        %v387 = vld [vmem:[%s343 + $0x8] sm:$0xff]
        %v388 = vld [vmem:[%s343 + $0x10] sm:$0xff]
        %v389 = vld [vmem:[%s343 + $0x18] sm:$0xff]
        %v390 = vld [vmem:[%s343 + $0x20] sm:$0xff]
        %v391 = vld [vmem:[%s343 + $0x28] sm:$0xff]
        %v392 = vld [vmem:[%s343 + $0x30] sm:$0xff]
        %v393 = vld [vmem:[%s343 + $0x38] sm:$0xff]
        %v394 = vld [vmem:[%s343 + $0x40] sm:$0xff]
        %v395 = vld [vmem:[%s343 + $0x48] sm:$0xff]
        %v396 = vld [vmem:[%s343 + $0x50] sm:$0xff]
        %v397 = vld [vmem:[%s343 + $0x58] sm:$0xff]
        %v398 = vld [vmem:[%s343 + $0x60] sm:$0xff]
        %v399 = vld [vmem:[%s343 + $0x68] sm:$0xff]
        %v400 = vld [vmem:[%s343 + $0x70] sm:$0xff]
        %v401 = vld [vmem:[%s343 + $0x78] sm:$0xff]
        %v402 = vld [vmem:[%s343 + $0x80] sm:$0xff]
        %v403 = vld [vmem:[%s343 + $0x88] sm:$0xff]
        %v404 = vld [vmem:[%s343 + $0x90] sm:$0xff]
        %v405 = vld [vmem:[%s343 + $0x98] sm:$0xff]
        %v406 = vld [vmem:[%s343 + $0xa0] sm:$0xff]
        %v407 = vld [vmem:[%s343 + $0xa8] sm:$0xff]
        %v408 = vld [vmem:[%s343 + $0xb0] sm:$0xff]
        %v409 = vld [vmem:[%s343 + $0xb8] sm:$0xff]
        %v410 = vld [vmem:[%s343 + $0xc0] sm:$0xff]
        %v411 = vld [vmem:[%s343 + $0xc8] sm:$0xff]
        %v412 = vld [vmem:[%s343 + $0xd0] sm:$0xff]
        %v413 = vld [vmem:[%s343 + $0xd8] sm:$0xff]
        %v414 = vld [vmem:[%s343 + $0xe0] sm:$0xff]
        %v415 = vld [vmem:[%s343 + $0xe8] sm:$0xff]
        %v416 = vld [vmem:[%s343 + $0xf0] sm:$0xff]
        %v417 = vld [vmem:[%s343 + $0xf8] sm:$0xff]
        %v418 = vld [vmem:[%s343 + $0x100] sm:$0xff]
        %v419 = vld [vmem:[%s343 + $0x108] sm:$0xff]
        %v420 = vld [vmem:[%s343 + $0x110] sm:$0xff]
        %v421 = vld [vmem:[%s343 + $0x118] sm:$0xff]
        %v422 = vld [vmem:[%s343 + $0x120] sm:$0xff]
        %v423 = vld [vmem:[%s343 + $0x128] sm:$0xff]
        %v424 = vld [vmem:[%s343 + $0x130] sm:$0xff]
        %v425 = vld [vmem:[%s343 + $0x138] sm:$0xff]
        %v426 = vld [vmem:[%s343 + $0x140] sm:$0xff]
        %v427 = vld [vmem:[%s343 + $0x148] sm:$0xff]
        %v428 = vld [vmem:[%s343 + $0x150] sm:$0xff]
        %v429 = vld [vmem:[%s343 + $0x158] sm:$0xff]
        %v430 = vld [vmem:[%s343 + $0x160] sm:$0xff]
        %v431 = vld [vmem:[%s343 + $0x168] sm:$0xff]
        %v432 = vld [vmem:[%s343 + $0x170] sm:$0xff]
        %v433 = vld [vmem:[%s343 + $0x178] sm:$0xff]
        %v434 = vld [vmem:[%s343 + $0x180] sm:$0xff]
        %v435 = vld [vmem:[%s343 + $0x188] sm:$0xff]
        %v436 = vld [vmem:[%s343 + $0x190] sm:$0xff]
        %v437 = vld [vmem:[%s343 + $0x198] sm:$0xff]
        %v438 = vld [vmem:[%s343 + $0x1a0] sm:$0xff]
        %v439 = vld [vmem:[%s343 + $0x1a8] sm:$0xff]
        %v440 = vld [vmem:[%s343 + $0x1b0] sm:$0xff]
        %v441 = vld [vmem:[%s343 + $0x1b8] sm:$0xff]
        %v442 = vld [vmem:[%s343 + $0x1c0] sm:$0xff]
        %v443 = vld [vmem:[%s343 + $0x1c8] sm:$0xff]
        %v444 = vld [vmem:[%s343 + $0x1d0] sm:$0xff]
        %v445 = vld [vmem:[%s343 + $0x1d8] sm:$0xff]
        %v446 = vld [vmem:[%s343 + $0x1e0] sm:$0xff]
        %v447 = vld [vmem:[%s343 + $0x1e8] sm:$0xff]
        %v448 = vld [vmem:[%s343 + $0x1f0] sm:$0xff]
        %v449 = vld [vmem:[%s343 + $0x1f8] sm:$0xff]
        %v450 = vld [vmem:[%s343 + $0x200] sm:$0xff]
        %v451 = vld [vmem:[%s343 + $0x208] sm:$0xff]
        %v452 = vld [vmem:[%s343 + $0x210] sm:$0xff]
        %v453 = vld [vmem:[%s343 + $0x218] sm:$0xff]
        %v454 = vld [vmem:[%s343 + $0x220] sm:$0xff]
        %v455 = vld [vmem:[%s343 + $0x228] sm:$0xff]
        %v456 = vld [vmem:[%s343 + $0x230] sm:$0xff]
        %v457 = vld [vmem:[%s343 + $0x238] sm:$0xff]
        %v458 = vld [vmem:[%s2] sm:$0x7]
        %460 = vset.pattern.permute.xlu0 0
        %461 = vperm.xlu0 %460, %v458
        %v462 = vpop.permute.xlu0 %461
        %v465 = vcombine.high %v385, %v385
        %v467 = vunpack.c.l.s4 1983009808
        %v468 = vunpack.c.0.s8 %v467
        %v469 = vlaneseq
        %v470 = vshrl.u32 %v469, 7
        %v471 = vsub.s32 %v468, %v470
        %v472 = vrot.slane %v385, %v471
        %v474 = vunpack.c.l.s4 1983009808
        %v475 = vunpack.c.0.s8 %v474
        %v476 = vlaneseq
        %v477 = vshrl.u32 %v476, 7
        %v478 = vsub.s32 %v475, %v477
        %v479 = vrot.slane %v465, %v478
        %v480 = vcombine.high %v472, %v472
        %v555 = vunpack.c.l.b16 %v386
        %v556 = vunpack.c.h.b16 %v386
        %v557 = vunpack.c.l.b16 %v387
        %v558 = vunpack.c.h.b16 %v387
        %v559 = vunpack.c.l.b16 %v388
        %v560 = vunpack.c.h.b16 %v388
        %v561 = vunpack.c.l.b16 %v389
        %v562 = vunpack.c.h.b16 %v389
        %v563 = vunpack.c.l.b16 %v390
        %v564 = vunpack.c.h.b16 %v390
        %v565 = vunpack.c.l.b16 %v391
        %v566 = vunpack.c.h.b16 %v391
        %v567 = vunpack.c.l.b16 %v392
        %v568 = vunpack.c.h.b16 %v392
        %v569 = vunpack.c.l.b16 %v393
        %v570 = vunpack.c.h.b16 %v393
        %v571 = vunpack.c.l.b16 %v394
        %v572 = vunpack.c.h.b16 %v394
        %v573 = vunpack.c.l.b16 %v395
        %v574 = vunpack.c.h.b16 %v395
        %v575 = vunpack.c.l.b16 %v396
        %v576 = vunpack.c.h.b16 %v396
        %v577 = vunpack.c.l.b16 %v397
        %v578 = vunpack.c.h.b16 %v397
        %v579 = vunpack.c.l.b16 %v398
        %v580 = vunpack.c.h.b16 %v398
        %v581 = vunpack.c.l.b16 %v399
        %v582 = vunpack.c.h.b16 %v399
        %v583 = vunpack.c.l.b16 %v400
        %v584 = vunpack.c.h.b16 %v400
        %v585 = vunpack.c.l.b16 %v401
        %v586 = vunpack.c.h.b16 %v401
        %v587 = vunpack.c.l.b16 %v402
        %v588 = vunpack.c.h.b16 %v402
        %v589 = vunpack.c.l.b16 %v403
        %v590 = vunpack.c.h.b16 %v403
        %v591 = vunpack.c.l.b16 %v404
        %v592 = vunpack.c.h.b16 %v404
        %v593 = vunpack.c.l.b16 %v405
        %v594 = vunpack.c.h.b16 %v405
        %v595 = vunpack.c.l.b16 %v406
        %v596 = vunpack.c.h.b16 %v406
        %v597 = vunpack.c.l.b16 %v407
        %v598 = vunpack.c.h.b16 %v407
        %v599 = vunpack.c.l.b16 %v408
        %v600 = vunpack.c.h.b16 %v408
        %v601 = vunpack.c.l.b16 %v409
        %v602 = vunpack.c.h.b16 %v409
        %v603 = vunpack.c.l.b16 %v410
        %v604 = vunpack.c.h.b16 %v410
        %v605 = vunpack.c.l.b16 %v411
        %v606 = vunpack.c.h.b16 %v411
        %v607 = vunpack.c.l.b16 %v412
        %v608 = vunpack.c.h.b16 %v412
        %v609 = vunpack.c.l.b16 %v413
        %v610 = vunpack.c.h.b16 %v413
        %v611 = vunpack.c.l.b16 %v414
        %v612 = vunpack.c.h.b16 %v414
        %v613 = vunpack.c.l.b16 %v415
        %v614 = vunpack.c.h.b16 %v415
        %v615 = vunpack.c.l.b16 %v416
        %v616 = vunpack.c.h.b16 %v416
        %v617 = vunpack.c.l.b16 %v417
        %v618 = vunpack.c.h.b16 %v417
        %v619 = vunpack.c.l.b16 %v418
        %v620 = vunpack.c.h.b16 %v418
        %v621 = vunpack.c.l.b16 %v419
        %v622 = vunpack.c.h.b16 %v419
        %v623 = vunpack.c.l.b16 %v420
        %v624 = vunpack.c.h.b16 %v420
        %v625 = vunpack.c.l.b16 %v421
        %v626 = vunpack.c.h.b16 %v421
        %v627 = vunpack.c.l.b16 %v422
        %v628 = vunpack.c.h.b16 %v422
        %v629 = vunpack.c.l.b16 %v423
        %v630 = vunpack.c.h.b16 %v423
        %v631 = vunpack.c.l.b16 %v424
        %v632 = vunpack.c.h.b16 %v424
        %v633 = vunpack.c.l.b16 %v425
        %v634 = vunpack.c.h.b16 %v425
        %v635 = vunpack.c.l.b16 %v426
        %v636 = vunpack.c.h.b16 %v426
        %v637 = vunpack.c.l.b16 %v427
        %v638 = vunpack.c.h.b16 %v427
        %v639 = vunpack.c.l.b16 %v428
        %v640 = vunpack.c.h.b16 %v428
        %v641 = vunpack.c.l.b16 %v429
        %v642 = vunpack.c.h.b16 %v429
        %v643 = vunpack.c.l.b16 %v430
        %v644 = vunpack.c.h.b16 %v430
        %v645 = vunpack.c.l.b16 %v431
        %v646 = vunpack.c.h.b16 %v431
        %v647 = vunpack.c.l.b16 %v432
        %v648 = vunpack.c.h.b16 %v432
        %v649 = vunpack.c.l.b16 %v433
        %v650 = vunpack.c.h.b16 %v433
        %v651 = vunpack.c.l.b16 %v434
        %v652 = vunpack.c.h.b16 %v434
        %v653 = vunpack.c.l.b16 %v435
        %v654 = vunpack.c.h.b16 %v435
        %v655 = vunpack.c.l.b16 %v436
        %v656 = vunpack.c.h.b16 %v436
        %v657 = vunpack.c.l.b16 %v437
        %v658 = vunpack.c.h.b16 %v437
        %v659 = vunpack.c.l.b16 %v438
        %v660 = vunpack.c.h.b16 %v438
        %v661 = vunpack.c.l.b16 %v439
        %v662 = vunpack.c.h.b16 %v439
        %v663 = vunpack.c.l.b16 %v440
        %v664 = vunpack.c.h.b16 %v440
        %v665 = vunpack.c.l.b16 %v441
        %v666 = vunpack.c.h.b16 %v441
        %v667 = vunpack.c.l.b16 %v442
        %v668 = vunpack.c.h.b16 %v442
        %v669 = vunpack.c.l.b16 %v443
        %v670 = vunpack.c.h.b16 %v443
        %v671 = vunpack.c.l.b16 %v444
        %v672 = vunpack.c.h.b16 %v444
        %v673 = vunpack.c.l.b16 %v445
        %v674 = vunpack.c.h.b16 %v445
        %v675 = vunpack.c.l.b16 %v446
        %v676 = vunpack.c.h.b16 %v446
        %v677 = vunpack.c.l.b16 %v447
        %v678 = vunpack.c.h.b16 %v447
        %v679 = vunpack.c.l.b16 %v448
        %v680 = vunpack.c.h.b16 %v448
        %v681 = vunpack.c.l.b16 %v449
        %v682 = vunpack.c.h.b16 %v449
        %v683 = vunpack.c.l.b16 %v450
        %v684 = vunpack.c.h.b16 %v450
        %v685 = vunpack.c.l.b16 %v451
        %v686 = vunpack.c.h.b16 %v451
        %v687 = vunpack.c.l.b16 %v452
        %v688 = vunpack.c.h.b16 %v452
        %v689 = vunpack.c.l.b16 %v453
        %v690 = vunpack.c.h.b16 %v453
        %v691 = vunpack.c.l.b16 %v454
        %v692 = vunpack.c.h.b16 %v454
        %v693 = vunpack.c.l.b16 %v455
        %v694 = vunpack.c.h.b16 %v455
        %v695 = vunpack.c.l.b16 %v456
        %v696 = vunpack.c.h.b16 %v456
        %v697 = vunpack.c.l.b16 %v457
        %v698 = vunpack.c.h.b16 %v457
        %v699 = vpack.c.b16 %v559, %v555
        %v700 = vpack.c.b16 %v560, %v556
        %v701 = vpack.c.b16 %v561, %v557
        %v702 = vpack.c.b16 %v562, %v558
        %v703 = vpack.c.b16 %v567, %v563
        %v704 = vpack.c.b16 %v568, %v564
        %v705 = vpack.c.b16 %v569, %v565
        %v706 = vpack.c.b16 %v570, %v566
        %v707 = vpack.c.b16 %v575, %v571
        %v708 = vpack.c.b16 %v576, %v572
        %v709 = vpack.c.b16 %v577, %v573
        %v710 = vpack.c.b16 %v578, %v574
        %v711 = vpack.c.b16 %v583, %v579
        %v712 = vpack.c.b16 %v584, %v580
        %v713 = vpack.c.b16 %v585, %v581
        %v714 = vpack.c.b16 %v586, %v582
        %v715 = vpack.c.b16 %v591, %v587
        %v716 = vpack.c.b16 %v592, %v588
        %v717 = vpack.c.b16 %v593, %v589
        %v718 = vpack.c.b16 %v594, %v590
        %v719 = vpack.c.b16 %v599, %v595
        %v720 = vpack.c.b16 %v600, %v596
        %v721 = vpack.c.b16 %v601, %v597
        %v722 = vpack.c.b16 %v602, %v598
        %v723 = vpack.c.b16 %v607, %v603
        %v724 = vpack.c.b16 %v608, %v604
        %v725 = vpack.c.b16 %v609, %v605
        %v726 = vpack.c.b16 %v610, %v606
        %v727 = vpack.c.b16 %v615, %v611
        %v728 = vpack.c.b16 %v616, %v612
        %v729 = vpack.c.b16 %v617, %v613
        %v730 = vpack.c.b16 %v618, %v614
        %v731 = vpack.c.b16 %v623, %v619
        %v732 = vpack.c.b16 %v624, %v620
        %v733 = vpack.c.b16 %v625, %v621
        %v734 = vpack.c.b16 %v626, %v622
        %v735 = vpack.c.b16 %v631, %v627
        %v736 = vpack.c.b16 %v632, %v628
        %v737 = vpack.c.b16 %v633, %v629
        %v738 = vpack.c.b16 %v634, %v630
        %v739 = vpack.c.b16 %v639, %v635
        %v740 = vpack.c.b16 %v640, %v636
        %v741 = vpack.c.b16 %v641, %v637
        %v742 = vpack.c.b16 %v642, %v638
        %v743 = vpack.c.b16 %v647, %v643
        %v744 = vpack.c.b16 %v648, %v644
        %v745 = vpack.c.b16 %v649, %v645
        %v746 = vpack.c.b16 %v650, %v646
        %v747 = vpack.c.b16 %v655, %v651
        %v748 = vpack.c.b16 %v656, %v652
        %v749 = vpack.c.b16 %v657, %v653
        %v750 = vpack.c.b16 %v658, %v654
        %v751 = vpack.c.b16 %v663, %v659
        %v752 = vpack.c.b16 %v664, %v660
        %v753 = vpack.c.b16 %v665, %v661
        %v754 = vpack.c.b16 %v666, %v662
        %v755 = vpack.c.b16 %v671, %v667
        %v756 = vpack.c.b16 %v672, %v668
        %v757 = vpack.c.b16 %v673, %v669
        %v758 = vpack.c.b16 %v674, %v670
        %v759 = vpack.c.b16 %v679, %v675
        %v760 = vpack.c.b16 %v680, %v676
        %v761 = vpack.c.b16 %v681, %v677
        %v762 = vpack.c.b16 %v682, %v678
        %v763 = vpack.c.b16 %v687, %v683
        %v764 = vpack.c.b16 %v688, %v684
        %v765 = vpack.c.b16 %v689, %v685
        %v766 = vpack.c.b16 %v690, %v686
        %v767 = vpack.c.b16 %v695, %v691
        %v768 = vpack.c.b16 %v696, %v692
        %v769 = vpack.c.b16 %v697, %v693
        %v770 = vpack.c.b16 %v698, %v694
        %vm843 = vcmask 261120
        %v845 = vsel %vm843, %v479, 0
        %847 = vmatprep.subr.bf16.mxu0 %v700
        %848 = vmatpush1.bf16.msra.mxu0 %v699
        %849 = vmatprep.subr.bf16.mxu0 %v704
        %850 = vmatpush1.bf16.msra.mxu0 %v703
        %851 = vmatprep.subr.bf16.mxu0 %v708
        %852 = vmatpush1.bf16.msra.mxu0 %v707
        %853 = vmatprep.subr.bf16.mxu0 %v712
        %854 = vmatpush1.bf16.msra.mxu0 %v711
        %855 = vmatprep.subr.bf16.mxu0 %v716
        %856 = vmatpush1.bf16.msra.mxu0 %v715
        %857 = vmatprep.subr.bf16.mxu0 %v720
        %858 = vmatpush1.bf16.msra.mxu0 %v719
        %859 = vmatprep.subr.bf16.mxu0 %v724
        %860 = vmatpush1.bf16.msra.mxu0 %v723
        %861 = vmatprep.subr.bf16.mxu0 %v728
        %862 = vmatpush1.bf16.msra.mxu0 %v727
        %863 = vmatprep.subr.bf16.mxu0 %v732
        %864 = vmatpush1.bf16.msra.mxu0 %v731
        %865 = vmatprep.subr.bf16.mxu0 %v736
        %866 = vmatpush1.bf16.msra.mxu0 %v735
        %867 = vmatprep.subr.bf16.mxu0 %v740
        %868 = vmatpush1.bf16.msra.mxu0 %v739
        %869 = vmatprep.subr.bf16.mxu0 %v744
        %870 = vmatpush1.bf16.msra.mxu0 %v743
        %871 = vmatprep.subr.bf16.mxu0 %v748
        %872 = vmatpush1.bf16.msra.mxu0 %v747
        %873 = vmatprep.subr.bf16.mxu0 %v752
        %874 = vmatpush1.bf16.msra.mxu0 %v751
        %875 = vmatprep.subr.bf16.mxu0 %v756
        %876 = vmatpush1.bf16.msra.mxu0 %v755
        %877 = vmatprep.subr.bf16.mxu0 %v760
        %878 = vmatpush1.bf16.msra.mxu0 %v759
        %879 = vmatprep.mubr.bf16.mxu0 %v480
        %880 = vmatmul.mubr.bf16.gmra.mrb[0].mxu0 %v472
        %v881 = vpop.f32.mrb[0].mxu0
        %v882 = vadd.f32 %v462, %v881
        %v883 = vpop.f32.mrb[0].mxu0
        %v884 = vadd.f32 %v462, %v883
        %v885 = vpop.f32.mrb[0].mxu0
        %v886 = vpop.f32.mrb[0].mxu0
        %887 = vdwg.mxu0
        %888 = vmatprep.subr.bf16.mxu0 %v764
        %889 = vmatpush1.bf16.msra.mxu0 %v763
        %890 = vmatprep.subr.bf16.mxu0 %v768
        %891 = vmatpush1.bf16.msra.mxu0 %v767
        %892 = vmatprep.subr.bf16.mxu0 0
        %893 = vmatpush1.bf16.msra.mxu0 0
        %894 = vmatprep.subr.bf16.mxu0 0
        %895 = vmatpush1.bf16.msra.mxu0 0
        %896 = vmatprep.subr.bf16.mxu0 0
        %897 = vmatpush1.bf16.msra.mxu0 0
        %898 = vmatprep.subr.bf16.mxu0 0
        %899 = vmatpush1.bf16.msra.mxu0 0
        %900 = vmatprep.subr.bf16.mxu0 0
        %901 = vmatpush1.bf16.msra.mxu0 0
        %902 = vmatprep.subr.bf16.mxu0 0
        %903 = vmatpush1.bf16.msra.mxu0 0
        %904 = vmatprep.subr.bf16.mxu0 0
        %905 = vmatpush1.bf16.msra.mxu0 0
        %906 = vmatprep.subr.bf16.mxu0 0
        %907 = vmatpush1.bf16.msra.mxu0 0
        %908 = vmatprep.subr.bf16.mxu0 0
        %909 = vmatpush1.bf16.msra.mxu0 0
        %910 = vmatprep.subr.bf16.mxu0 0
        %911 = vmatpush1.bf16.msra.mxu0 0
        %912 = vmatprep.subr.bf16.mxu0 0
        %913 = vmatpush1.bf16.msra.mxu0 0
        %914 = vmatprep.subr.bf16.mxu0 0
        %915 = vmatpush1.bf16.msra.mxu0 0
        %916 = vmatprep.subr.bf16.mxu0 0
        %917 = vmatpush1.bf16.msra.mxu0 0
        %918 = vmatprep.subr.bf16.mxu0 0
        %919 = vmatpush1.bf16.msra.mxu0 0
        %920 = vmatprep.mubr.bf16.mxu0 0
        %921 = vmatmul.mubr.bf16.gmra.mrb[0].mxu0 %v845
        %v922 = vpop.f32.mrb[0].mxu0
        %v923 = vadd.f32 %v882, %v922
        %v924 = vpop.f32.mrb[0].mxu0
        %v925 = vadd.f32 %v884, %v924
        %v926 = vpop.f32.mrb[0].mxu0
        %v927 = vpop.f32.mrb[0].mxu0
        %928 = vdwg.mxu0
        %929 = vmatprep.subr.bf16.mxu0 %v702
        %930 = vmatpush1.bf16.msra.mxu0 %v701
        %931 = vmatprep.subr.bf16.mxu0 %v706
        %932 = vmatpush1.bf16.msra.mxu0 %v705
        %933 = vmatprep.subr.bf16.mxu0 %v710
        %934 = vmatpush1.bf16.msra.mxu0 %v709
        %935 = vmatprep.subr.bf16.mxu0 %v714
        %936 = vmatpush1.bf16.msra.mxu0 %v713
        %937 = vmatprep.subr.bf16.mxu0 %v718
        %938 = vmatpush1.bf16.msra.mxu0 %v717
        %939 = vmatprep.subr.bf16.mxu0 %v722
        %940 = vmatpush1.bf16.msra.mxu0 %v721
        %941 = vmatprep.subr.bf16.mxu0 %v726
        %942 = vmatpush1.bf16.msra.mxu0 %v725
        %943 = vmatprep.subr.bf16.mxu0 %v730
        %944 = vmatpush1.bf16.msra.mxu0 %v729
        %945 = vmatprep.subr.bf16.mxu0 %v734
        %946 = vmatpush1.bf16.msra.mxu0 %v733
        %947 = vmatprep.subr.bf16.mxu0 %v738
        %948 = vmatpush1.bf16.msra.mxu0 %v737
        %949 = vmatprep.subr.bf16.mxu0 %v742
        %950 = vmatpush1.bf16.msra.mxu0 %v741
        %951 = vmatprep.subr.bf16.mxu0 %v746
        %952 = vmatpush1.bf16.msra.mxu0 %v745
        %953 = vmatprep.subr.bf16.mxu0 %v750
        %954 = vmatpush1.bf16.msra.mxu0 %v749
        %955 = vmatprep.subr.bf16.mxu0 %v754
        %956 = vmatpush1.bf16.msra.mxu0 %v753
        %957 = vmatprep.subr.bf16.mxu0 %v758
        %958 = vmatpush1.bf16.msra.mxu0 %v757
        %959 = vmatprep.subr.bf16.mxu0 %v762
        %960 = vmatpush1.bf16.msra.mxu0 %v761
        %961 = vmatprep.mubr.bf16.mxu0 %v480
        %962 = vmatmul.mubr.bf16.gmra.mrb[0].mxu0 %v472
        %v963 = vpop.f32.mrb[0].mxu0
        %v964 = vadd.f32 %v462, %v963
        %v965 = vpop.f32.mrb[0].mxu0
        %v966 = vadd.f32 %v462, %v965
        %v967 = vpop.f32.mrb[0].mxu0
        %v968 = vpop.f32.mrb[0].mxu0
        %969 = vdwg.mxu0
        %970 = vmatprep.subr.bf16.mxu0 %v766
        %971 = vmatpush1.bf16.msra.mxu0 %v765
        %972 = vmatprep.subr.bf16.mxu0 %v770
        %973 = vmatpush1.bf16.msra.mxu0 %v769
        %974 = vmatprep.subr.bf16.mxu0 0
        %975 = vmatpush1.bf16.msra.mxu0 0
        %976 = vmatprep.subr.bf16.mxu0 0
        %977 = vmatpush1.bf16.msra.mxu0 0
        %978 = vmatprep.subr.bf16.mxu0 0
        %979 = vmatpush1.bf16.msra.mxu0 0
        %980 = vmatprep.subr.bf16.mxu0 0
        %981 = vmatpush1.bf16.msra.mxu0 0
        %982 = vmatprep.subr.bf16.mxu0 0
        %983 = vmatpush1.bf16.msra.mxu0 0
        %984 = vmatprep.subr.bf16.mxu0 0
        %985 = vmatpush1.bf16.msra.mxu0 0
        %986 = vmatprep.subr.bf16.mxu0 0
        %987 = vmatpush1.bf16.msra.mxu0 0
        %988 = vmatprep.subr.bf16.mxu0 0
        %989 = vmatpush1.bf16.msra.mxu0 0
        %990 = vmatprep.subr.bf16.mxu0 0
        %991 = vmatpush1.bf16.msra.mxu0 0
        %992 = vmatprep.subr.bf16.mxu0 0
        %993 = vmatpush1.bf16.msra.mxu0 0
        %994 = vmatprep.subr.bf16.mxu0 0
        %995 = vmatpush1.bf16.msra.mxu0 0
        %996 = vmatprep.subr.bf16.mxu0 0
        %997 = vmatpush1.bf16.msra.mxu0 0
        %998 = vmatprep.subr.bf16.mxu0 0
        %999 = vmatpush1.bf16.msra.mxu0 0
        %1000 = vmatprep.subr.bf16.mxu0 0
        %1001 = vmatpush1.bf16.msra.mxu0 0
        %1002 = vmatprep.mubr.bf16.mxu0 0
        %1003 = vmatmul.mubr.bf16.gmra.mrb[0].mxu0 %v845
        %v1004 = vpop.f32.mrb[0].mxu0
        %v1005 = vadd.f32 %v964, %v1004
        %v1006 = vpop.f32.mrb[0].mxu0
        %v1007 = vadd.f32 %v966, %v1006
        %v1008 = vpop.f32.mrb[0].mxu0
        %v1009 = vpop.f32.mrb[0].mxu0
        %1010 = vdwg.mxu0
        %v1011 = vld [vmem:[%s376] sm:$0x77]
        %v1012 = vld [vmem:[%s376 + $0x8] sm:$0x77]
        %v1013 = vtanh.pop %v923
        %v1014 = vtanh.pop %v925
        %v1015 = vtanh.pop %v1005
        %v1016 = vtanh.pop %v1007
        %v1021 = vcombine.low %v1013, %v1014
        %v1022 = vcombine.low %v1015, %v1016
        %v1025 = vadd.f32 %v1011, %v1021
        %v1026 = vadd.f32 %v1012, %v1022
        %1027 = vst [vmem:[%s382] sm:$0x77] %v1025
        %1028 = vst [vmem:[%s382 + $0x8] sm:$0x77] %v1026
        %s1029 = smul.u32 4, %s15
        %p1030 = scmp.lt.s32.totalorder %s1029, 7
        %s1031 = scalar_select %p1030, %s1029, 7
        %s1032 = smul.addr %s1031, 4
        %s1033 = scalar_lea.vmem %s4, %s1032
        // Predicated region
        $region60: #{single_scale_generator.17} parent=54 // pred_check
          %p1034 = pneg %p127
        $region61: #{single_scale_generator.17} parent=54 // pred_check_branch
          %1036 = sbr.rel (%p1034) target = $region63
        $region62: #{single_scale_generator.17} parent=54 // pred_region
          %s1037 = smul.u32 4, %s15
        $region63: #{single_scale_generator.17} parent=54 // pred_fallthru
          _
      $region55: #{single_scale_generator.17} parent=5 // pred_fallthru
        _
      %p1038 = scmp.le.s32.totalorder 2, %s10
      // Predicated region
      $region64: #{single_scale_generator.17} parent=5 // pred_check
        %p1039 = pneg %p1038
      $region65: #{single_scale_generator.17} parent=5 // pred_check_branch
        %1041 = sbr.rel (%p1039) target = $region67
      $region66: #{single_scale_generator.17} parent=5 // pred_region
        %s1042 = ssub.s32 %s10, 2
        // Predicated region
        $region68: #{single_scale_generator.17} parent=66 // pred_check
          %p1043 = pneg %p133
        $region69: #{single_scale_generator.17} parent=66 // pred_check_branch
          %1045 = sbr.rel (%p1043) target = $region71
        $region70: #{single_scale_generator.17} parent=66 // pred_region
          %s1046 = smul.u32 4, %s16
          %p1047 = scmp.lt.s32.totalorder %s1046, 7
          %s1048 = scalar_select %p1047, %s1046, 7
          %s1049 = smul.addr %s1048, 4
          %s1050 = scalar_lea.vmem %s4, %s1049
        $region71: #{single_scale_generator.17} parent=66 // pred_fallthru
          _
      $region67: #{single_scale_generator.17} parent=5 // pred_fallthru
        _
    $region6: #{single_scale_generator.17} parent=1 // loop_footer
      %s14 = sadd.s32 1, %s10
    $region7: #{single_scale_generator.17} parent=1 // loop_footer_branch
      %9 = sbr.rel target = $region3
    $region8: #{single_scale_generator.17} parent=1 // loop_exit
      _

</llo_original>
